<compile_context>
chip_gen: v7x
topology: tpu7x:2x2x1
jax: 0.10.0
libtpu: 0.0.40
codegen_flags: <defaults>
</compile_context>

<pallas_src>
import jax
import jax.numpy as jnp
import numpy as np
from jax import lax
from jax.experimental import pallas as pl
from jax.experimental.pallas import tpu as pltpu


def double_conv_kernel(x_ref, w1_ref, b1_ref, w2_ref, b2_ref, o_ref,
                       xpad_ref, mid_ref):
    # x_ref  : (1, H, W, Cin)   f32 input tile (one batch element, unpadded)
    # w1_ref : (9*Cin,  Cout)   bf16, BN1 scale folded in, taps flattened into K
    # w2_ref : (9*Cout, Cout)   bf16, BN2 scale folded in
    # b1/b2  : (1, Cout)        f32 folded BatchNorm bias
    # o_ref  : (1, H, W, Cout)  f32
    # xpad_ref: (H+2, W+2, Cin)  VMEM scratch: zero-halo padded input
    # mid_ref : (H+2, W+2, Cout) VMEM scratch: zero-halo padded intermediate
    _, H, W, Cin = x_ref.shape
    Cout = o_ref.shape[-1]
    Hp, Wp = H + 2, W + 2

    def zero_halo(ref, C):
        # Zero only the 1-px halo strips; the interior is fully overwritten below
        # every grid step, so no full (Hp*Wp*C) zero fill is needed.
        ref[0:1, :, :] = jnp.zeros((1, Wp, C), jnp.float32)
        ref[Hp - 1:Hp, :, :] = jnp.zeros((1, Wp, C), jnp.float32)
        ref[:, 0:1, :] = jnp.zeros((Hp, 1, C), jnp.float32)
        ref[:, Wp - 1:Wp, :] = jnp.zeros((Hp, 1, C), jnp.float32)

    zero_halo(xpad_ref, Cin)
    zero_halo(mid_ref, Cout)

    # place the input into the interior of the padded scratch (padding=1 in-kernel,
    # no extra HBM pad pass in the wrapper)
    xpad_ref[1:1 + H, 1:1 + W, :] = x_ref[0]

    def conv3x3(src_ref, C, w_mat):
        # im2col: build (H*W, 9*C) patches and do a single MXU dot with K = 9*C.
        # Materialize only the 3 dx-shifted slabs; reuse them across the 3 dy taps.
        slabs = [src_ref[:, dx:dx + W, :] for dx in range(3)]            # (Hp, W, C)
        cols = [slabs[dx][dy:dy + H].reshape(H * W, C)
                for dy in range(3) for dx in range(3)]                   # k = dy*3+dx
        patches = jnp.concatenate(cols, axis=-1)                         # (H*W, 9*C) f32
        return jnp.dot(patches.astype(jnp.bfloat16), w_mat,
                       preferred_element_type=jnp.float32)               # (H*W, Cout) f32

    # ---- conv1 (BN1 scale pre-folded into w1) + bias + ReLU ----
    h = jnp.maximum(conv3x3(xpad_ref, Cin, w1_ref[...]) + b1_ref[...], 0.0)
    mid_ref[1:1 + H, 1:1 + W, :] = h.reshape(H, W, Cout)

    # ---- conv2 (BN2 scale pre-folded into w2) + bias + ReLU ----
    out = jnp.maximum(conv3x3(mid_ref, Cout, w2_ref[...]) + b2_ref[...], 0.0)
    o_ref[...] = out.reshape(1, H, W, Cout).astype(o_ref.dtype)


def double_conv(x_nchw, w1, g1, be1, rm1, rv1, w2, g2, be2, rm2, rv2, eps=1e-5):
    """x_nchw: (N, Cin, H, W) float32. Conv weights in PyTorch OIHW layout."""
    N, Cin, H, W = x_nchw.shape
    Cout = w1.shape[0]
    Hp, Wp = H + 2, W + 2

    # glue (plain JAX): layout transpose + BN folding (padding is done in-kernel)
    x = jnp.transpose(x_nchw, (0, 2, 3, 1))                          # NHWC

    s1 = g1 / jnp.sqrt(rv1 + eps)
    s2 = g2 / jnp.sqrt(rv2 + eps)
    b1 = (be1 - rm1 * s1).reshape(1, Cout)
    b2 = (be2 - rm2 * s2).reshape(1, Cout)

    # Fold BN scale into the conv weights (per output channel) and flatten the 3x3
    # taps into the contraction axis: (kh, kw, Cin, Cout) -> ((kh*3+kw)*Cin, Cout).
    w1m = (jnp.transpose(w1, (2, 3, 1, 0)) * s1).reshape(9 * Cin, Cout).astype(jnp.bfloat16)
    w2m = (jnp.transpose(w2, (2, 3, 1, 0)) * s2).reshape(9 * Cout, Cout).astype(jnp.bfloat16)

    out_nhwc = pl.pallas_call(
        double_conv_kernel,
        out_shape=jax.ShapeDtypeStruct((N, H, W, Cout), jnp.float32),
        grid_spec=pltpu.PrefetchScalarGridSpec(
            num_scalar_prefetch=0,
            grid=(N,),
            in_specs=[
                pl.BlockSpec((1, H, W, Cin), lambda n: (n, 0, 0, 0)),
                pl.BlockSpec((9 * Cin, Cout), lambda n: (0, 0)),
                pl.BlockSpec((1, Cout), lambda n: (0, 0)),
                pl.BlockSpec((9 * Cout, Cout), lambda n: (0, 0)),
                pl.BlockSpec((1, Cout), lambda n: (0, 0)),
            ],
            out_specs=pl.BlockSpec((1, H, W, Cout), lambda n: (n, 0, 0, 0)),
            scratch_shapes=[
                pltpu.VMEM((Hp, Wp, Cin), jnp.float32),
                pltpu.VMEM((Hp, Wp, Cout), jnp.float32),
            ],
        ),
        compiler_params=pltpu.CompilerParams(
            dimension_semantics=("parallel",)),
    )(x, w1m, b1, w2m, b2)

    return jnp.transpose(out_nhwc, (0, 3, 1, 2))                     # back to NCHW


def _reference(x, w1, g1, be1, rm1, rv1, w2, g2, be2, rm2, rv2, eps=1e-5):
    def conv(x, w):
        return lax.conv_general_dilated(
            x, w, window_strides=(1, 1), padding=((1, 1), (1, 1)),
            dimension_numbers=("NCHW", "OIHW", "NCHW"))

    def bn(x, g, b, rm, rv):
        g, b, rm, rv = (t[None, :, None, None] for t in (g, b, rm, rv))
        return (x - rm) / jnp.sqrt(rv + eps) * g + b

    h = jax.nn.relu(bn(conv(x, w1), g1, be1, rm1, rv1))
    return jax.nn.relu(bn(conv(h, w2), g2, be2, rm2, rv2))


if __name__ == "__main__":
    N, Cin, Cout, H, W = 2, 4, 8, 16, 16

    key = jax.random.PRNGKey(0)
    kx, kw1, kw2, kg1, kb1, km1, kv1, kg2, kb2, km2, kv2 = jax.random.split(key, 11)

    x = jax.random.normal(kx, (N, Cin, H, W), jnp.float32)
    w1 = jax.random.normal(kw1, (Cout, Cin, 3, 3), jnp.float32) * 0.2
    w2 = jax.random.normal(kw2, (Cout, Cout, 3, 3), jnp.float32) * 0.2
    g1 = 1.0 + 0.1 * jax.random.normal(kg1, (Cout,), jnp.float32)
    be1 = 0.1 * jax.random.normal(kb1, (Cout,), jnp.float32)
    rm1 = 0.1 * jax.random.normal(km1, (Cout,), jnp.float32)
    rv1 = 1.0 + 0.1 * jax.random.uniform(kv1, (Cout,), jnp.float32)
    g2 = 1.0 + 0.1 * jax.random.normal(kg2, (Cout,), jnp.float32)
    be2 = 0.1 * jax.random.normal(kb2, (Cout,), jnp.float32)
    rm2 = 0.1 * jax.random.normal(km2, (Cout,), jnp.float32)
    rv2 = 1.0 + 0.1 * jax.random.uniform(kv2, (Cout,), jnp.float32)

    out = double_conv(x, w1, g1, be1, rm1, rv1, w2, g2, be2, rm2, rv2)
    out = jax.block_until_ready(out)

    ref = _reference(x, w1, g1, be1, rm1, rv1, w2, g2, be2, rm2, rv2)
    ref = jax.block_until_ready(ref)

    assert out.shape == (N, Cout, H, W)
    # Kernel uses bf16 MXU operands (f32 accumulation) per perf guidance, so allow
    # small deviations vs. the pure-f32 reference.
    np.testing.assert_allclose(np.asarray(out), np.asarray(ref), rtol=5e-2, atol=5e-2)

    print("KERNEL_OK")
</pallas_src>

<mosaic_0001>
module attributes {stable_mosaic.version = 11 : i64} {
  func.func @double_conv_kernel(%arg0: i32, %arg1: memref<1x16x16x4xf32, #tpu.memory_space<vmem>>, %arg2: memref<36x8xbf16, #tpu.memory_space<vmem>>, %arg3: memref<1x8xf32, #tpu.memory_space<vmem>>, %arg4: memref<72x8xbf16, #tpu.memory_space<vmem>>, %arg5: memref<1x8xf32, #tpu.memory_space<vmem>>, %arg6: memref<1x16x16x8xf32, #tpu.memory_space<vmem>>, %arg7: memref<18x18x4xf32, #tpu.memory_space<vmem>>, %arg8: memref<18x18x8xf32, #tpu.memory_space<vmem>>) attributes {dimension_semantics = [#tpu.dimension_semantics<parallel>], iteration_bounds = array<i64: 2>, scalar_prefetch = 0 : i64, scratch_operands = 2 : i64, tpu.core_type = #tpu.core_type<tc>, window_params = [{transform_indices = @transform_0, window_bounds = array<i64: 1, 16, 16, 4>}, {pipeline_mode = #tpu.pipeline_mode<synchronous>, transform_indices = @transform_1, window_bounds = array<i64: 36, 8>}, {pipeline_mode = #tpu.pipeline_mode<synchronous>, transform_indices = @transform_2, window_bounds = array<i64: 1, 8>}, {pipeline_mode = #tpu.pipeline_mode<synchronous>, transform_indices = @transform_3, window_bounds = array<i64: 72, 8>}, {pipeline_mode = #tpu.pipeline_mode<synchronous>, transform_indices = @transform_4, window_bounds = array<i64: 1, 8>}, {transform_indices = @transform_5, window_bounds = array<i64: 1, 16, 16, 8>}]} {
    %cst = arith.constant 0.000000e+00 : f32
    %0 = vector.broadcast %cst : f32 to vector<1x18x4xf32>
    %c0 = arith.constant 0 : index
    %c0_0 = arith.constant 0 : index
    %c0_1 = arith.constant 0 : index
    %1 = vector.load %arg7[%c0, %c0_0, %c0_1] : memref<18x18x4xf32, #tpu.memory_space<vmem>>, vector<1x18x4xf32>
    tpu.vector_store %arg7[%c0, %c0_0, %c0_1], %0 {strides = array<i32>} : memref<18x18x4xf32, #tpu.memory_space<vmem>>, vector<1x18x4xf32>,
    %cst_2 = arith.constant 0.000000e+00 : f32
    %2 = vector.broadcast %cst_2 : f32 to vector<1x18x4xf32>
    %c17 = arith.constant 17 : index
    %c0_3 = arith.constant 0 : index
    %c0_4 = arith.constant 0 : index
    %3 = vector.load %arg7[%c17, %c0_3, %c0_4] : memref<18x18x4xf32, #tpu.memory_space<vmem>>, vector<1x18x4xf32>
    tpu.vector_store %arg7[%c17, %c0_3, %c0_4], %2 {strides = array<i32>} : memref<18x18x4xf32, #tpu.memory_space<vmem>>, vector<1x18x4xf32>,
    %cst_5 = arith.constant 0.000000e+00 : f32
    %4 = vector.broadcast %cst_5 : f32 to vector<18x1x4xf32>
    %c0_6 = arith.constant 0 : index
    %c0_7 = arith.constant 0 : index
    %c0_8 = arith.constant 0 : index
    %5 = vector.load %arg7[%c0_6, %c0_7, %c0_8] : memref<18x18x4xf32, #tpu.memory_space<vmem>>, vector<18x1x4xf32>
    tpu.vector_store %arg7[%c0_6, %c0_7, %c0_8], %4 {strides = array<i32>} : memref<18x18x4xf32, #tpu.memory_space<vmem>>, vector<18x1x4xf32>,
    %cst_9 = arith.constant 0.000000e+00 : f32
    %6 = vector.broadcast %cst_9 : f32 to vector<18x1x4xf32>
    %c0_10 = arith.constant 0 : index
    %c17_11 = arith.constant 17 : index
    %c0_12 = arith.constant 0 : index
    %7 = vector.load %arg7[%c0_10, %c17_11, %c0_12] : memref<18x18x4xf32, #tpu.memory_space<vmem>>, vector<18x1x4xf32>
    tpu.vector_store %arg7[%c0_10, %c17_11, %c0_12], %6 {strides = array<i32>} : memref<18x18x4xf32, #tpu.memory_space<vmem>>, vector<18x1x4xf32>,
    %cst_13 = arith.constant 0.000000e+00 : f32
    %8 = vector.broadcast %cst_13 : f32 to vector<1x18x8xf32>
    %c0_14 = arith.constant 0 : index
    %c0_15 = arith.constant 0 : index
    %c0_16 = arith.constant 0 : index
    %9 = vector.load %arg8[%c0_14, %c0_15, %c0_16] : memref<18x18x8xf32, #tpu.memory_space<vmem>>, vector<1x18x8xf32>
    tpu.vector_store %arg8[%c0_14, %c0_15, %c0_16], %8 {strides = array<i32>} : memref<18x18x8xf32, #tpu.memory_space<vmem>>, vector<1x18x8xf32>,
    %cst_17 = arith.constant 0.000000e+00 : f32
    %10 = vector.broadcast %cst_17 : f32 to vector<1x18x8xf32>
    %c17_18 = arith.constant 17 : index
    %c0_19 = arith.constant 0 : index
    %c0_20 = arith.constant 0 : index
    %11 = vector.load %arg8[%c17_18, %c0_19, %c0_20] : memref<18x18x8xf32, #tpu.memory_space<vmem>>, vector<1x18x8xf32>
    tpu.vector_store %arg8[%c17_18, %c0_19, %c0_20], %10 {strides = array<i32>} : memref<18x18x8xf32, #tpu.memory_space<vmem>>, vector<1x18x8xf32>,
    %cst_21 = arith.constant 0.000000e+00 : f32
    %12 = vector.broadcast %cst_21 : f32 to vector<18x1x8xf32>
    %c0_22 = arith.constant 0 : index
    %c0_23 = arith.constant 0 : index
    %c0_24 = arith.constant 0 : index
    %13 = vector.load %arg8[%c0_22, %c0_23, %c0_24] : memref<18x18x8xf32, #tpu.memory_space<vmem>>, vector<18x1x8xf32>
    tpu.vector_store %arg8[%c0_22, %c0_23, %c0_24], %12 {strides = array<i32>} : memref<18x18x8xf32, #tpu.memory_space<vmem>>, vector<18x1x8xf32>,
    %cst_25 = arith.constant 0.000000e+00 : f32
    %14 = vector.broadcast %cst_25 : f32 to vector<18x1x8xf32>
    %c0_26 = arith.constant 0 : index
    %c17_27 = arith.constant 17 : index
    %c0_28 = arith.constant 0 : index
    %15 = vector.load %arg8[%c0_26, %c17_27, %c0_28] : memref<18x18x8xf32, #tpu.memory_space<vmem>>, vector<18x1x8xf32>
    tpu.vector_store %arg8[%c0_26, %c17_27, %c0_28], %14 {strides = array<i32>} : memref<18x18x8xf32, #tpu.memory_space<vmem>>, vector<18x1x8xf32>,
    %c0_29 = arith.constant 0 : index
    %c0_30 = arith.constant 0 : index
    %c0_31 = arith.constant 0 : index
    %c0_32 = arith.constant 0 : index
    %16 = vector.load %arg1[%c0_29, %c0_30, %c0_31, %c0_32] : memref<1x16x16x4xf32, #tpu.memory_space<vmem>>, vector<1x16x16x4xf32>
    %17 = vector.shape_cast %16 : vector<1x16x16x4xf32> to vector<16x16x4xf32>
    %c1 = arith.constant 1 : index
    %c1_33 = arith.constant 1 : index
    %c0_34 = arith.constant 0 : index
    %18 = vector.load %arg7[%c1, %c1_33, %c0_34] : memref<18x18x4xf32, #tpu.memory_space<vmem>>, vector<16x16x4xf32>
    tpu.vector_store %arg7[%c1, %c1_33, %c0_34], %17 {strides = array<i32>} : memref<18x18x4xf32, #tpu.memory_space<vmem>>, vector<16x16x4xf32>,
    %c0_35 = arith.constant 0 : index
    %c0_36 = arith.constant 0 : index
    %19 = vector.load %arg2[%c0_35, %c0_36] : memref<36x8xbf16, #tpu.memory_space<vmem>>, vector<36x8xbf16>
    %c0_37 = arith.constant 0 : index
    %c0_38 = arith.constant 0 : index
    %c0_39 = arith.constant 0 : index
    %20 = vector.load %arg7[%c0_37, %c0_38, %c0_39] : memref<18x18x4xf32, #tpu.memory_space<vmem>>, vector<18x16x4xf32>
    %c0_40 = arith.constant 0 : index
    %c1_41 = arith.constant 1 : index
    %c0_42 = arith.constant 0 : index
    %21 = vector.load %arg7[%c0_40, %c1_41, %c0_42] : memref<18x18x4xf32, #tpu.memory_space<vmem>>, vector<18x16x4xf32>
    %c0_43 = arith.constant 0 : index
    %c2 = arith.constant 2 : index
    %c0_44 = arith.constant 0 : index
    %22 = vector.load %arg7[%c0_43, %c2, %c0_44] : memref<18x18x4xf32, #tpu.memory_space<vmem>>, vector<18x16x4xf32>
    %23 = vector.extract_strided_slice %20 {offsets = [0, 0, 0], sizes = [16, 16, 4], strides = [1, 1, 1]} : vector<18x16x4xf32> to vector<16x16x4xf32>
    %24 = vector.shape_cast %23 : vector<16x16x4xf32> to vector<256x4xf32>
    %25 = vector.extract_strided_slice %21 {offsets = [0, 0, 0], sizes = [16, 16, 4], strides = [1, 1, 1]} : vector<18x16x4xf32> to vector<16x16x4xf32>
    %26 = vector.shape_cast %25 : vector<16x16x4xf32> to vector<256x4xf32>
    %27 = vector.extract_strided_slice %22 {offsets = [0, 0, 0], sizes = [16, 16, 4], strides = [1, 1, 1]} : vector<18x16x4xf32> to vector<16x16x4xf32>
    %28 = vector.shape_cast %27 : vector<16x16x4xf32> to vector<256x4xf32>
    %29 = vector.extract_strided_slice %20 {offsets = [1, 0, 0], sizes = [16, 16, 4], strides = [1, 1, 1]} : vector<18x16x4xf32> to vector<16x16x4xf32>
    %30 = vector.shape_cast %29 : vector<16x16x4xf32> to vector<256x4xf32>
    %31 = vector.extract_strided_slice %21 {offsets = [1, 0, 0], sizes = [16, 16, 4], strides = [1, 1, 1]} : vector<18x16x4xf32> to vector<16x16x4xf32>
    %32 = vector.shape_cast %31 : vector<16x16x4xf32> to vector<256x4xf32>
    %33 = vector.extract_strided_slice %22 {offsets = [1, 0, 0], sizes = [16, 16, 4], strides = [1, 1, 1]} : vector<18x16x4xf32> to vector<16x16x4xf32>
    %34 = vector.shape_cast %33 : vector<16x16x4xf32> to vector<256x4xf32>
    %35 = vector.extract_strided_slice %20 {offsets = [2, 0, 0], sizes = [16, 16, 4], strides = [1, 1, 1]} : vector<18x16x4xf32> to vector<16x16x4xf32>
    %36 = vector.shape_cast %35 : vector<16x16x4xf32> to vector<256x4xf32>
    %37 = vector.extract_strided_slice %21 {offsets = [2, 0, 0], sizes = [16, 16, 4], strides = [1, 1, 1]} : vector<18x16x4xf32> to vector<16x16x4xf32>
    %38 = vector.shape_cast %37 : vector<16x16x4xf32> to vector<256x4xf32>
    %39 = vector.extract_strided_slice %22 {offsets = [2, 0, 0], sizes = [16, 16, 4], strides = [1, 1, 1]} : vector<18x16x4xf32> to vector<16x16x4xf32>
    %40 = vector.shape_cast %39 : vector<16x16x4xf32> to vector<256x4xf32>
    %41 = tpu.concatenate %24, %26, %28, %30, %32, %34, %36, %38, %40 in 1 : vector<256x4xf32>, vector<256x4xf32>, vector<256x4xf32>, vector<256x4xf32>, vector<256x4xf32>, vector<256x4xf32>, vector<256x4xf32>, vector<256x4xf32>, vector<256x4xf32> -> vector<256x36xf32>
    %42 = arith.truncf %41 : vector<256x36xf32> to vector<256x36xbf16>
    %cst_45 = arith.constant dense<0.000000e+00> : vector<256x8xf32>
    %43 = tpu.matmul %42, %19, %cst_45 {dimension_numbers = #tpu.dot_dimension_numbers<[1], [0], [0], [1], [0, 0, 1, 1], [], []>} : vector<256x36xbf16>, vector<36x8xbf16>, vector<256x8xf32> -> vector<256x8xf32>
    %c0_46 = arith.constant 0 : index
    %c0_47 = arith.constant 0 : index
    %44 = vector.load %arg3[%c0_46, %c0_47] : memref<1x8xf32, #tpu.memory_space<vmem>>, vector<1x8xf32>
    %45 = vector.broadcast %44 : vector<1x8xf32> to vector<256x8xf32>
    %46 = arith.addf %43, %45 : vector<256x8xf32>
    %cst_48 = arith.constant 0.000000e+00 : f32
    %47 = vector.broadcast %cst_48 : f32 to vector<256x8xf32>
    %48 = arith.maximumf %46, %47 : vector<256x8xf32>
    %49 = vector.shape_cast %48 : vector<256x8xf32> to vector<16x16x8xf32>
    %c1_49 = arith.constant 1 : index
    %c1_50 = arith.constant 1 : index
    %c0_51 = arith.constant 0 : index
    %50 = vector.load %arg8[%c1_49, %c1_50, %c0_51] : memref<18x18x8xf32, #tpu.memory_space<vmem>>, vector<16x16x8xf32>
    tpu.vector_store %arg8[%c1_49, %c1_50, %c0_51], %49 {strides = array<i32>} : memref<18x18x8xf32, #tpu.memory_space<vmem>>, vector<16x16x8xf32>,
    %c0_52 = arith.constant 0 : index
    %c0_53 = arith.constant 0 : index
    %51 = vector.load %arg4[%c0_52, %c0_53] : memref<72x8xbf16, #tpu.memory_space<vmem>>, vector<72x8xbf16>
    %c0_54 = arith.constant 0 : index
    %c0_55 = arith.constant 0 : index
    %c0_56 = arith.constant 0 : index
    %52 = vector.load %arg8[%c0_54, %c0_55, %c0_56] : memref<18x18x8xf32, #tpu.memory_space<vmem>>, vector<18x16x8xf32>
    %c0_57 = arith.constant 0 : index
    %c1_58 = arith.constant 1 : index
    %c0_59 = arith.constant 0 : index
    %53 = vector.load %arg8[%c0_57, %c1_58, %c0_59] : memref<18x18x8xf32, #tpu.memory_space<vmem>>, vector<18x16x8xf32>
    %c0_60 = arith.constant 0 : index
    %c2_61 = arith.constant 2 : index
    %c0_62 = arith.constant 0 : index
    %54 = vector.load %arg8[%c0_60, %c2_61, %c0_62] : memref<18x18x8xf32, #tpu.memory_space<vmem>>, vector<18x16x8xf32>
    %55 = vector.extract_strided_slice %52 {offsets = [0, 0, 0], sizes = [16, 16, 8], strides = [1, 1, 1]} : vector<18x16x8xf32> to vector<16x16x8xf32>
    %56 = vector.shape_cast %55 : vector<16x16x8xf32> to vector<256x8xf32>
    %57 = vector.extract_strided_slice %53 {offsets = [0, 0, 0], sizes = [16, 16, 8], strides = [1, 1, 1]} : vector<18x16x8xf32> to vector<16x16x8xf32>
    %58 = vector.shape_cast %57 : vector<16x16x8xf32> to vector<256x8xf32>
    %59 = vector.extract_strided_slice %54 {offsets = [0, 0, 0], sizes = [16, 16, 8], strides = [1, 1, 1]} : vector<18x16x8xf32> to vector<16x16x8xf32>
    %60 = vector.shape_cast %59 : vector<16x16x8xf32> to vector<256x8xf32>
    %61 = vector.extract_strided_slice %52 {offsets = [1, 0, 0], sizes = [16, 16, 8], strides = [1, 1, 1]} : vector<18x16x8xf32> to vector<16x16x8xf32>
    %62 = vector.shape_cast %61 : vector<16x16x8xf32> to vector<256x8xf32>
    %63 = vector.extract_strided_slice %53 {offsets = [1, 0, 0], sizes = [16, 16, 8], strides = [1, 1, 1]} : vector<18x16x8xf32> to vector<16x16x8xf32>
    %64 = vector.shape_cast %63 : vector<16x16x8xf32> to vector<256x8xf32>
    %65 = vector.extract_strided_slice %54 {offsets = [1, 0, 0], sizes = [16, 16, 8], strides = [1, 1, 1]} : vector<18x16x8xf32> to vector<16x16x8xf32>
    %66 = vector.shape_cast %65 : vector<16x16x8xf32> to vector<256x8xf32>
    %67 = vector.extract_strided_slice %52 {offsets = [2, 0, 0], sizes = [16, 16, 8], strides = [1, 1, 1]} : vector<18x16x8xf32> to vector<16x16x8xf32>
    %68 = vector.shape_cast %67 : vector<16x16x8xf32> to vector<256x8xf32>
    %69 = vector.extract_strided_slice %53 {offsets = [2, 0, 0], sizes = [16, 16, 8], strides = [1, 1, 1]} : vector<18x16x8xf32> to vector<16x16x8xf32>
    %70 = vector.shape_cast %69 : vector<16x16x8xf32> to vector<256x8xf32>
    %71 = vector.extract_strided_slice %54 {offsets = [2, 0, 0], sizes = [16, 16, 8], strides = [1, 1, 1]} : vector<18x16x8xf32> to vector<16x16x8xf32>
    %72 = vector.shape_cast %71 : vector<16x16x8xf32> to vector<256x8xf32>
    %73 = tpu.concatenate %56, %58, %60, %62, %64, %66, %68, %70, %72 in 1 : vector<256x8xf32>, vector<256x8xf32>, vector<256x8xf32>, vector<256x8xf32>, vector<256x8xf32>, vector<256x8xf32>, vector<256x8xf32>, vector<256x8xf32>, vector<256x8xf32> -> vector<256x72xf32>
    %74 = arith.truncf %73 : vector<256x72xf32> to vector<256x72xbf16>
    %cst_63 = arith.constant dense<0.000000e+00> : vector<256x8xf32>
    %75 = tpu.matmul %74, %51, %cst_63 {dimension_numbers = #tpu.dot_dimension_numbers<[1], [0], [0], [1], [0, 0, 1, 1], [], []>} : vector<256x72xbf16>, vector<72x8xbf16>, vector<256x8xf32> -> vector<256x8xf32>
    %c0_64 = arith.constant 0 : index
    %c0_65 = arith.constant 0 : index
    %76 = vector.load %arg5[%c0_64, %c0_65] : memref<1x8xf32, #tpu.memory_space<vmem>>, vector<1x8xf32>
    %77 = vector.broadcast %76 : vector<1x8xf32> to vector<256x8xf32>
    %78 = arith.addf %75, %77 : vector<256x8xf32>
    %cst_66 = arith.constant 0.000000e+00 : f32
    %79 = vector.broadcast %cst_66 : f32 to vector<256x8xf32>
    %80 = arith.maximumf %78, %79 : vector<256x8xf32>
    %81 = vector.shape_cast %80 : vector<256x8xf32> to vector<1x16x16x8xf32>
    %c0_67 = arith.constant 0 : index
    %c0_68 = arith.constant 0 : index
    %c0_69 = arith.constant 0 : index
    %c0_70 = arith.constant 0 : index
    %82 = vector.load %arg6[%c0_67, %c0_68, %c0_69, %c0_70] : memref<1x16x16x8xf32, #tpu.memory_space<vmem>>, vector<1x16x16x8xf32>
    tpu.vector_store %arg6[%c0_67, %c0_68, %c0_69, %c0_70], %81 {strides = array<i32>} : memref<1x16x16x8xf32, #tpu.memory_space<vmem>>, vector<1x16x16x8xf32>,
    return
  }
  func.func @transform_0(%arg0: i32) -> (i32, i32, i32, i32) {
    %c0_i32 = arith.constant 0 : i32
    %c0_i32_0 = arith.constant 0 : i32
    %c0_i32_1 = arith.constant 0 : i32
    %c0_i32_2 = arith.constant 0 : i32
    return %arg0, %c0_i32, %c0_i32_0, %c0_i32_1 : i32, i32, i32, i32
  }
  func.func @transform_1(%arg0: i32) -> (i32, i32) {
    %c0_i32 = arith.constant 0 : i32
    %c0_i32_0 = arith.constant 0 : i32
    %c0_i32_1 = arith.constant 0 : i32
    return %c0_i32, %c0_i32_0 : i32, i32
  }
  func.func @transform_2(%arg0: i32) -> (i32, i32) {
    %c0_i32 = arith.constant 0 : i32
    %c0_i32_0 = arith.constant 0 : i32
    %c0_i32_1 = arith.constant 0 : i32
    return %c0_i32, %c0_i32_0 : i32, i32
  }
  func.func @transform_3(%arg0: i32) -> (i32, i32) {
    %c0_i32 = arith.constant 0 : i32
    %c0_i32_0 = arith.constant 0 : i32
    %c0_i32_1 = arith.constant 0 : i32
    return %c0_i32, %c0_i32_0 : i32, i32
  }
  func.func @transform_4(%arg0: i32) -> (i32, i32) {
    %c0_i32 = arith.constant 0 : i32
    %c0_i32_0 = arith.constant 0 : i32
    %c0_i32_1 = arith.constant 0 : i32
    return %c0_i32, %c0_i32_0 : i32, i32
  }
  func.func @transform_5(%arg0: i32) -> (i32, i32, i32, i32) {
    %c0_i32 = arith.constant 0 : i32
    %c0_i32_0 = arith.constant 0 : i32
    %c0_i32_1 = arith.constant 0 : i32
    %c0_i32_2 = arith.constant 0 : i32
    return %arg0, %c0_i32, %c0_i32_0, %c0_i32_1 : i32, i32, i32, i32
  }
}

</mosaic_0001>

<llo_original>
// kernel: tpu_custom_call.1
$region0: #{tpu_custom_call.1}
  #allocation0 [shape = 'u32[]', space=smem, size = 0x4, offset = 0x4, fixed_abs, tag = 'smem constant byte address 0x4 - core index']
  #allocation1 [shape = 'u32[144,128]{1,0:T(1,128)}', space=vmem, size = 0x12000, scoped, tag = 'internal scratch']
  #allocation2 [shape = 'f32[18,18,4]{2,1,0:T(8,128)}', space=vmem, size = 0x36000, scoped, tag = 'scratch operand']
  #allocation3 [shape = 'f32[18,18,8]{2,1,0:T(8,128)}', space=vmem, size = 0x36000, scoped, tag = 'scratch operand']
  %s0 = inlined_call_operand.vmem [shape: f32[2,16,16,4], index: 0, kind: input, shape index: {}]
  %s1 = inlined_call_operand.vmem [shape: bf16[36,8], index: 1, kind: input, shape index: {}]
  %s2 = inlined_call_operand.vmem [shape: f32[1,8], index: 2, kind: input, shape index: {}]
  %s3 = inlined_call_operand.vmem [shape: bf16[72,8], index: 3, kind: input, shape index: {}]
  %s4 = inlined_call_operand.vmem [shape: f32[1,8], index: 4, kind: input, shape index: {}]
  %s5 = inlined_call_operand.vmem [shape: f32[2,16,16,8], index: 5, kind: output, shape index: {}]
  %s6 = sld [smem:[#allocation0]]
  $region53: #{tpu_custom_call.1} parent=0
    _
  %s8 = ssub.s32 1, %s6
  %s9 = scalar_select 0, %s8, %s6
  loop: start=0, step=1, limit=4
  $region2: #{tpu_custom_call.1} parent=0 // loop_pre_header
    _
  $region3: #{tpu_custom_call.1} parent=0 // loop_header
    %s11 = sphi 0, %s15
    %p12 = scmp.ge.s32.totalorder %s11, 4
    %s21 = sphi 0, %s23
    %s24 = sphi 0, %s21
    %s25 = sphi 0, %s24
    %s41 = sphi 0, %s25
    %s45 = sphi 0, %s45
    %s47 = sphi 0, %s45
    %s48 = sphi 0, %s47
    %s62 = sphi 0, %s48
    %s66 = sphi 0, %s66
    %s68 = sphi 0, %s66
    %s69 = sphi 0, %s68
    %s83 = sphi 0, %s69
    %s87 = sphi 0, %s87
    %s89 = sphi 0, %s87
    %s90 = sphi 0, %s89
    %s104 = sphi 0, %s90
    %s108 = sphi 0, %s108
    %s110 = sphi 0, %s108
    %s111 = sphi 0, %s110
    %s125 = sphi 0, %s111
    %s131 = sphi 0, %s133
    %s134 = sphi 0, %s131
    %s135 = sphi 0, %s134
    %s151 = sphi 0, %s135
  $region4: #{tpu_custom_call.1} parent=0 // loop_header_branch
    %14 = sbr.rel (%p12) target = $region8
  $region5: #{tpu_custom_call.1} parent=0 // loop_body
    %s16 = ssub.s32 %s11, 1
    %s17 = ssub.s32 %s11, 2
    %s18 = sadd.s32 %s11, 1
    %s19 = ssub.s32 %s11, %s18
    %p20 = scmp.eq.s32.totalorder %s19, 0
    %s22 = sadd.s32 %s21, 1
    %s23 = scalar_select %p20, %s21, %s22
    %p26 = pneg %p20
    %p27 = scmp.eq.s32.totalorder %s11, 1
    %p28 = por %p26, %p27
    %p29 = scmp.ne.s32.totalorder %s21, %s24
    %p30 = scmp.eq.s32.totalorder %s11, 0
    %p31 = por %p29, %p30
    %p32 = scmp.ne.s32.totalorder %s21, %s24
    %p33 = scmp.eq.s32.totalorder %s16, 1
    %p34 = por %p32, %p33
    %p35 = scmp.ne.s32.totalorder %s24, %s25
    %p36 = scmp.eq.s32.totalorder %s16, 0
    %p37 = por %p35, %p36
    %p38 = scmp.ne.s32.totalorder %s24, %s25
    %p39 = scmp.eq.s32.totalorder %s17, 1
    %p40 = por %p38, %p39
    %p42 = scmp.ne.s32.totalorder %s25, %s41
    %p43 = scmp.eq.s32.totalorder %s17, 0
    %p44 = por %p42, %p43
    %s46 = sadd.s32 %s45, 1
    %p49 = scmp.eq.s32.totalorder %s11, 1
    %p50 = scmp.ne.s32.totalorder %s45, %s47
    %p51 = scmp.eq.s32.totalorder %s11, 0
    %p52 = por %p50, %p51
    %p53 = scmp.ne.s32.totalorder %s45, %s47
    %p54 = scmp.eq.s32.totalorder %s16, 1
    %p55 = por %p53, %p54
    %p56 = scmp.ne.s32.totalorder %s47, %s48
    %p57 = scmp.eq.s32.totalorder %s16, 0
    %p58 = por %p56, %p57
    %p59 = scmp.ne.s32.totalorder %s47, %s48
    %p60 = scmp.eq.s32.totalorder %s17, 1
    %p61 = por %p59, %p60
    %p63 = scmp.ne.s32.totalorder %s48, %s62
    %p64 = scmp.eq.s32.totalorder %s17, 0
    %p65 = por %p63, %p64
    %s67 = sadd.s32 %s66, 1
    %p70 = scmp.eq.s32.totalorder %s11, 1
    %p71 = scmp.ne.s32.totalorder %s66, %s68
    %p72 = scmp.eq.s32.totalorder %s11, 0
    %p73 = por %p71, %p72
    %p74 = scmp.ne.s32.totalorder %s66, %s68
    %p75 = scmp.eq.s32.totalorder %s16, 1
    %p76 = por %p74, %p75
    %p77 = scmp.ne.s32.totalorder %s68, %s69
    %p78 = scmp.eq.s32.totalorder %s16, 0
    %p79 = por %p77, %p78
    %p80 = scmp.ne.s32.totalorder %s68, %s69
    %p81 = scmp.eq.s32.totalorder %s17, 1
    %p82 = por %p80, %p81
    %p84 = scmp.ne.s32.totalorder %s69, %s83
    %p85 = scmp.eq.s32.totalorder %s17, 0
    %p86 = por %p84, %p85
    %s88 = sadd.s32 %s87, 1
    %p91 = scmp.eq.s32.totalorder %s11, 1
    %p92 = scmp.ne.s32.totalorder %s87, %s89
    %p93 = scmp.eq.s32.totalorder %s11, 0
    %p94 = por %p92, %p93
    %p95 = scmp.ne.s32.totalorder %s87, %s89
    %p96 = scmp.eq.s32.totalorder %s16, 1
    %p97 = por %p95, %p96
    %p98 = scmp.ne.s32.totalorder %s89, %s90
    %p99 = scmp.eq.s32.totalorder %s16, 0
    %p100 = por %p98, %p99
    %p101 = scmp.ne.s32.totalorder %s89, %s90
    %p102 = scmp.eq.s32.totalorder %s17, 1
    %p103 = por %p101, %p102
    %p105 = scmp.ne.s32.totalorder %s90, %s104
    %p106 = scmp.eq.s32.totalorder %s17, 0
    %p107 = por %p105, %p106
    %s109 = sadd.s32 %s108, 1
    %p112 = scmp.eq.s32.totalorder %s11, 1
    %p113 = scmp.ne.s32.totalorder %s108, %s110
    %p114 = scmp.eq.s32.totalorder %s11, 0
    %p115 = por %p113, %p114
    %p116 = scmp.ne.s32.totalorder %s108, %s110
    %p117 = scmp.eq.s32.totalorder %s16, 1
    %p118 = por %p116, %p117
    %p119 = scmp.ne.s32.totalorder %s110, %s111
    %p120 = scmp.eq.s32.totalorder %s16, 0
    %p121 = por %p119, %p120
    %p122 = scmp.ne.s32.totalorder %s110, %s111
    %p123 = scmp.eq.s32.totalorder %s17, 1
    %p124 = por %p122, %p123
    %p126 = scmp.ne.s32.totalorder %s111, %s125
    %p127 = scmp.eq.s32.totalorder %s17, 0
    %p128 = por %p126, %p127
    %s129 = ssub.s32 %s11, %s18
    %p130 = scmp.eq.s32.totalorder %s129, 0
    %s132 = sadd.s32 %s131, 1
    %s133 = scalar_select %p130, %s131, %s132
    %p136 = pneg %p130
    %p137 = scmp.eq.s32.totalorder %s11, 1
    %p138 = por %p136, %p137
    %p139 = scmp.ne.s32.totalorder %s131, %s134
    %p140 = scmp.eq.s32.totalorder %s11, 0
    %p141 = por %p139, %p140
    %p142 = scmp.ne.s32.totalorder %s131, %s134
    %p143 = scmp.eq.s32.totalorder %s16, 1
    %p144 = por %p142, %p143
    %p145 = scmp.ne.s32.totalorder %s134, %s135
    %p146 = scmp.eq.s32.totalorder %s16, 0
    %p147 = por %p145, %p146
    %p148 = scmp.ne.s32.totalorder %s134, %s135
    %p149 = scmp.eq.s32.totalorder %s17, 1
    %p150 = por %p148, %p149
    %p152 = scmp.ne.s32.totalorder %s135, %s151
    %p153 = scmp.eq.s32.totalorder %s17, 0
    %p154 = por %p152, %p153
    %p155 = scmp.le.s32.totalorder 1, %s11
    %p156 = scmp.lt.s32.totalorder %s11, 3
    %p157 = pnand %p155, %p156
    %p158 = pneg %p157
    // Predicated region
    $region9: #{tpu_custom_call.1} parent=5 // pred_check
      _
    $region10: #{tpu_custom_call.1} parent=5 // pred_check_branch
      %160 = sbr.rel (%p157) target = $region12
    $region11: #{tpu_custom_call.1} parent=5 // pred_region
      %s161 = ssub.s32 %s11, 1
      // Predicated region
      $region13: #{tpu_custom_call.1} parent=11 // pred_check
        %p162 = pneg %p58
      $region14: #{tpu_custom_call.1} parent=11 // pred_check_branch
        %164 = sbr.rel (%p162) target = $region16
      $region15: #{tpu_custom_call.1} parent=11 // pred_region
        _
      $region16: #{tpu_custom_call.1} parent=11 // pred_fallthru
        _
      // Predicated region
      $region17: #{tpu_custom_call.1} parent=11 // pred_check
        %p165 = pneg %p79
      $region18: #{tpu_custom_call.1} parent=11 // pred_check_branch
        %167 = sbr.rel (%p165) target = $region20
      $region19: #{tpu_custom_call.1} parent=11 // pred_region
        _
      $region20: #{tpu_custom_call.1} parent=11 // pred_fallthru
        _
      // Predicated region
      $region21: #{tpu_custom_call.1} parent=11 // pred_check
        %p168 = pneg %p100
      $region22: #{tpu_custom_call.1} parent=11 // pred_check_branch
        %170 = sbr.rel (%p168) target = $region24
      $region23: #{tpu_custom_call.1} parent=11 // pred_region
        _
      $region24: #{tpu_custom_call.1} parent=11 // pred_fallthru
        _
      // Predicated region
      $region25: #{tpu_custom_call.1} parent=11 // pred_check
        %p171 = pneg %p121
      $region26: #{tpu_custom_call.1} parent=11 // pred_check_branch
        %173 = sbr.rel (%p171) target = $region28
      $region27: #{tpu_custom_call.1} parent=11 // pred_region
        _
      $region28: #{tpu_custom_call.1} parent=11 // pred_fallthru
        _
    $region12: #{tpu_custom_call.1} parent=5 // pred_fallthru
      _
    %p174 = scmp.lt.s32.totalorder %s11, 2
    // Predicated region
    $region29: #{tpu_custom_call.1} parent=5 // pred_check
      %p175 = pneg %p174
    $region30: #{tpu_custom_call.1} parent=5 // pred_check_branch
      %177 = sbr.rel (%p175) target = $region32
    $region31: #{tpu_custom_call.1} parent=5 // pred_region
      // Predicated region
      $region33: #{tpu_custom_call.1} parent=31 // pred_check
        %p178 = pneg %p31
      $region34: #{tpu_custom_call.1} parent=31 // pred_check_branch
        %180 = sbr.rel (%p178) target = $region36
      $region35: #{tpu_custom_call.1} parent=31 // pred_region
        %p181 = scmp.lt.s32.totalorder %s11, 1
        %s182 = scalar_select %p181, %s11, 1
        %s183 = smul.addr %s182, 32
        %s184 = smul.addr %s183, 8
        %s185 = scalar_lea.vmem %s0, %s184
      $region36: #{tpu_custom_call.1} parent=31 // pred_fallthru
        _
    $region32: #{tpu_custom_call.1} parent=5 // pred_fallthru
      _
    %p186 = scmp.le.s32.totalorder 1, %s11
    %p187 = scmp.lt.s32.totalorder %s11, 3
    %p188 = pnand %p186, %p187
    %p189 = pneg %p188
    // Predicated region
    $region37: #{tpu_custom_call.1} parent=5 // pred_check
      _
    $region38: #{tpu_custom_call.1} parent=5 // pred_check_branch
      %191 = sbr.rel (%p188) target = $region40
    $region39: #{tpu_custom_call.1} parent=5 // pred_region
      %s192 = ssub.s32 %s11, 1
      %p193 = scmp.lt.s32.totalorder %s16, 1
      %s194 = scalar_select %p193, %s16, 1
      %s195 = smul.addr %s194, 32
      %s196 = smul.addr %s195, 8
      %s197 = scalar_lea.vmem %s0, %s196
      %p198 = pneg %p37
      %p199 = pneg %p34
      %p200 = pneg %p58
      %p201 = pneg %p55
      %p202 = pneg %p79
      %p203 = pneg %p76
      %p204 = pneg %p100
      %p205 = pneg %p97
      %p206 = pneg %p121
      %p207 = pneg %p118
      %p208 = pneg %p147
      %p209 = pneg %p144
      %p210 = scmp.lt.s32.totalorder %s16, 1
      %s211 = scalar_select %p210, %s16, 1
      %s212 = smul.addr %s211, 32
      %s213 = smul.addr %s212, 8
      %s214 = scalar_lea.vmem %s5, %s213
      %p215 = scmp.lt.s32.totalorder %s16, 1
      %s216 = scalar_select %p215, %s16, 1
      %s217 = smul.addr %s216, 32
      %s218 = smul.addr %s217, 8
      %s219 = scalar_lea.vmem %s0, %s218
      %p220 = scmp.lt.s32.totalorder %s16, 1
      %s221 = scalar_select %p220, %s16, 1
      %s222 = smul.addr %s221, 32
      %s223 = smul.addr %s222, 8
      %s224 = scalar_lea.vmem %s5, %s223
      %vm226 = vcmask 31744
      %227 = vst.msk [vmem:[#allocation2] sm:$0xff] %vm226, 0.0
      %228 = vst.msk [vmem:[#allocation2 + $0x8] sm:$0xff] %vm226, 0.0
      %vm229 = vcmask 25600
      %230 = vst.msk [vmem:[#allocation2 + $0x10] sm:$0x3] %vm229, 0.0
      %s231 = scalar_lea.vmem [#allocation2], 408
      %232 = vst.msk [vmem:[%s231] sm:$0xff] %vm226, 0.0
      %233 = vst.msk [vmem:[%s231 + $0x8] sm:$0xff] %vm226, 0.0
      %234 = vst.msk [vmem:[%s231 + $0x10] sm:$0x3] %vm229, 0.0
      %vm235 = vcmask 24576
      %236 = vst.msk [vmem:[#allocation2] sm:$0x1] %vm235, 0.0
      %237 = vst.msk [vmem:[#allocation2 + $0x18] sm:$0x1] %vm235, 0.0
      %238 = vst.msk [vmem:[#allocation2 + $0x30] sm:$0x1] %vm235, 0.0
      %239 = vst.msk [vmem:[#allocation2 + $0x48] sm:$0x1] %vm235, 0.0
      %240 = vst.msk [vmem:[#allocation2 + $0x60] sm:$0x1] %vm235, 0.0
      %241 = vst.msk [vmem:[#allocation2 + $0x78] sm:$0x1] %vm235, 0.0
      %242 = vst.msk [vmem:[#allocation2 + $0x90] sm:$0x1] %vm235, 0.0
      %243 = vst.msk [vmem:[#allocation2 + $0xa8] sm:$0x1] %vm235, 0.0
      %244 = vst.msk [vmem:[#allocation2 + $0xc0] sm:$0x1] %vm235, 0.0
      %245 = vst.msk [vmem:[#allocation2 + $0xd8] sm:$0x1] %vm235, 0.0
      %246 = vst.msk [vmem:[#allocation2 + $0xf0] sm:$0x1] %vm235, 0.0
      %247 = vst.msk [vmem:[#allocation2 + $0x108] sm:$0x1] %vm235, 0.0
      %248 = vst.msk [vmem:[#allocation2 + $0x120] sm:$0x1] %vm235, 0.0
      %249 = vst.msk [vmem:[#allocation2 + $0x138] sm:$0x1] %vm235, 0.0
      %250 = vst.msk [vmem:[#allocation2 + $0x150] sm:$0x1] %vm235, 0.0
      %251 = vst.msk [vmem:[#allocation2 + $0x168] sm:$0x1] %vm235, 0.0
      %252 = vst.msk [vmem:[#allocation2 + $0x180] sm:$0x1] %vm235, 0.0
      %253 = vst.msk [vmem:[#allocation2 + $0x198] sm:$0x1] %vm235, 0.0
      %254 = vst.msk [vmem:[#allocation2 + $0x11] sm:$0x1] %vm235, 0.0
      %255 = vst.msk [vmem:[#allocation2 + $0x29] sm:$0x1] %vm235, 0.0
      %256 = vst.msk [vmem:[#allocation2 + $0x41] sm:$0x1] %vm235, 0.0
      %257 = vst.msk [vmem:[#allocation2 + $0x59] sm:$0x1] %vm235, 0.0
      %258 = vst.msk [vmem:[#allocation2 + $0x71] sm:$0x1] %vm235, 0.0
      %259 = vst.msk [vmem:[#allocation2 + $0x89] sm:$0x1] %vm235, 0.0
      %260 = vst.msk [vmem:[#allocation2 + $0xa1] sm:$0x1] %vm235, 0.0
      %261 = vst.msk [vmem:[#allocation2 + $0xb9] sm:$0x1] %vm235, 0.0
      %262 = vst.msk [vmem:[#allocation2 + $0xd1] sm:$0x1] %vm235, 0.0
      %263 = vst.msk [vmem:[#allocation2 + $0xe9] sm:$0x1] %vm235, 0.0
      %264 = vst.msk [vmem:[#allocation2 + $0x101] sm:$0x1] %vm235, 0.0
      %265 = vst.msk [vmem:[#allocation2 + $0x119] sm:$0x1] %vm235, 0.0
      %266 = vst.msk [vmem:[#allocation2 + $0x131] sm:$0x1] %vm235, 0.0
      %267 = vst.msk [vmem:[#allocation2 + $0x149] sm:$0x1] %vm235, 0.0
      %268 = vst.msk [vmem:[#allocation2 + $0x161] sm:$0x1] %vm235, 0.0
      %269 = vst.msk [vmem:[#allocation2 + $0x179] sm:$0x1] %vm235, 0.0
      %270 = vst.msk [vmem:[#allocation2 + $0x191] sm:$0x1] %vm235, 0.0
      %271 = vst.msk [vmem:[#allocation2 + $0x1a9] sm:$0x1] %vm235, 0.0
      %vm272 = vcmask 64512
      %273 = vst.msk [vmem:[#allocation3] sm:$0xff] %vm272, 0.0
      %274 = vst.msk [vmem:[#allocation3 + $0x8] sm:$0xff] %vm272, 0.0
      %vm275 = vcmask 58368
      %276 = vst.msk [vmem:[#allocation3 + $0x10] sm:$0x3] %vm275, 0.0
      %s277 = scalar_lea.vmem [#allocation3], 408
      %278 = vst.msk [vmem:[%s277] sm:$0xff] %vm272, 0.0
      %279 = vst.msk [vmem:[%s277 + $0x8] sm:$0xff] %vm272, 0.0
      %280 = vst.msk [vmem:[%s277 + $0x10] sm:$0x3] %vm275, 0.0
      %vm281 = vcmask 57344
      %282 = vst.msk [vmem:[#allocation3] sm:$0x1] %vm281, 0.0
      %283 = vst.msk [vmem:[#allocation3 + $0x18] sm:$0x1] %vm281, 0.0
      %284 = vst.msk [vmem:[#allocation3 + $0x30] sm:$0x1] %vm281, 0.0
      %285 = vst.msk [vmem:[#allocation3 + $0x48] sm:$0x1] %vm281, 0.0
      %286 = vst.msk [vmem:[#allocation3 + $0x60] sm:$0x1] %vm281, 0.0
      %287 = vst.msk [vmem:[#allocation3 + $0x78] sm:$0x1] %vm281, 0.0
      %288 = vst.msk [vmem:[#allocation3 + $0x90] sm:$0x1] %vm281, 0.0
      %289 = vst.msk [vmem:[#allocation3 + $0xa8] sm:$0x1] %vm281, 0.0
      %290 = vst.msk [vmem:[#allocation3 + $0xc0] sm:$0x1] %vm281, 0.0
      %291 = vst.msk [vmem:[#allocation3 + $0xd8] sm:$0x1] %vm281, 0.0
      %292 = vst.msk [vmem:[#allocation3 + $0xf0] sm:$0x1] %vm281, 0.0
      %293 = vst.msk [vmem:[#allocation3 + $0x108] sm:$0x1] %vm281, 0.0
      %294 = vst.msk [vmem:[#allocation3 + $0x120] sm:$0x1] %vm281, 0.0
      %295 = vst.msk [vmem:[#allocation3 + $0x138] sm:$0x1] %vm281, 0.0
      %296 = vst.msk [vmem:[#allocation3 + $0x150] sm:$0x1] %vm281, 0.0
      %297 = vst.msk [vmem:[#allocation3 + $0x168] sm:$0x1] %vm281, 0.0
      %298 = vst.msk [vmem:[#allocation3 + $0x180] sm:$0x1] %vm281, 0.0
      %299 = vst.msk [vmem:[#allocation3 + $0x198] sm:$0x1] %vm281, 0.0
      %300 = vst.msk [vmem:[#allocation3 + $0x11] sm:$0x1] %vm281, 0.0
      %301 = vst.msk [vmem:[#allocation3 + $0x29] sm:$0x1] %vm281, 0.0
      %302 = vst.msk [vmem:[#allocation3 + $0x41] sm:$0x1] %vm281, 0.0
      %303 = vst.msk [vmem:[#allocation3 + $0x59] sm:$0x1] %vm281, 0.0
      %304 = vst.msk [vmem:[#allocation3 + $0x71] sm:$0x1] %vm281, 0.0
      %305 = vst.msk [vmem:[#allocation3 + $0x89] sm:$0x1] %vm281, 0.0
      %306 = vst.msk [vmem:[#allocation3 + $0xa1] sm:$0x1] %vm281, 0.0
      %307 = vst.msk [vmem:[#allocation3 + $0xb9] sm:$0x1] %vm281, 0.0
      %308 = vst.msk [vmem:[#allocation3 + $0xd1] sm:$0x1] %vm281, 0.0
      %309 = vst.msk [vmem:[#allocation3 + $0xe9] sm:$0x1] %vm281, 0.0
      %310 = vst.msk [vmem:[#allocation3 + $0x101] sm:$0x1] %vm281, 0.0
      %311 = vst.msk [vmem:[#allocation3 + $0x119] sm:$0x1] %vm281, 0.0
      %312 = vst.msk [vmem:[#allocation3 + $0x131] sm:$0x1] %vm281, 0.0
      %313 = vst.msk [vmem:[#allocation3 + $0x149] sm:$0x1] %vm281, 0.0
      %314 = vst.msk [vmem:[#allocation3 + $0x161] sm:$0x1] %vm281, 0.0
      %315 = vst.msk [vmem:[#allocation3 + $0x179] sm:$0x1] %vm281, 0.0
      %316 = vst.msk [vmem:[#allocation3 + $0x191] sm:$0x1] %vm281, 0.0
      %317 = vst.msk [vmem:[#allocation3 + $0x1a9] sm:$0x1] %vm281, 0.0
      %v318 = vld [vmem:[%s219] sm:$0xff]
      %v319 = vld [vmem:[%s219 + $0x8] sm:$0xff]
      %v320 = vld [vmem:[%s219 + $0x10] sm:$0xff]
      %v321 = vld [vmem:[%s219 + $0x18] sm:$0xff]
      %v322 = vld [vmem:[%s219 + $0x20] sm:$0xff]
      %v323 = vld [vmem:[%s219 + $0x28] sm:$0xff]
      %v324 = vld [vmem:[%s219 + $0x30] sm:$0xff]
      %v325 = vld [vmem:[%s219 + $0x38] sm:$0xff]
      %v326 = vld [vmem:[%s219 + $0x40] sm:$0xff]
      %v327 = vld [vmem:[%s219 + $0x48] sm:$0xff]
      %v328 = vld [vmem:[%s219 + $0x50] sm:$0xff]
      %v329 = vld [vmem:[%s219 + $0x58] sm:$0xff]
      %v330 = vld [vmem:[%s219 + $0x60] sm:$0xff]
      %v331 = vld [vmem:[%s219 + $0x68] sm:$0xff]
      %v332 = vld [vmem:[%s219 + $0x70] sm:$0xff]
      %v333 = vld [vmem:[%s219 + $0x78] sm:$0xff]
      %v334 = vld [vmem:[%s219 + $0x80] sm:$0xff]
      %v335 = vld [vmem:[%s219 + $0x88] sm:$0xff]
      %v336 = vld [vmem:[%s219 + $0x90] sm:$0xff]
      %v337 = vld [vmem:[%s219 + $0x98] sm:$0xff]
      %v338 = vld [vmem:[%s219 + $0xa0] sm:$0xff]
      %v339 = vld [vmem:[%s219 + $0xa8] sm:$0xff]
      %v340 = vld [vmem:[%s219 + $0xb0] sm:$0xff]
      %v341 = vld [vmem:[%s219 + $0xb8] sm:$0xff]
      %v342 = vld [vmem:[%s219 + $0xc0] sm:$0xff]
      %v343 = vld [vmem:[%s219 + $0xc8] sm:$0xff]
      %v344 = vld [vmem:[%s219 + $0xd0] sm:$0xff]
      %v345 = vld [vmem:[%s219 + $0xd8] sm:$0xff]
      %v346 = vld [vmem:[%s219 + $0xe0] sm:$0xff]
      %v347 = vld [vmem:[%s219 + $0xe8] sm:$0xff]
      %v348 = vld [vmem:[%s219 + $0xf0] sm:$0xff]
      %v349 = vld [vmem:[%s219 + $0xf8] sm:$0xff]
      %s350 = scalar_lea.vmem [#allocation2], 24
      %351 = vst.msk [vmem:[%s350 + $0x1] sm:$0xff] %vm226, %v318
      %352 = vst.msk [vmem:[%s350 + $0x9] sm:$0xff] %vm226, %v319
      %353 = vst.msk [vmem:[%s350 + $0x19] sm:$0xff] %vm226, %v320
      %354 = vst.msk [vmem:[%s350 + $0x21] sm:$0xff] %vm226, %v321
      %355 = vst.msk [vmem:[%s350 + $0x31] sm:$0xff] %vm226, %v322
      %356 = vst.msk [vmem:[%s350 + $0x39] sm:$0xff] %vm226, %v323
      %357 = vst.msk [vmem:[%s350 + $0x49] sm:$0xff] %vm226, %v324
      %358 = vst.msk [vmem:[%s350 + $0x51] sm:$0xff] %vm226, %v325
      %359 = vst.msk [vmem:[%s350 + $0x61] sm:$0xff] %vm226, %v326
      %360 = vst.msk [vmem:[%s350 + $0x69] sm:$0xff] %vm226, %v327
      %361 = vst.msk [vmem:[%s350 + $0x79] sm:$0xff] %vm226, %v328
      %362 = vst.msk [vmem:[%s350 + $0x81] sm:$0xff] %vm226, %v329
      %363 = vst.msk [vmem:[%s350 + $0x91] sm:$0xff] %vm226, %v330
      %364 = vst.msk [vmem:[%s350 + $0x99] sm:$0xff] %vm226, %v331
      %365 = vst.msk [vmem:[%s350 + $0xa9] sm:$0xff] %vm226, %v332
      %366 = vst.msk [vmem:[%s350 + $0xb1] sm:$0xff] %vm226, %v333
      %367 = vst.msk [vmem:[%s350 + $0xc1] sm:$0xff] %vm226, %v334
      %368 = vst.msk [vmem:[%s350 + $0xc9] sm:$0xff] %vm226, %v335
      %369 = vst.msk [vmem:[%s350 + $0xd9] sm:$0xff] %vm226, %v336
      %370 = vst.msk [vmem:[%s350 + $0xe1] sm:$0xff] %vm226, %v337
      %371 = vst.msk [vmem:[%s350 + $0xf1] sm:$0xff] %vm226, %v338
      %372 = vst.msk [vmem:[%s350 + $0xf9] sm:$0xff] %vm226, %v339
      %373 = vst.msk [vmem:[%s350 + $0x109] sm:$0xff] %vm226, %v340
      %374 = vst.msk [vmem:[%s350 + $0x111] sm:$0xff] %vm226, %v341
      %375 = vst.msk [vmem:[%s350 + $0x121] sm:$0xff] %vm226, %v342
      %376 = vst.msk [vmem:[%s350 + $0x129] sm:$0xff] %vm226, %v343
      %377 = vst.msk [vmem:[%s350 + $0x139] sm:$0xff] %vm226, %v344
      %378 = vst.msk [vmem:[%s350 + $0x141] sm:$0xff] %vm226, %v345
      %379 = vst.msk [vmem:[%s350 + $0x151] sm:$0xff] %vm226, %v346
      %380 = vst.msk [vmem:[%s350 + $0x159] sm:$0xff] %vm226, %v347
      %381 = vst.msk [vmem:[%s350 + $0x169] sm:$0xff] %vm226, %v348
      %382 = vst.msk [vmem:[%s350 + $0x171] sm:$0xff] %vm226, %v349
      %v383 = vld [vmem:[%s1] sm:$0xf]
      %v384 = vld [vmem:[%s1 + $0x4] sm:$0xf]
      %v385 = vld [vmem:[%s1 + $0x8] sm:$0xf]
      %v386 = vld [vmem:[%s1 + $0xc] sm:$0xf]
      %v387 = vld [vmem:[%s1 + $0x10] sm:$0x3]
      %v388 = vld [vmem:[#allocation2] sm:$0xff]
      %v389 = vld [vmem:[#allocation2 + $0x8] sm:$0xff]
      %v390 = vld [vmem:[#allocation2 + $0x18] sm:$0xff]
      %v391 = vld [vmem:[#allocation2 + $0x20] sm:$0xff]
      %v392 = vld [vmem:[#allocation2 + $0x30] sm:$0xff]
      %v393 = vld [vmem:[#allocation2 + $0x38] sm:$0xff]
      %v394 = vld [vmem:[#allocation2 + $0x48] sm:$0xff]
      %v395 = vld [vmem:[#allocation2 + $0x50] sm:$0xff]
      %v396 = vld [vmem:[#allocation2 + $0x60] sm:$0xff]
      %v397 = vld [vmem:[#allocation2 + $0x68] sm:$0xff]
      %v398 = vld [vmem:[#allocation2 + $0x78] sm:$0xff]
      %v399 = vld [vmem:[#allocation2 + $0x80] sm:$0xff]
      %v400 = vld [vmem:[#allocation2 + $0x90] sm:$0xff]
      %v401 = vld [vmem:[#allocation2 + $0x98] sm:$0xff]
      %v402 = vld [vmem:[#allocation2 + $0xa8] sm:$0xff]
      %v403 = vld [vmem:[#allocation2 + $0xb0] sm:$0xff]
      %v404 = vld [vmem:[#allocation2 + $0xc0] sm:$0xff]
      %v405 = vld [vmem:[#allocation2 + $0xc8] sm:$0xff]
      %v406 = vld [vmem:[#allocation2 + $0xd8] sm:$0xff]
      %v407 = vld [vmem:[#allocation2 + $0xe0] sm:$0xff]
      %v408 = vld [vmem:[#allocation2 + $0xf0] sm:$0xff]
      %v409 = vld [vmem:[#allocation2 + $0xf8] sm:$0xff]
      %v410 = vld [vmem:[#allocation2 + $0x108] sm:$0xff]
      %v411 = vld [vmem:[#allocation2 + $0x110] sm:$0xff]
      %v412 = vld [vmem:[#allocation2 + $0x120] sm:$0xff]
      %v413 = vld [vmem:[#allocation2 + $0x128] sm:$0xff]
      %v414 = vld [vmem:[#allocation2 + $0x138] sm:$0xff]
      %v415 = vld [vmem:[#allocation2 + $0x140] sm:$0xff]
      %v416 = vld [vmem:[#allocation2 + $0x150] sm:$0xff]
      %v417 = vld [vmem:[#allocation2 + $0x158] sm:$0xff]
      %v418 = vld [vmem:[#allocation2 + $0x168] sm:$0xff]
      %v419 = vld [vmem:[#allocation2 + $0x170] sm:$0xff]
      %v420 = vld [vmem:[#allocation2 + $0x180] sm:$0xff]
      %v421 = vld [vmem:[#allocation2 + $0x188] sm:$0xff]
      %v422 = vld [vmem:[#allocation2 + $0x198] sm:$0xff]
      %v423 = vld [vmem:[#allocation2 + $0x1a0] sm:$0xff]
      %v424 = vld [vmem:[#allocation2 + $0x1] sm:$0xff]
      %v425 = vld [vmem:[#allocation2 + $0x9] sm:$0xff]
      %v426 = vld [vmem:[#allocation2 + $0x19] sm:$0xff]
      %v427 = vld [vmem:[#allocation2 + $0x21] sm:$0xff]
      %v428 = vld [vmem:[#allocation2 + $0x31] sm:$0xff]
      %v429 = vld [vmem:[#allocation2 + $0x39] sm:$0xff]
      %v430 = vld [vmem:[#allocation2 + $0x49] sm:$0xff]
      %v431 = vld [vmem:[#allocation2 + $0x51] sm:$0xff]
      %v432 = vld [vmem:[#allocation2 + $0x61] sm:$0xff]
      %v433 = vld [vmem:[#allocation2 + $0x69] sm:$0xff]
      %v434 = vld [vmem:[#allocation2 + $0x79] sm:$0xff]
      %v435 = vld [vmem:[#allocation2 + $0x81] sm:$0xff]
      %v436 = vld [vmem:[#allocation2 + $0x91] sm:$0xff]
      %v437 = vld [vmem:[#allocation2 + $0x99] sm:$0xff]
      %v438 = vld [vmem:[#allocation2 + $0xa9] sm:$0xff]
      %v439 = vld [vmem:[#allocation2 + $0xb1] sm:$0xff]
      %v440 = vld [vmem:[#allocation2 + $0xc1] sm:$0xff]
      %v441 = vld [vmem:[#allocation2 + $0xc9] sm:$0xff]
      %v442 = vld [vmem:[#allocation2 + $0xd9] sm:$0xff]
      %v443 = vld [vmem:[#allocation2 + $0xe1] sm:$0xff]
      %v444 = vld [vmem:[#allocation2 + $0xf1] sm:$0xff]
      %v445 = vld [vmem:[#allocation2 + $0xf9] sm:$0xff]
      %v446 = vld [vmem:[#allocation2 + $0x109] sm:$0xff]
      %v447 = vld [vmem:[#allocation2 + $0x111] sm:$0xff]
      %v448 = vld [vmem:[#allocation2 + $0x121] sm:$0xff]
      %v449 = vld [vmem:[#allocation2 + $0x129] sm:$0xff]
      %v450 = vld [vmem:[#allocation2 + $0x139] sm:$0xff]
      %v451 = vld [vmem:[#allocation2 + $0x141] sm:$0xff]
      %v452 = vld [vmem:[#allocation2 + $0x151] sm:$0xff]
      %v453 = vld [vmem:[#allocation2 + $0x159] sm:$0xff]
      %v454 = vld [vmem:[#allocation2 + $0x169] sm:$0xff]
      %v455 = vld [vmem:[#allocation2 + $0x171] sm:$0xff]
      %v456 = vld [vmem:[#allocation2 + $0x181] sm:$0xff]
      %v457 = vld [vmem:[#allocation2 + $0x189] sm:$0xff]
      %v458 = vld [vmem:[#allocation2 + $0x199] sm:$0xff]
      %v459 = vld [vmem:[#allocation2 + $0x1a1] sm:$0xff]
      %v460 = vld [vmem:[#allocation2 + $0x2] sm:$0xff]
      %v461 = vld [vmem:[#allocation2 + $0xa] sm:$0xff]
      %v462 = vld [vmem:[#allocation2 + $0x1a] sm:$0xff]
      %v463 = vld [vmem:[#allocation2 + $0x22] sm:$0xff]
      %v464 = vld [vmem:[#allocation2 + $0x32] sm:$0xff]
      %v465 = vld [vmem:[#allocation2 + $0x3a] sm:$0xff]
      %v466 = vld [vmem:[#allocation2 + $0x4a] sm:$0xff]
      %v467 = vld [vmem:[#allocation2 + $0x52] sm:$0xff]
      %v468 = vld [vmem:[#allocation2 + $0x62] sm:$0xff]
      %v469 = vld [vmem:[#allocation2 + $0x6a] sm:$0xff]
      %v470 = vld [vmem:[#allocation2 + $0x7a] sm:$0xff]
      %v471 = vld [vmem:[#allocation2 + $0x82] sm:$0xff]
      %v472 = vld [vmem:[#allocation2 + $0x92] sm:$0xff]
      %v473 = vld [vmem:[#allocation2 + $0x9a] sm:$0xff]
      %v474 = vld [vmem:[#allocation2 + $0xaa] sm:$0xff]
      %v475 = vld [vmem:[#allocation2 + $0xb2] sm:$0xff]
      %v476 = vld [vmem:[#allocation2 + $0xc2] sm:$0xff]
      %v477 = vld [vmem:[#allocation2 + $0xca] sm:$0xff]
      %v478 = vld [vmem:[#allocation2 + $0xda] sm:$0xff]
      %v479 = vld [vmem:[#allocation2 + $0xe2] sm:$0xff]
      %v480 = vld [vmem:[#allocation2 + $0xf2] sm:$0xff]
      %v481 = vld [vmem:[#allocation2 + $0xfa] sm:$0xff]
      %v482 = vld [vmem:[#allocation2 + $0x10a] sm:$0xff]
      %v483 = vld [vmem:[#allocation2 + $0x112] sm:$0xff]
      %v484 = vld [vmem:[#allocation2 + $0x122] sm:$0xff]
      %v485 = vld [vmem:[#allocation2 + $0x12a] sm:$0xff]
      %v486 = vld [vmem:[#allocation2 + $0x13a] sm:$0xff]
      %v487 = vld [vmem:[#allocation2 + $0x142] sm:$0xff]
      %v488 = vld [vmem:[#allocation2 + $0x152] sm:$0xff]
      %v489 = vld [vmem:[#allocation2 + $0x15a] sm:$0xff]
      %v490 = vld [vmem:[#allocation2 + $0x16a] sm:$0xff]
      %v491 = vld [vmem:[#allocation2 + $0x172] sm:$0xff]
      %v492 = vld [vmem:[#allocation2 + $0x182] sm:$0xff]
      %v493 = vld [vmem:[#allocation2 + $0x18a] sm:$0xff]
      %v494 = vld [vmem:[#allocation2 + $0x19a] sm:$0xff]
      %v495 = vld [vmem:[#allocation2 + $0x1a2] sm:$0xff]
      %528 = vrot.lane.b32.xlu0 %v424, 4
      %v529 = vpop.permute.xlu0 %528
      %530 = vrot.lane.b32.xlu0 %v425, 4
      %v531 = vpop.permute.xlu0 %530
      %532 = vrot.lane.b32.xlu0 %v426, 4
      %v533 = vpop.permute.xlu0 %532
      %534 = vrot.lane.b32.xlu0 %v427, 4
      %v535 = vpop.permute.xlu0 %534
      %536 = vrot.lane.b32.xlu0 %v428, 4
      %v537 = vpop.permute.xlu0 %536
      %538 = vrot.lane.b32.xlu0 %v429, 4
      %v539 = vpop.permute.xlu0 %538
      %540 = vrot.lane.b32.xlu0 %v430, 4
      %v541 = vpop.permute.xlu0 %540
      %542 = vrot.lane.b32.xlu0 %v431, 4
      %v543 = vpop.permute.xlu0 %542
      %544 = vrot.lane.b32.xlu0 %v432, 4
      %v545 = vpop.permute.xlu0 %544
      %546 = vrot.lane.b32.xlu0 %v433, 4
      %v547 = vpop.permute.xlu0 %546
      %548 = vrot.lane.b32.xlu0 %v434, 4
      %v549 = vpop.permute.xlu0 %548
      %550 = vrot.lane.b32.xlu0 %v435, 4
      %v551 = vpop.permute.xlu0 %550
      %552 = vrot.lane.b32.xlu0 %v436, 4
      %v553 = vpop.permute.xlu0 %552
      %554 = vrot.lane.b32.xlu0 %v437, 4
      %v555 = vpop.permute.xlu0 %554
      %556 = vrot.lane.b32.xlu0 %v438, 4
      %v557 = vpop.permute.xlu0 %556
      %558 = vrot.lane.b32.xlu0 %v439, 4
      %v559 = vpop.permute.xlu0 %558
      %560 = vrot.lane.b32.xlu0 %v440, 4
      %v561 = vpop.permute.xlu0 %560
      %562 = vrot.lane.b32.xlu0 %v441, 4
      %v563 = vpop.permute.xlu0 %562
      %564 = vrot.lane.b32.xlu0 %v442, 4
      %v565 = vpop.permute.xlu0 %564
      %566 = vrot.lane.b32.xlu0 %v443, 4
      %v567 = vpop.permute.xlu0 %566
      %568 = vrot.lane.b32.xlu0 %v444, 4
      %v569 = vpop.permute.xlu0 %568
      %570 = vrot.lane.b32.xlu0 %v445, 4
      %v571 = vpop.permute.xlu0 %570
      %572 = vrot.lane.b32.xlu0 %v446, 4
      %v573 = vpop.permute.xlu0 %572
      %574 = vrot.lane.b32.xlu0 %v447, 4
      %v575 = vpop.permute.xlu0 %574
      %576 = vrot.lane.b32.xlu0 %v448, 4
      %v577 = vpop.permute.xlu0 %576
      %578 = vrot.lane.b32.xlu0 %v449, 4
      %v579 = vpop.permute.xlu0 %578
      %580 = vrot.lane.b32.xlu0 %v450, 4
      %v581 = vpop.permute.xlu0 %580
      %582 = vrot.lane.b32.xlu0 %v451, 4
      %v583 = vpop.permute.xlu0 %582
      %584 = vrot.lane.b32.xlu0 %v452, 4
      %v585 = vpop.permute.xlu0 %584
      %586 = vrot.lane.b32.xlu0 %v453, 4
      %v587 = vpop.permute.xlu0 %586
      %588 = vrot.lane.b32.xlu0 %v454, 4
      %v589 = vpop.permute.xlu0 %588
      %590 = vrot.lane.b32.xlu0 %v455, 4
      %v591 = vpop.permute.xlu0 %590
      %656 = vrot.lane.b32.xlu0 %v460, 8
      %v657 = vpop.permute.xlu0 %656
      %658 = vrot.lane.b32.xlu0 %v461, 8
      %v659 = vpop.permute.xlu0 %658
      %660 = vrot.lane.b32.xlu0 %v462, 8
      %v661 = vpop.permute.xlu0 %660
      %662 = vrot.lane.b32.xlu0 %v463, 8
      %v663 = vpop.permute.xlu0 %662
      %664 = vrot.lane.b32.xlu0 %v464, 8
      %v665 = vpop.permute.xlu0 %664
      %666 = vrot.lane.b32.xlu0 %v465, 8
      %v667 = vpop.permute.xlu0 %666
      %668 = vrot.lane.b32.xlu0 %v466, 8
      %v669 = vpop.permute.xlu0 %668
      %670 = vrot.lane.b32.xlu0 %v467, 8
      %v671 = vpop.permute.xlu0 %670
      %672 = vrot.lane.b32.xlu0 %v468, 8
      %v673 = vpop.permute.xlu0 %672
      %674 = vrot.lane.b32.xlu0 %v469, 8
      %v675 = vpop.permute.xlu0 %674
      %676 = vrot.lane.b32.xlu0 %v470, 8
      %v677 = vpop.permute.xlu0 %676
      %678 = vrot.lane.b32.xlu0 %v471, 8
      %v679 = vpop.permute.xlu0 %678
      %680 = vrot.lane.b32.xlu0 %v472, 8
      %v681 = vpop.permute.xlu0 %680
      %682 = vrot.lane.b32.xlu0 %v473, 8
      %v683 = vpop.permute.xlu0 %682
      %684 = vrot.lane.b32.xlu0 %v474, 8
      %v685 = vpop.permute.xlu0 %684
      %686 = vrot.lane.b32.xlu0 %v475, 8
      %v687 = vpop.permute.xlu0 %686
      %688 = vrot.lane.b32.xlu0 %v476, 8
      %v689 = vpop.permute.xlu0 %688
      %690 = vrot.lane.b32.xlu0 %v477, 8
      %v691 = vpop.permute.xlu0 %690
      %692 = vrot.lane.b32.xlu0 %v478, 8
      %v693 = vpop.permute.xlu0 %692
      %694 = vrot.lane.b32.xlu0 %v479, 8
      %v695 = vpop.permute.xlu0 %694
      %696 = vrot.lane.b32.xlu0 %v480, 8
      %v697 = vpop.permute.xlu0 %696
      %698 = vrot.lane.b32.xlu0 %v481, 8
      %v699 = vpop.permute.xlu0 %698
      %700 = vrot.lane.b32.xlu0 %v482, 8
      %v701 = vpop.permute.xlu0 %700
      %702 = vrot.lane.b32.xlu0 %v483, 8
      %v703 = vpop.permute.xlu0 %702
      %704 = vrot.lane.b32.xlu0 %v484, 8
      %v705 = vpop.permute.xlu0 %704
      %706 = vrot.lane.b32.xlu0 %v485, 8
      %v707 = vpop.permute.xlu0 %706
      %708 = vrot.lane.b32.xlu0 %v486, 8
      %v709 = vpop.permute.xlu0 %708
      %710 = vrot.lane.b32.xlu0 %v487, 8
      %v711 = vpop.permute.xlu0 %710
      %712 = vrot.lane.b32.xlu0 %v488, 8
      %v713 = vpop.permute.xlu0 %712
      %714 = vrot.lane.b32.xlu0 %v489, 8
      %v715 = vpop.permute.xlu0 %714
      %716 = vrot.lane.b32.xlu0 %v490, 8
      %v717 = vpop.permute.xlu0 %716
      %718 = vrot.lane.b32.xlu0 %v491, 8
      %v719 = vpop.permute.xlu0 %718
      %784 = vrot.lane.b32.xlu0 %v390, 12
      %v785 = vpop.permute.xlu0 %784
      %786 = vrot.lane.b32.xlu0 %v391, 12
      %v787 = vpop.permute.xlu0 %786
      %788 = vrot.lane.b32.xlu0 %v392, 12
      %v789 = vpop.permute.xlu0 %788
      %790 = vrot.lane.b32.xlu0 %v393, 12
      %v791 = vpop.permute.xlu0 %790
      %792 = vrot.lane.b32.xlu0 %v394, 12
      %v793 = vpop.permute.xlu0 %792
      %794 = vrot.lane.b32.xlu0 %v395, 12
      %v795 = vpop.permute.xlu0 %794
      %796 = vrot.lane.b32.xlu0 %v396, 12
      %v797 = vpop.permute.xlu0 %796
      %798 = vrot.lane.b32.xlu0 %v397, 12
      %v799 = vpop.permute.xlu0 %798
      %800 = vrot.lane.b32.xlu0 %v398, 12
      %v801 = vpop.permute.xlu0 %800
      %802 = vrot.lane.b32.xlu0 %v399, 12
      %v803 = vpop.permute.xlu0 %802
      %804 = vrot.lane.b32.xlu0 %v400, 12
      %v805 = vpop.permute.xlu0 %804
      %806 = vrot.lane.b32.xlu0 %v401, 12
      %v807 = vpop.permute.xlu0 %806
      %808 = vrot.lane.b32.xlu0 %v402, 12
      %v809 = vpop.permute.xlu0 %808
      %810 = vrot.lane.b32.xlu0 %v403, 12
      %v811 = vpop.permute.xlu0 %810
      %812 = vrot.lane.b32.xlu0 %v404, 12
      %v813 = vpop.permute.xlu0 %812
      %814 = vrot.lane.b32.xlu0 %v405, 12
      %v815 = vpop.permute.xlu0 %814
      %816 = vrot.lane.b32.xlu0 %v406, 12
      %v817 = vpop.permute.xlu0 %816
      %818 = vrot.lane.b32.xlu0 %v407, 12
      %v819 = vpop.permute.xlu0 %818
      %820 = vrot.lane.b32.xlu0 %v408, 12
      %v821 = vpop.permute.xlu0 %820
      %822 = vrot.lane.b32.xlu0 %v409, 12
      %v823 = vpop.permute.xlu0 %822
      %824 = vrot.lane.b32.xlu0 %v410, 12
      %v825 = vpop.permute.xlu0 %824
      %826 = vrot.lane.b32.xlu0 %v411, 12
      %v827 = vpop.permute.xlu0 %826
      %828 = vrot.lane.b32.xlu0 %v412, 12
      %v829 = vpop.permute.xlu0 %828
      %830 = vrot.lane.b32.xlu0 %v413, 12
      %v831 = vpop.permute.xlu0 %830
      %832 = vrot.lane.b32.xlu0 %v414, 12
      %v833 = vpop.permute.xlu0 %832
      %834 = vrot.lane.b32.xlu0 %v415, 12
      %v835 = vpop.permute.xlu0 %834
      %836 = vrot.lane.b32.xlu0 %v416, 12
      %v837 = vpop.permute.xlu0 %836
      %838 = vrot.lane.b32.xlu0 %v417, 12
      %v839 = vpop.permute.xlu0 %838
      %840 = vrot.lane.b32.xlu0 %v418, 12
      %v841 = vpop.permute.xlu0 %840
      %842 = vrot.lane.b32.xlu0 %v419, 12
      %v843 = vpop.permute.xlu0 %842
      %844 = vrot.lane.b32.xlu0 %v420, 12
      %v845 = vpop.permute.xlu0 %844
      %846 = vrot.lane.b32.xlu0 %v421, 12
      %v847 = vpop.permute.xlu0 %846
      %882 = vrot.lane.b32.xlu0 %v426, 16
      %v883 = vpop.permute.xlu0 %882
      %884 = vrot.lane.b32.xlu0 %v427, 16
      %v885 = vpop.permute.xlu0 %884
      %886 = vrot.lane.b32.xlu0 %v428, 16
      %v887 = vpop.permute.xlu0 %886
      %888 = vrot.lane.b32.xlu0 %v429, 16
      %v889 = vpop.permute.xlu0 %888
      %890 = vrot.lane.b32.xlu0 %v430, 16
      %v891 = vpop.permute.xlu0 %890
      %892 = vrot.lane.b32.xlu0 %v431, 16
      %v893 = vpop.permute.xlu0 %892
      %894 = vrot.lane.b32.xlu0 %v432, 16
      %v895 = vpop.permute.xlu0 %894
      %896 = vrot.lane.b32.xlu0 %v433, 16
      %v897 = vpop.permute.xlu0 %896
      %898 = vrot.lane.b32.xlu0 %v434, 16
      %v899 = vpop.permute.xlu0 %898
      %900 = vrot.lane.b32.xlu0 %v435, 16
      %v901 = vpop.permute.xlu0 %900
      %902 = vrot.lane.b32.xlu0 %v436, 16
      %v903 = vpop.permute.xlu0 %902
      %904 = vrot.lane.b32.xlu0 %v437, 16
      %v905 = vpop.permute.xlu0 %904
      %906 = vrot.lane.b32.xlu0 %v438, 16
      %v907 = vpop.permute.xlu0 %906
      %908 = vrot.lane.b32.xlu0 %v439, 16
      %v909 = vpop.permute.xlu0 %908
      %910 = vrot.lane.b32.xlu0 %v440, 16
      %v911 = vpop.permute.xlu0 %910
      %912 = vrot.lane.b32.xlu0 %v441, 16
      %v913 = vpop.permute.xlu0 %912
      %914 = vrot.lane.b32.xlu0 %v442, 16
      %v915 = vpop.permute.xlu0 %914
      %916 = vrot.lane.b32.xlu0 %v443, 16
      %v917 = vpop.permute.xlu0 %916
      %918 = vrot.lane.b32.xlu0 %v444, 16
      %v919 = vpop.permute.xlu0 %918
      %920 = vrot.lane.b32.xlu0 %v445, 16
      %v921 = vpop.permute.xlu0 %920
      %922 = vrot.lane.b32.xlu0 %v446, 16
      %v923 = vpop.permute.xlu0 %922
      %924 = vrot.lane.b32.xlu0 %v447, 16
      %v925 = vpop.permute.xlu0 %924
      %926 = vrot.lane.b32.xlu0 %v448, 16
      %v927 = vpop.permute.xlu0 %926
      %928 = vrot.lane.b32.xlu0 %v449, 16
      %v929 = vpop.permute.xlu0 %928
      %930 = vrot.lane.b32.xlu0 %v450, 16
      %v931 = vpop.permute.xlu0 %930
      %932 = vrot.lane.b32.xlu0 %v451, 16
      %v933 = vpop.permute.xlu0 %932
      %934 = vrot.lane.b32.xlu0 %v452, 16
      %v935 = vpop.permute.xlu0 %934
      %936 = vrot.lane.b32.xlu0 %v453, 16
      %v937 = vpop.permute.xlu0 %936
      %938 = vrot.lane.b32.xlu0 %v454, 16
      %v939 = vpop.permute.xlu0 %938
      %940 = vrot.lane.b32.xlu0 %v455, 16
      %v941 = vpop.permute.xlu0 %940
      %942 = vrot.lane.b32.xlu0 %v456, 16
      %v943 = vpop.permute.xlu0 %942
      %944 = vrot.lane.b32.xlu0 %v457, 16
      %v945 = vpop.permute.xlu0 %944
      %980 = vrot.lane.b32.xlu0 %v462, 20
      %v981 = vpop.permute.xlu0 %980
      %982 = vrot.lane.b32.xlu0 %v463, 20
      %v983 = vpop.permute.xlu0 %982
      %984 = vrot.lane.b32.xlu0 %v464, 20
      %v985 = vpop.permute.xlu0 %984
      %986 = vrot.lane.b32.xlu0 %v465, 20
      %v987 = vpop.permute.xlu0 %986
      %988 = vrot.lane.b32.xlu0 %v466, 20
      %v989 = vpop.permute.xlu0 %988
      %990 = vrot.lane.b32.xlu0 %v467, 20
      %v991 = vpop.permute.xlu0 %990
      %992 = vrot.lane.b32.xlu0 %v468, 20
      %v993 = vpop.permute.xlu0 %992
      %994 = vrot.lane.b32.xlu0 %v469, 20
      %v995 = vpop.permute.xlu0 %994
      %996 = vrot.lane.b32.xlu0 %v470, 20
      %v997 = vpop.permute.xlu0 %996
      %998 = vrot.lane.b32.xlu0 %v471, 20
      %v999 = vpop.permute.xlu0 %998
      %1000 = vrot.lane.b32.xlu0 %v472, 20
      %v1001 = vpop.permute.xlu0 %1000
      %1002 = vrot.lane.b32.xlu0 %v473, 20
      %v1003 = vpop.permute.xlu0 %1002
      %1004 = vrot.lane.b32.xlu0 %v474, 20
      %v1005 = vpop.permute.xlu0 %1004
      %1006 = vrot.lane.b32.xlu0 %v475, 20
      %v1007 = vpop.permute.xlu0 %1006
      %1008 = vrot.lane.b32.xlu0 %v476, 20
      %v1009 = vpop.permute.xlu0 %1008
      %1010 = vrot.lane.b32.xlu0 %v477, 20
      %v1011 = vpop.permute.xlu0 %1010
      %1012 = vrot.lane.b32.xlu0 %v478, 20
      %v1013 = vpop.permute.xlu0 %1012
      %1014 = vrot.lane.b32.xlu0 %v479, 20
      %v1015 = vpop.permute.xlu0 %1014
      %1016 = vrot.lane.b32.xlu0 %v480, 20
      %v1017 = vpop.permute.xlu0 %1016
      %1018 = vrot.lane.b32.xlu0 %v481, 20
      %v1019 = vpop.permute.xlu0 %1018
      %1020 = vrot.lane.b32.xlu0 %v482, 20
      %v1021 = vpop.permute.xlu0 %1020
      %1022 = vrot.lane.b32.xlu0 %v483, 20
      %v1023 = vpop.permute.xlu0 %1022
      %1024 = vrot.lane.b32.xlu0 %v484, 20
      %v1025 = vpop.permute.xlu0 %1024
      %1026 = vrot.lane.b32.xlu0 %v485, 20
      %v1027 = vpop.permute.xlu0 %1026
      %1028 = vrot.lane.b32.xlu0 %v486, 20
      %v1029 = vpop.permute.xlu0 %1028
      %1030 = vrot.lane.b32.xlu0 %v487, 20
      %v1031 = vpop.permute.xlu0 %1030
      %1032 = vrot.lane.b32.xlu0 %v488, 20
      %v1033 = vpop.permute.xlu0 %1032
      %1034 = vrot.lane.b32.xlu0 %v489, 20
      %v1035 = vpop.permute.xlu0 %1034
      %1036 = vrot.lane.b32.xlu0 %v490, 20
      %v1037 = vpop.permute.xlu0 %1036
      %1038 = vrot.lane.b32.xlu0 %v491, 20
      %v1039 = vpop.permute.xlu0 %1038
      %1040 = vrot.lane.b32.xlu0 %v492, 20
      %v1041 = vpop.permute.xlu0 %1040
      %1042 = vrot.lane.b32.xlu0 %v493, 20
      %v1043 = vpop.permute.xlu0 %1042
      %1078 = vrot.lane.b32.xlu0 %v392, 24
      %v1079 = vpop.permute.xlu0 %1078
      %1080 = vrot.lane.b32.xlu0 %v393, 24
      %v1081 = vpop.permute.xlu0 %1080
      %1082 = vrot.lane.b32.xlu0 %v394, 24
      %v1083 = vpop.permute.xlu0 %1082
      %1084 = vrot.lane.b32.xlu0 %v395, 24
      %v1085 = vpop.permute.xlu0 %1084
      %1086 = vrot.lane.b32.xlu0 %v396, 24
      %v1087 = vpop.permute.xlu0 %1086
      %1088 = vrot.lane.b32.xlu0 %v397, 24
      %v1089 = vpop.permute.xlu0 %1088
      %1090 = vrot.lane.b32.xlu0 %v398, 24
      %v1091 = vpop.permute.xlu0 %1090
      %1092 = vrot.lane.b32.xlu0 %v399, 24
      %v1093 = vpop.permute.xlu0 %1092
      %1094 = vrot.lane.b32.xlu0 %v400, 24
      %v1095 = vpop.permute.xlu0 %1094
      %1096 = vrot.lane.b32.xlu0 %v401, 24
      %v1097 = vpop.permute.xlu0 %1096
      %1098 = vrot.lane.b32.xlu0 %v402, 24
      %v1099 = vpop.permute.xlu0 %1098
      %1100 = vrot.lane.b32.xlu0 %v403, 24
      %v1101 = vpop.permute.xlu0 %1100
      %1102 = vrot.lane.b32.xlu0 %v404, 24
      %v1103 = vpop.permute.xlu0 %1102
      %1104 = vrot.lane.b32.xlu0 %v405, 24
      %v1105 = vpop.permute.xlu0 %1104
      %1106 = vrot.lane.b32.xlu0 %v406, 24
      %v1107 = vpop.permute.xlu0 %1106
      %1108 = vrot.lane.b32.xlu0 %v407, 24
      %v1109 = vpop.permute.xlu0 %1108
      %1110 = vrot.lane.b32.xlu0 %v408, 24
      %v1111 = vpop.permute.xlu0 %1110
      %1112 = vrot.lane.b32.xlu0 %v409, 24
      %v1113 = vpop.permute.xlu0 %1112
      %1114 = vrot.lane.b32.xlu0 %v410, 24
      %v1115 = vpop.permute.xlu0 %1114
      %1116 = vrot.lane.b32.xlu0 %v411, 24
      %v1117 = vpop.permute.xlu0 %1116
      %1118 = vrot.lane.b32.xlu0 %v412, 24
      %v1119 = vpop.permute.xlu0 %1118
      %1120 = vrot.lane.b32.xlu0 %v413, 24
      %v1121 = vpop.permute.xlu0 %1120
      %1122 = vrot.lane.b32.xlu0 %v414, 24
      %v1123 = vpop.permute.xlu0 %1122
      %1124 = vrot.lane.b32.xlu0 %v415, 24
      %v1125 = vpop.permute.xlu0 %1124
      %1126 = vrot.lane.b32.xlu0 %v416, 24
      %v1127 = vpop.permute.xlu0 %1126
      %1128 = vrot.lane.b32.xlu0 %v417, 24
      %v1129 = vpop.permute.xlu0 %1128
      %1130 = vrot.lane.b32.xlu0 %v418, 24
      %v1131 = vpop.permute.xlu0 %1130
      %1132 = vrot.lane.b32.xlu0 %v419, 24
      %v1133 = vpop.permute.xlu0 %1132
      %1134 = vrot.lane.b32.xlu0 %v420, 24
      %v1135 = vpop.permute.xlu0 %1134
      %1136 = vrot.lane.b32.xlu0 %v421, 24
      %v1137 = vpop.permute.xlu0 %1136
      %1138 = vrot.lane.b32.xlu0 %v422, 24
      %v1139 = vpop.permute.xlu0 %1138
      %1140 = vrot.lane.b32.xlu0 %v423, 24
      %v1141 = vpop.permute.xlu0 %1140
      %1176 = vrot.lane.b32.xlu0 %v428, 28
      %v1177 = vpop.permute.xlu0 %1176
      %1178 = vrot.lane.b32.xlu0 %v429, 28
      %v1179 = vpop.permute.xlu0 %1178
      %1180 = vrot.lane.b32.xlu0 %v430, 28
      %v1181 = vpop.permute.xlu0 %1180
      %1182 = vrot.lane.b32.xlu0 %v431, 28
      %v1183 = vpop.permute.xlu0 %1182
      %1184 = vrot.lane.b32.xlu0 %v432, 28
      %v1185 = vpop.permute.xlu0 %1184
      %1186 = vrot.lane.b32.xlu0 %v433, 28
      %v1187 = vpop.permute.xlu0 %1186
      %1188 = vrot.lane.b32.xlu0 %v434, 28
      %v1189 = vpop.permute.xlu0 %1188
      %1190 = vrot.lane.b32.xlu0 %v435, 28
      %v1191 = vpop.permute.xlu0 %1190
      %1192 = vrot.lane.b32.xlu0 %v436, 28
      %v1193 = vpop.permute.xlu0 %1192
      %1194 = vrot.lane.b32.xlu0 %v437, 28
      %v1195 = vpop.permute.xlu0 %1194
      %1196 = vrot.lane.b32.xlu0 %v438, 28
      %v1197 = vpop.permute.xlu0 %1196
      %1198 = vrot.lane.b32.xlu0 %v439, 28
      %v1199 = vpop.permute.xlu0 %1198
      %1200 = vrot.lane.b32.xlu0 %v440, 28
      %v1201 = vpop.permute.xlu0 %1200
      %1202 = vrot.lane.b32.xlu0 %v441, 28
      %v1203 = vpop.permute.xlu0 %1202
      %1204 = vrot.lane.b32.xlu0 %v442, 28
      %v1205 = vpop.permute.xlu0 %1204
      %1206 = vrot.lane.b32.xlu0 %v443, 28
      %v1207 = vpop.permute.xlu0 %1206
      %1208 = vrot.lane.b32.xlu0 %v444, 28
      %v1209 = vpop.permute.xlu0 %1208
      %1210 = vrot.lane.b32.xlu0 %v445, 28
      %v1211 = vpop.permute.xlu0 %1210
      %1212 = vrot.lane.b32.xlu0 %v446, 28
      %v1213 = vpop.permute.xlu0 %1212
      %1214 = vrot.lane.b32.xlu0 %v447, 28
      %v1215 = vpop.permute.xlu0 %1214
      %1216 = vrot.lane.b32.xlu0 %v448, 28
      %v1217 = vpop.permute.xlu0 %1216
      %1218 = vrot.lane.b32.xlu0 %v449, 28
      %v1219 = vpop.permute.xlu0 %1218
      %1220 = vrot.lane.b32.xlu0 %v450, 28
      %v1221 = vpop.permute.xlu0 %1220
      %1222 = vrot.lane.b32.xlu0 %v451, 28
      %v1223 = vpop.permute.xlu0 %1222
      %1224 = vrot.lane.b32.xlu0 %v452, 28
      %v1225 = vpop.permute.xlu0 %1224
      %1226 = vrot.lane.b32.xlu0 %v453, 28
      %v1227 = vpop.permute.xlu0 %1226
      %1228 = vrot.lane.b32.xlu0 %v454, 28
      %v1229 = vpop.permute.xlu0 %1228
      %1230 = vrot.lane.b32.xlu0 %v455, 28
      %v1231 = vpop.permute.xlu0 %1230
      %1232 = vrot.lane.b32.xlu0 %v456, 28
      %v1233 = vpop.permute.xlu0 %1232
      %1234 = vrot.lane.b32.xlu0 %v457, 28
      %v1235 = vpop.permute.xlu0 %1234
      %1236 = vrot.lane.b32.xlu0 %v458, 28
      %v1237 = vpop.permute.xlu0 %1236
      %1238 = vrot.lane.b32.xlu0 %v459, 28
      %v1239 = vpop.permute.xlu0 %1238
      %1274 = vrot.lane.b32.xlu0 %v464, 32
      %v1275 = vpop.permute.xlu0 %1274
      %1276 = vrot.lane.b32.xlu0 %v465, 32
      %v1277 = vpop.permute.xlu0 %1276
      %1278 = vrot.lane.b32.xlu0 %v466, 32
      %v1279 = vpop.permute.xlu0 %1278
      %1280 = vrot.lane.b32.xlu0 %v467, 32
      %v1281 = vpop.permute.xlu0 %1280
      %1282 = vrot.lane.b32.xlu0 %v468, 32
      %v1283 = vpop.permute.xlu0 %1282
      %1284 = vrot.lane.b32.xlu0 %v469, 32
      %v1285 = vpop.permute.xlu0 %1284
      %1286 = vrot.lane.b32.xlu0 %v470, 32
      %v1287 = vpop.permute.xlu0 %1286
      %1288 = vrot.lane.b32.xlu0 %v471, 32
      %v1289 = vpop.permute.xlu0 %1288
      %1290 = vrot.lane.b32.xlu0 %v472, 32
      %v1291 = vpop.permute.xlu0 %1290
      %1292 = vrot.lane.b32.xlu0 %v473, 32
      %v1293 = vpop.permute.xlu0 %1292
      %1294 = vrot.lane.b32.xlu0 %v474, 32
      %v1295 = vpop.permute.xlu0 %1294
      %1296 = vrot.lane.b32.xlu0 %v475, 32
      %v1297 = vpop.permute.xlu0 %1296
      %1298 = vrot.lane.b32.xlu0 %v476, 32
      %v1299 = vpop.permute.xlu0 %1298
      %1300 = vrot.lane.b32.xlu0 %v477, 32
      %v1301 = vpop.permute.xlu0 %1300
      %1302 = vrot.lane.b32.xlu0 %v478, 32
      %v1303 = vpop.permute.xlu0 %1302
      %1304 = vrot.lane.b32.xlu0 %v479, 32
      %v1305 = vpop.permute.xlu0 %1304
      %1306 = vrot.lane.b32.xlu0 %v480, 32
      %v1307 = vpop.permute.xlu0 %1306
      %1308 = vrot.lane.b32.xlu0 %v481, 32
      %v1309 = vpop.permute.xlu0 %1308
      %1310 = vrot.lane.b32.xlu0 %v482, 32
      %v1311 = vpop.permute.xlu0 %1310
      %1312 = vrot.lane.b32.xlu0 %v483, 32
      %v1313 = vpop.permute.xlu0 %1312
      %1314 = vrot.lane.b32.xlu0 %v484, 32
      %v1315 = vpop.permute.xlu0 %1314
      %1316 = vrot.lane.b32.xlu0 %v485, 32
      %v1317 = vpop.permute.xlu0 %1316
      %1318 = vrot.lane.b32.xlu0 %v486, 32
      %v1319 = vpop.permute.xlu0 %1318
      %1320 = vrot.lane.b32.xlu0 %v487, 32
      %v1321 = vpop.permute.xlu0 %1320
      %1322 = vrot.lane.b32.xlu0 %v488, 32
      %v1323 = vpop.permute.xlu0 %1322
      %1324 = vrot.lane.b32.xlu0 %v489, 32
      %v1325 = vpop.permute.xlu0 %1324
      %1326 = vrot.lane.b32.xlu0 %v490, 32
      %v1327 = vpop.permute.xlu0 %1326
      %1328 = vrot.lane.b32.xlu0 %v491, 32
      %v1329 = vpop.permute.xlu0 %1328
      %1330 = vrot.lane.b32.xlu0 %v492, 32
      %v1331 = vpop.permute.xlu0 %1330
      %1332 = vrot.lane.b32.xlu0 %v493, 32
      %v1333 = vpop.permute.xlu0 %1332
      %1334 = vrot.lane.b32.xlu0 %v494, 32
      %v1335 = vpop.permute.xlu0 %1334
      %1336 = vrot.lane.b32.xlu0 %v495, 32
      %v1337 = vpop.permute.xlu0 %1336
      %v1370 = vsel %vm226, %v388, %v529
      %v1371 = vsel %vm226, %v389, %v531
      %v1372 = vsel %vm226, %v390, %v533
      %v1373 = vsel %vm226, %v391, %v535
      %v1374 = vsel %vm226, %v392, %v537
      %v1375 = vsel %vm226, %v393, %v539
      %v1376 = vsel %vm226, %v394, %v541
      %v1377 = vsel %vm226, %v395, %v543
      %v1378 = vsel %vm226, %v396, %v545
      %v1379 = vsel %vm226, %v397, %v547
      %v1380 = vsel %vm226, %v398, %v549
      %v1381 = vsel %vm226, %v399, %v551
      %v1382 = vsel %vm226, %v400, %v553
      %v1383 = vsel %vm226, %v401, %v555
      %v1384 = vsel %vm226, %v402, %v557
      %v1385 = vsel %vm226, %v403, %v559
      %v1386 = vsel %vm226, %v404, %v561
      %v1387 = vsel %vm226, %v405, %v563
      %v1388 = vsel %vm226, %v406, %v565
      %v1389 = vsel %vm226, %v407, %v567
      %v1390 = vsel %vm226, %v408, %v569
      %v1391 = vsel %vm226, %v409, %v571
      %v1392 = vsel %vm226, %v410, %v573
      %v1393 = vsel %vm226, %v411, %v575
      %v1394 = vsel %vm226, %v412, %v577
      %v1395 = vsel %vm226, %v413, %v579
      %v1396 = vsel %vm226, %v414, %v581
      %v1397 = vsel %vm226, %v415, %v583
      %v1398 = vsel %vm226, %v416, %v585
      %v1399 = vsel %vm226, %v417, %v587
      %v1400 = vsel %vm226, %v418, %v589
      %v1401 = vsel %vm226, %v419, %v591
      %v1402 = vsel %vm272, %v1370, %v657
      %v1403 = vsel %vm272, %v1371, %v659
      %v1404 = vsel %vm272, %v1372, %v661
      %v1405 = vsel %vm272, %v1373, %v663
      %v1406 = vsel %vm272, %v1374, %v665
      %v1407 = vsel %vm272, %v1375, %v667
      %v1408 = vsel %vm272, %v1376, %v669
      %v1409 = vsel %vm272, %v1377, %v671
      %v1410 = vsel %vm272, %v1378, %v673
      %v1411 = vsel %vm272, %v1379, %v675
      %v1412 = vsel %vm272, %v1380, %v677
      %v1413 = vsel %vm272, %v1381, %v679
      %v1414 = vsel %vm272, %v1382, %v681
      %v1415 = vsel %vm272, %v1383, %v683
      %v1416 = vsel %vm272, %v1384, %v685
      %v1417 = vsel %vm272, %v1385, %v687
      %v1418 = vsel %vm272, %v1386, %v689
      %v1419 = vsel %vm272, %v1387, %v691
      %v1420 = vsel %vm272, %v1388, %v693
      %v1421 = vsel %vm272, %v1389, %v695
      %v1422 = vsel %vm272, %v1390, %v697
      %v1423 = vsel %vm272, %v1391, %v699
      %v1424 = vsel %vm272, %v1392, %v701
      %v1425 = vsel %vm272, %v1393, %v703
      %v1426 = vsel %vm272, %v1394, %v705
      %v1427 = vsel %vm272, %v1395, %v707
      %v1428 = vsel %vm272, %v1396, %v709
      %v1429 = vsel %vm272, %v1397, %v711
      %v1430 = vsel %vm272, %v1398, %v713
      %v1431 = vsel %vm272, %v1399, %v715
      %v1432 = vsel %vm272, %v1400, %v717
      %v1433 = vsel %vm272, %v1401, %v719
      %vm1434 = vcmask 97280
      %v1435 = vsel %vm1434, %v1402, %v785
      %v1436 = vsel %vm1434, %v1403, %v787
      %v1437 = vsel %vm1434, %v1404, %v789
      %v1438 = vsel %vm1434, %v1405, %v791
      %v1439 = vsel %vm1434, %v1406, %v793
      %v1440 = vsel %vm1434, %v1407, %v795
      %v1441 = vsel %vm1434, %v1408, %v797
      %v1442 = vsel %vm1434, %v1409, %v799
      %v1443 = vsel %vm1434, %v1410, %v801
      %v1444 = vsel %vm1434, %v1411, %v803
      %v1445 = vsel %vm1434, %v1412, %v805
      %v1446 = vsel %vm1434, %v1413, %v807
      %v1447 = vsel %vm1434, %v1414, %v809
      %v1448 = vsel %vm1434, %v1415, %v811
      %v1449 = vsel %vm1434, %v1416, %v813
      %v1450 = vsel %vm1434, %v1417, %v815
      %v1451 = vsel %vm1434, %v1418, %v817
      %v1452 = vsel %vm1434, %v1419, %v819
      %v1453 = vsel %vm1434, %v1420, %v821
      %v1454 = vsel %vm1434, %v1421, %v823
      %v1455 = vsel %vm1434, %v1422, %v825
      %v1456 = vsel %vm1434, %v1423, %v827
      %v1457 = vsel %vm1434, %v1424, %v829
      %v1458 = vsel %vm1434, %v1425, %v831
      %v1459 = vsel %vm1434, %v1426, %v833
      %v1460 = vsel %vm1434, %v1427, %v835
      %v1461 = vsel %vm1434, %v1428, %v837
      %v1462 = vsel %vm1434, %v1429, %v839
      %v1463 = vsel %vm1434, %v1430, %v841
      %v1464 = vsel %vm1434, %v1431, %v843
      %v1465 = vsel %vm1434, %v1432, %v845
      %v1466 = vsel %vm1434, %v1433, %v847
      %vm1467 = vcmask 130048
      %v1468 = vsel %vm1467, %v1435, %v883
      %v1469 = vsel %vm1467, %v1436, %v885
      %v1470 = vsel %vm1467, %v1437, %v887
      %v1471 = vsel %vm1467, %v1438, %v889
      %v1472 = vsel %vm1467, %v1439, %v891
      %v1473 = vsel %vm1467, %v1440, %v893
      %v1474 = vsel %vm1467, %v1441, %v895
      %v1475 = vsel %vm1467, %v1442, %v897
      %v1476 = vsel %vm1467, %v1443, %v899
      %v1477 = vsel %vm1467, %v1444, %v901
      %v1478 = vsel %vm1467, %v1445, %v903
      %v1479 = vsel %vm1467, %v1446, %v905
      %v1480 = vsel %vm1467, %v1447, %v907
      %v1481 = vsel %vm1467, %v1448, %v909
      %v1482 = vsel %vm1467, %v1449, %v911
      %v1483 = vsel %vm1467, %v1450, %v913
      %v1484 = vsel %vm1467, %v1451, %v915
      %v1485 = vsel %vm1467, %v1452, %v917
      %v1486 = vsel %vm1467, %v1453, %v919
      %v1487 = vsel %vm1467, %v1454, %v921
      %v1488 = vsel %vm1467, %v1455, %v923
      %v1489 = vsel %vm1467, %v1456, %v925
      %v1490 = vsel %vm1467, %v1457, %v927
      %v1491 = vsel %vm1467, %v1458, %v929
      %v1492 = vsel %vm1467, %v1459, %v931
      %v1493 = vsel %vm1467, %v1460, %v933
      %v1494 = vsel %vm1467, %v1461, %v935
      %v1495 = vsel %vm1467, %v1462, %v937
      %v1496 = vsel %vm1467, %v1463, %v939
      %v1497 = vsel %vm1467, %v1464, %v941
      %v1498 = vsel %vm1467, %v1465, %v943
      %v1499 = vsel %vm1467, %v1466, %v945
      %vm1500 = vcmask 162816
      %v1501 = vsel %vm1500, %v1468, %v981
      %v1502 = vsel %vm1500, %v1469, %v983
      %v1503 = vsel %vm1500, %v1470, %v985
      %v1504 = vsel %vm1500, %v1471, %v987
      %v1505 = vsel %vm1500, %v1472, %v989
      %v1506 = vsel %vm1500, %v1473, %v991
      %v1507 = vsel %vm1500, %v1474, %v993
      %v1508 = vsel %vm1500, %v1475, %v995
      %v1509 = vsel %vm1500, %v1476, %v997
      %v1510 = vsel %vm1500, %v1477, %v999
      %v1511 = vsel %vm1500, %v1478, %v1001
      %v1512 = vsel %vm1500, %v1479, %v1003
      %v1513 = vsel %vm1500, %v1480, %v1005
      %v1514 = vsel %vm1500, %v1481, %v1007
      %v1515 = vsel %vm1500, %v1482, %v1009
      %v1516 = vsel %vm1500, %v1483, %v1011
      %v1517 = vsel %vm1500, %v1484, %v1013
      %v1518 = vsel %vm1500, %v1485, %v1015
      %v1519 = vsel %vm1500, %v1486, %v1017
      %v1520 = vsel %vm1500, %v1487, %v1019
      %v1521 = vsel %vm1500, %v1488, %v1021
      %v1522 = vsel %vm1500, %v1489, %v1023
      %v1523 = vsel %vm1500, %v1490, %v1025
      %v1524 = vsel %vm1500, %v1491, %v1027
      %v1525 = vsel %vm1500, %v1492, %v1029
      %v1526 = vsel %vm1500, %v1493, %v1031
      %v1527 = vsel %vm1500, %v1494, %v1033
      %v1528 = vsel %vm1500, %v1495, %v1035
      %v1529 = vsel %vm1500, %v1496, %v1037
      %v1530 = vsel %vm1500, %v1497, %v1039
      %v1531 = vsel %vm1500, %v1498, %v1041
      %v1532 = vsel %vm1500, %v1499, %v1043
      %vm1533 = vcmask 195584
      %v1534 = vsel %vm1533, %v1501, %v1079
      %v1535 = vsel %vm1533, %v1502, %v1081
      %v1536 = vsel %vm1533, %v1503, %v1083
      %v1537 = vsel %vm1533, %v1504, %v1085
      %v1538 = vsel %vm1533, %v1505, %v1087
      %v1539 = vsel %vm1533, %v1506, %v1089
      %v1540 = vsel %vm1533, %v1507, %v1091
      %v1541 = vsel %vm1533, %v1508, %v1093
      %v1542 = vsel %vm1533, %v1509, %v1095
      %v1543 = vsel %vm1533, %v1510, %v1097
      %v1544 = vsel %vm1533, %v1511, %v1099
      %v1545 = vsel %vm1533, %v1512, %v1101
      %v1546 = vsel %vm1533, %v1513, %v1103
      %v1547 = vsel %vm1533, %v1514, %v1105
      %v1548 = vsel %vm1533, %v1515, %v1107
      %v1549 = vsel %vm1533, %v1516, %v1109
      %v1550 = vsel %vm1533, %v1517, %v1111
      %v1551 = vsel %vm1533, %v1518, %v1113
      %v1552 = vsel %vm1533, %v1519, %v1115
      %v1553 = vsel %vm1533, %v1520, %v1117
      %v1554 = vsel %vm1533, %v1521, %v1119
      %v1555 = vsel %vm1533, %v1522, %v1121
      %v1556 = vsel %vm1533, %v1523, %v1123
      %v1557 = vsel %vm1533, %v1524, %v1125
      %v1558 = vsel %vm1533, %v1525, %v1127
      %v1559 = vsel %vm1533, %v1526, %v1129
      %v1560 = vsel %vm1533, %v1527, %v1131
      %v1561 = vsel %vm1533, %v1528, %v1133
      %v1562 = vsel %vm1533, %v1529, %v1135
      %v1563 = vsel %vm1533, %v1530, %v1137
      %v1564 = vsel %vm1533, %v1531, %v1139
      %v1565 = vsel %vm1533, %v1532, %v1141
      %vm1566 = vcmask 228352
      %v1567 = vsel %vm1566, %v1534, %v1177
      %v1568 = vsel %vm1566, %v1535, %v1179
      %v1569 = vsel %vm1566, %v1536, %v1181
      %v1570 = vsel %vm1566, %v1537, %v1183
      %v1571 = vsel %vm1566, %v1538, %v1185
      %v1572 = vsel %vm1566, %v1539, %v1187
      %v1573 = vsel %vm1566, %v1540, %v1189
      %v1574 = vsel %vm1566, %v1541, %v1191
      %v1575 = vsel %vm1566, %v1542, %v1193
      %v1576 = vsel %vm1566, %v1543, %v1195
      %v1577 = vsel %vm1566, %v1544, %v1197
      %v1578 = vsel %vm1566, %v1545, %v1199
      %v1579 = vsel %vm1566, %v1546, %v1201
      %v1580 = vsel %vm1566, %v1547, %v1203
      %v1581 = vsel %vm1566, %v1548, %v1205
      %v1582 = vsel %vm1566, %v1549, %v1207
      %v1583 = vsel %vm1566, %v1550, %v1209
      %v1584 = vsel %vm1566, %v1551, %v1211
      %v1585 = vsel %vm1566, %v1552, %v1213
      %v1586 = vsel %vm1566, %v1553, %v1215
      %v1587 = vsel %vm1566, %v1554, %v1217
      %v1588 = vsel %vm1566, %v1555, %v1219
      %v1589 = vsel %vm1566, %v1556, %v1221
      %v1590 = vsel %vm1566, %v1557, %v1223
      %v1591 = vsel %vm1566, %v1558, %v1225
      %v1592 = vsel %vm1566, %v1559, %v1227
      %v1593 = vsel %vm1566, %v1560, %v1229
      %v1594 = vsel %vm1566, %v1561, %v1231
      %v1595 = vsel %vm1566, %v1562, %v1233
      %v1596 = vsel %vm1566, %v1563, %v1235
      %v1597 = vsel %vm1566, %v1564, %v1237
      %v1598 = vsel %vm1566, %v1565, %v1239
      %vm1599 = vcmask 261120
      %v1600 = vsel %vm1599, %v1567, %v1275
      %v1601 = vsel %vm1599, %v1568, %v1277
      %v1602 = vsel %vm1599, %v1569, %v1279
      %v1603 = vsel %vm1599, %v1570, %v1281
      %v1604 = vsel %vm1599, %v1571, %v1283
      %v1605 = vsel %vm1599, %v1572, %v1285
      %v1606 = vsel %vm1599, %v1573, %v1287
      %v1607 = vsel %vm1599, %v1574, %v1289
      %v1608 = vsel %vm1599, %v1575, %v1291
      %v1609 = vsel %vm1599, %v1576, %v1293
      %v1610 = vsel %vm1599, %v1577, %v1295
      %v1611 = vsel %vm1599, %v1578, %v1297
      %v1612 = vsel %vm1599, %v1579, %v1299
      %v1613 = vsel %vm1599, %v1580, %v1301
      %v1614 = vsel %vm1599, %v1581, %v1303
      %v1615 = vsel %vm1599, %v1582, %v1305
      %v1616 = vsel %vm1599, %v1583, %v1307
      %v1617 = vsel %vm1599, %v1584, %v1309
      %v1618 = vsel %vm1599, %v1585, %v1311
      %v1619 = vsel %vm1599, %v1586, %v1313
      %v1620 = vsel %vm1599, %v1587, %v1315
      %v1621 = vsel %vm1599, %v1588, %v1317
      %v1622 = vsel %vm1599, %v1589, %v1319
      %v1623 = vsel %vm1599, %v1590, %v1321
      %v1624 = vsel %vm1599, %v1591, %v1323
      %v1625 = vsel %vm1599, %v1592, %v1325
      %v1626 = vsel %vm1599, %v1593, %v1327
      %v1627 = vsel %vm1599, %v1594, %v1329
      %v1628 = vsel %vm1599, %v1595, %v1331
      %v1629 = vsel %vm1599, %v1596, %v1333
      %v1630 = vsel %vm1599, %v1597, %v1335
      %v1631 = vsel %vm1599, %v1598, %v1337
      %v1632 = vpack.c.bf16 %v1601, %v1600
      %v1633 = vpack.c.bf16 %v1603, %v1602
      %v1634 = vpack.c.bf16 %v1605, %v1604
      %v1635 = vpack.c.bf16 %v1607, %v1606
      %v1636 = vpack.c.bf16 %v1609, %v1608
      %v1637 = vpack.c.bf16 %v1611, %v1610
      %v1638 = vpack.c.bf16 %v1613, %v1612
      %v1639 = vpack.c.bf16 %v1615, %v1614
      %v1640 = vpack.c.bf16 %v1617, %v1616
      %v1641 = vpack.c.bf16 %v1619, %v1618
      %v1642 = vpack.c.bf16 %v1621, %v1620
      %v1643 = vpack.c.bf16 %v1623, %v1622
      %v1644 = vpack.c.bf16 %v1625, %v1624
      %v1645 = vpack.c.bf16 %v1627, %v1626
      %v1646 = vpack.c.bf16 %v1629, %v1628
      %v1647 = vpack.c.bf16 %v1631, %v1630
      %v1648 = vld [vmem:[%s2] sm:$0x1]
      %v1650 = vlaneseq
      %v1651 = vshrl.u32 %v1650, 7
      %v1652 = vsub.s32 0, %v1651
      %v1653 = vrot.slane %v1648, %v1652
      %v1660 = vunpack.c.l.b16 %v383
      %v1661 = vunpack.c.l.b16 %v384
      %v1662 = vunpack.c.l.b16 %v385
      %v1663 = vunpack.c.l.b16 %v386
      %v1664 = vunpack.c.l.b16 %v387
      %v1665 = vpack.c.b16 %v1661, %v1660
      %v1666 = vpack.c.b16 %v1663, %v1662
      %v1667 = vpack.c.b16 %v1664, %v1664
      %vm1670 = vcmask 293888
      %v1672 = vsel %vm1670, %v1632, 0
      %v1675 = vsel %vm1670, %v1633, 0
      %v1678 = vsel %vm1670, %v1634, 0
      %v1681 = vsel %vm1670, %v1635, 0
      %v1684 = vsel %vm1670, %v1636, 0
      %v1687 = vsel %vm1670, %v1637, 0
      %v1690 = vsel %vm1670, %v1638, 0
      %v1693 = vsel %vm1670, %v1639, 0
      %v1696 = vsel %vm1670, %v1640, 0
      %v1699 = vsel %vm1670, %v1641, 0
      %v1702 = vsel %vm1670, %v1642, 0
      %v1705 = vsel %vm1670, %v1643, 0
      %v1708 = vsel %vm1670, %v1644, 0
      %v1711 = vsel %vm1670, %v1645, 0
      %v1714 = vsel %vm1670, %v1646, 0
      %v1717 = vsel %vm1670, %v1647, 0
      %vm1719 = vcmask 1041408
      %v1721 = vsel %vm1719, %v1667, 0
      %1723 = vmatprep.subr.bf16.mxu0 0
      %1724 = vmatpush1.bf16.msra.mxu0 %v1665
      %1725 = vmatprep.subr.bf16.mxu0 0
      %1726 = vmatpush1.bf16.msra.mxu0 %v1666
      %1727 = vmatprep.subr.bf16.mxu0 0
      %1728 = vmatpush1.bf16.msra.mxu0 %v1721
      %1729 = vmatprep.subr.bf16.mxu0 0
      %1730 = vmatpush1.bf16.msra.mxu0 0
      %1731 = vmatprep.subr.bf16.mxu0 0
      %1732 = vmatpush1.bf16.msra.mxu0 0
      %1733 = vmatprep.subr.bf16.mxu0 0
      %1734 = vmatpush1.bf16.msra.mxu0 0
      %1735 = vmatprep.subr.bf16.mxu0 0
      %1736 = vmatpush1.bf16.msra.mxu0 0
      %1737 = vmatprep.subr.bf16.mxu0 0
      %1738 = vmatpush1.bf16.msra.mxu0 0
      %1739 = vmatprep.subr.bf16.mxu0 0
      %1740 = vmatpush1.bf16.msra.mxu0 0
      %1741 = vmatprep.subr.bf16.mxu0 0
      %1742 = vmatpush1.bf16.msra.mxu0 0
      %1743 = vmatprep.subr.bf16.mxu0 0
      %1744 = vmatpush1.bf16.msra.mxu0 0
      %1745 = vmatprep.subr.bf16.mxu0 0
      %1746 = vmatpush1.bf16.msra.mxu0 0
      %1747 = vmatprep.subr.bf16.mxu0 0
      %1748 = vmatpush1.bf16.msra.mxu0 0
      %1749 = vmatprep.subr.bf16.mxu0 0
      %1750 = vmatpush1.bf16.msra.mxu0 0
      %1751 = vmatprep.subr.bf16.mxu0 0
      %1752 = vmatpush1.bf16.msra.mxu0 0
      %1753 = vmatprep.subr.bf16.mxu0 0
      %1754 = vmatpush1.bf16.msra.mxu0 0
      %1755 = vmatprep.mubr.bf16.mxu0 0
      %1756 = vmatmul.mubr.bf16.gmra.mrb[0].mxu0 %v1672
      %v1757 = vpop.f32.mrb[0].mxu0
      %v1758 = vadd.f32 %v1653, %v1757
      %v1759 = vpop.f32.mrb[0].mxu0
      %v1760 = vpop.f32.mrb[0].mxu0
      %v1761 = vadd.f32 %v1653, %v1760
      %v1762 = vpop.f32.mrb[0].mxu0
      %1763 = vmatprep.mubr.bf16.mxu0 0
      %1764 = vmatmul.mubr.bf16.gmra.mrb[0].mxu0 %v1675
      %v1765 = vpop.f32.mrb[0].mxu0
      %v1766 = vadd.f32 %v1653, %v1765
      %v1767 = vpop.f32.mrb[0].mxu0
      %v1768 = vpop.f32.mrb[0].mxu0
      %v1769 = vadd.f32 %v1653, %v1768
      %v1770 = vpop.f32.mrb[0].mxu0
      %1771 = vmatprep.mubr.bf16.mxu0 0
      %1772 = vmatmul.mubr.bf16.gmra.mrb[0].mxu0 %v1678
      %v1773 = vpop.f32.mrb[0].mxu0
      %v1774 = vadd.f32 %v1653, %v1773
      %v1775 = vpop.f32.mrb[0].mxu0
      %v1776 = vpop.f32.mrb[0].mxu0
      %v1777 = vadd.f32 %v1653, %v1776
      %v1778 = vpop.f32.mrb[0].mxu0
      %1779 = vmatprep.mubr.bf16.mxu0 0
      %1780 = vmatmul.mubr.bf16.gmra.mrb[0].mxu0 %v1681
      %v1781 = vpop.f32.mrb[0].mxu0
      %v1782 = vadd.f32 %v1653, %v1781
      %v1783 = vpop.f32.mrb[0].mxu0
      %v1784 = vpop.f32.mrb[0].mxu0
      %v1785 = vadd.f32 %v1653, %v1784
      %v1786 = vpop.f32.mrb[0].mxu0
      %1787 = vmatprep.mubr.bf16.mxu0 0
      %1788 = vmatmul.mubr.bf16.gmra.mrb[0].mxu0 %v1684
      %v1789 = vpop.f32.mrb[0].mxu0
      %v1790 = vadd.f32 %v1653, %v1789
      %v1791 = vpop.f32.mrb[0].mxu0
      %v1792 = vpop.f32.mrb[0].mxu0
      %v1793 = vadd.f32 %v1653, %v1792
      %v1794 = vpop.f32.mrb[0].mxu0
      %1795 = vmatprep.mubr.bf16.mxu0 0
      %1796 = vmatmul.mubr.bf16.gmra.mrb[0].mxu0 %v1687
      %v1797 = vpop.f32.mrb[0].mxu0
      %v1798 = vadd.f32 %v1653, %v1797
      %v1799 = vpop.f32.mrb[0].mxu0
      %v1800 = vpop.f32.mrb[0].mxu0
      %v1801 = vadd.f32 %v1653, %v1800
      %v1802 = vpop.f32.mrb[0].mxu0
      %1803 = vmatprep.mubr.bf16.mxu0 0
      %1804 = vmatmul.mubr.bf16.gmra.mrb[0].mxu0 %v1690
      %v1805 = vpop.f32.mrb[0].mxu0
      %v1806 = vadd.f32 %v1653, %v1805
      %v1807 = vpop.f32.mrb[0].mxu0
      %v1808 = vpop.f32.mrb[0].mxu0
      %v1809 = vadd.f32 %v1653, %v1808
      %v1810 = vpop.f32.mrb[0].mxu0
      %1811 = vmatprep.mubr.bf16.mxu0 0
      %1812 = vmatmul.mubr.bf16.gmra.mrb[0].mxu0 %v1693
      %v1813 = vpop.f32.mrb[0].mxu0
      %v1814 = vadd.f32 %v1653, %v1813
      %v1815 = vpop.f32.mrb[0].mxu0
      %v1816 = vpop.f32.mrb[0].mxu0
      %v1817 = vadd.f32 %v1653, %v1816
      %v1818 = vpop.f32.mrb[0].mxu0
      %1819 = vmatprep.mubr.bf16.mxu0 0
      %1820 = vmatmul.mubr.bf16.gmra.mrb[0].mxu0 %v1696
      %v1821 = vpop.f32.mrb[0].mxu0
      %v1822 = vadd.f32 %v1653, %v1821
      %v1823 = vpop.f32.mrb[0].mxu0
      %v1824 = vpop.f32.mrb[0].mxu0
      %v1825 = vadd.f32 %v1653, %v1824
      %v1826 = vpop.f32.mrb[0].mxu0
      %1827 = vmatprep.mubr.bf16.mxu0 0
      %1828 = vmatmul.mubr.bf16.gmra.mrb[0].mxu0 %v1699
      %v1829 = vpop.f32.mrb[0].mxu0
      %v1830 = vadd.f32 %v1653, %v1829
      %v1831 = vpop.f32.mrb[0].mxu0
      %v1832 = vpop.f32.mrb[0].mxu0
      %v1833 = vadd.f32 %v1653, %v1832
      %v1834 = vpop.f32.mrb[0].mxu0
      %1835 = vmatprep.mubr.bf16.mxu0 0
      %1836 = vmatmul.mubr.bf16.gmra.mrb[0].mxu0 %v1702
      %v1837 = vpop.f32.mrb[0].mxu0
      %v1838 = vadd.f32 %v1653, %v1837
      %v1839 = vpop.f32.mrb[0].mxu0
      %v1840 = vpop.f32.mrb[0].mxu0
      %v1841 = vadd.f32 %v1653, %v1840
      %v1842 = vpop.f32.mrb[0].mxu0
      %1843 = vmatprep.mubr.bf16.mxu0 0
      %1844 = vmatmul.mubr.bf16.gmra.mrb[0].mxu0 %v1705
      %v1845 = vpop.f32.mrb[0].mxu0
      %v1846 = vadd.f32 %v1653, %v1845
      %v1847 = vpop.f32.mrb[0].mxu0
      %v1848 = vpop.f32.mrb[0].mxu0
      %v1849 = vadd.f32 %v1653, %v1848
      %v1850 = vpop.f32.mrb[0].mxu0
      %1851 = vmatprep.mubr.bf16.mxu0 0
      %1852 = vmatmul.mubr.bf16.gmra.mrb[0].mxu0 %v1708
      %v1853 = vpop.f32.mrb[0].mxu0
      %v1854 = vadd.f32 %v1653, %v1853
      %v1855 = vpop.f32.mrb[0].mxu0
      %v1856 = vpop.f32.mrb[0].mxu0
      %v1857 = vadd.f32 %v1653, %v1856
      %v1858 = vpop.f32.mrb[0].mxu0
      %1859 = vmatprep.mubr.bf16.mxu0 0
      %1860 = vmatmul.mubr.bf16.gmra.mrb[0].mxu0 %v1711
      %v1861 = vpop.f32.mrb[0].mxu0
      %v1862 = vadd.f32 %v1653, %v1861
      %v1863 = vpop.f32.mrb[0].mxu0
      %v1864 = vpop.f32.mrb[0].mxu0
      %v1865 = vadd.f32 %v1653, %v1864
      %v1866 = vpop.f32.mrb[0].mxu0
      %1867 = vmatprep.mubr.bf16.mxu0 0
      %1868 = vmatmul.mubr.bf16.gmra.mrb[0].mxu0 %v1714
      %v1869 = vpop.f32.mrb[0].mxu0
      %v1870 = vadd.f32 %v1653, %v1869
      %v1871 = vpop.f32.mrb[0].mxu0
      %v1872 = vpop.f32.mrb[0].mxu0
      %v1873 = vadd.f32 %v1653, %v1872
      %v1874 = vpop.f32.mrb[0].mxu0
      %1875 = vmatprep.mubr.bf16.mxu0 0
      %1876 = vmatmul.mubr.bf16.gmra.mrb[0].mxu0 %v1717
      %v1877 = vpop.f32.mrb[0].mxu0
      %v1878 = vadd.f32 %v1653, %v1877
      %v1879 = vpop.f32.mrb[0].mxu0
      %v1880 = vpop.f32.mrb[0].mxu0
      %v1881 = vadd.f32 %v1653, %v1880
      %v1882 = vpop.f32.mrb[0].mxu0
      %1883 = vdwg.mxu0
      %v1884 = vmax.f32 %v1758, 0.0
      %v1885 = vmax.f32 %v1761, 0.0
      %v1886 = vmax.f32 %v1766, 0.0
      %v1887 = vmax.f32 %v1769, 0.0
      %v1888 = vmax.f32 %v1774, 0.0
      %v1889 = vmax.f32 %v1777, 0.0
      %v1890 = vmax.f32 %v1782, 0.0
      %v1891 = vmax.f32 %v1785, 0.0
      %v1892 = vmax.f32 %v1790, 0.0
      %v1893 = vmax.f32 %v1793, 0.0
      %v1894 = vmax.f32 %v1798, 0.0
      %v1895 = vmax.f32 %v1801, 0.0
      %v1896 = vmax.f32 %v1806, 0.0
      %v1897 = vmax.f32 %v1809, 0.0
      %v1898 = vmax.f32 %v1814, 0.0
      %v1899 = vmax.f32 %v1817, 0.0
      %v1900 = vmax.f32 %v1822, 0.0
      %v1901 = vmax.f32 %v1825, 0.0
      %v1902 = vmax.f32 %v1830, 0.0
      %v1903 = vmax.f32 %v1833, 0.0
      %v1904 = vmax.f32 %v1838, 0.0
      %v1905 = vmax.f32 %v1841, 0.0
      %v1906 = vmax.f32 %v1846, 0.0
      %v1907 = vmax.f32 %v1849, 0.0
      %v1908 = vmax.f32 %v1854, 0.0
      %v1909 = vmax.f32 %v1857, 0.0
      %v1910 = vmax.f32 %v1862, 0.0
      %v1911 = vmax.f32 %v1865, 0.0
      %v1912 = vmax.f32 %v1870, 0.0
      %v1913 = vmax.f32 %v1873, 0.0
      %v1914 = vmax.f32 %v1878, 0.0
      %v1915 = vmax.f32 %v1881, 0.0
      %s1916 = scalar_lea.vmem [#allocation3], 24
      %1917 = vst.msk [vmem:[%s1916 + $0x1] sm:$0xff] %vm272, %v1884
      %1918 = vst.msk [vmem:[%s1916 + $0x9] sm:$0xff] %vm272, %v1885
      %1919 = vst.msk [vmem:[%s1916 + $0x19] sm:$0xff] %vm272, %v1886
      %1920 = vst.msk [vmem:[%s1916 + $0x21] sm:$0xff] %vm272, %v1887
      %1921 = vst.msk [vmem:[%s1916 + $0x31] sm:$0xff] %vm272, %v1888
      %1922 = vst.msk [vmem:[%s1916 + $0x39] sm:$0xff] %vm272, %v1889
      %1923 = vst.msk [vmem:[%s1916 + $0x49] sm:$0xff] %vm272, %v1890
      %1924 = vst.msk [vmem:[%s1916 + $0x51] sm:$0xff] %vm272, %v1891
      %1925 = vst.msk [vmem:[%s1916 + $0x61] sm:$0xff] %vm272, %v1892
      %1926 = vst.msk [vmem:[%s1916 + $0x69] sm:$0xff] %vm272, %v1893
      %1927 = vst.msk [vmem:[%s1916 + $0x79] sm:$0xff] %vm272, %v1894
      %1928 = vst.msk [vmem:[%s1916 + $0x81] sm:$0xff] %vm272, %v1895
      %1929 = vst.msk [vmem:[%s1916 + $0x91] sm:$0xff] %vm272, %v1896
      %1930 = vst.msk [vmem:[%s1916 + $0x99] sm:$0xff] %vm272, %v1897
      %1931 = vst.msk [vmem:[%s1916 + $0xa9] sm:$0xff] %vm272, %v1898
      %1932 = vst.msk [vmem:[%s1916 + $0xb1] sm:$0xff] %vm272, %v1899
      %1933 = vst.msk [vmem:[%s1916 + $0xc1] sm:$0xff] %vm272, %v1900
      %1934 = vst.msk [vmem:[%s1916 + $0xc9] sm:$0xff] %vm272, %v1901
      %1935 = vst.msk [vmem:[%s1916 + $0xd9] sm:$0xff] %vm272, %v1902
      %1936 = vst.msk [vmem:[%s1916 + $0xe1] sm:$0xff] %vm272, %v1903
      %1937 = vst.msk [vmem:[%s1916 + $0xf1] sm:$0xff] %vm272, %v1904
      %1938 = vst.msk [vmem:[%s1916 + $0xf9] sm:$0xff] %vm272, %v1905
      %1939 = vst.msk [vmem:[%s1916 + $0x109] sm:$0xff] %vm272, %v1906
      %1940 = vst.msk [vmem:[%s1916 + $0x111] sm:$0xff] %vm272, %v1907
      %1941 = vst.msk [vmem:[%s1916 + $0x121] sm:$0xff] %vm272, %v1908
      %1942 = vst.msk [vmem:[%s1916 + $0x129] sm:$0xff] %vm272, %v1909
      %1943 = vst.msk [vmem:[%s1916 + $0x139] sm:$0xff] %vm272, %v1910
      %1944 = vst.msk [vmem:[%s1916 + $0x141] sm:$0xff] %vm272, %v1911
      %1945 = vst.msk [vmem:[%s1916 + $0x151] sm:$0xff] %vm272, %v1912
      %1946 = vst.msk [vmem:[%s1916 + $0x159] sm:$0xff] %vm272, %v1913
      %1947 = vst.msk [vmem:[%s1916 + $0x169] sm:$0xff] %vm272, %v1914
      %1948 = vst.msk [vmem:[%s1916 + $0x171] sm:$0xff] %vm272, %v1915
      %v1949 = vld [vmem:[%s3] sm:$0xf]
      %v1950 = vld [vmem:[%s3 + $0x4] sm:$0xf]
      %v1951 = vld [vmem:[%s3 + $0x8] sm:$0xf]
      %v1952 = vld [vmem:[%s3 + $0xc] sm:$0xf]
      %v1953 = vld [vmem:[%s3 + $0x10] sm:$0xf]
      %v1954 = vld [vmem:[%s3 + $0x14] sm:$0xf]
      %v1955 = vld [vmem:[%s3 + $0x18] sm:$0xf]
      %v1956 = vld [vmem:[%s3 + $0x1c] sm:$0xf]
      %v1957 = vld [vmem:[%s3 + $0x20] sm:$0xf]
      %v1958 = vld [vmem:[#allocation3] sm:$0xff]
      %v1959 = vld [vmem:[#allocation3 + $0x8] sm:$0xff]
      %v1960 = vld [vmem:[#allocation3 + $0x18] sm:$0xff]
      %v1961 = vld [vmem:[#allocation3 + $0x20] sm:$0xff]
      %v1962 = vld [vmem:[#allocation3 + $0x30] sm:$0xff]
      %v1963 = vld [vmem:[#allocation3 + $0x38] sm:$0xff]
      %v1964 = vld [vmem:[#allocation3 + $0x48] sm:$0xff]
      %v1965 = vld [vmem:[#allocation3 + $0x50] sm:$0xff]
      %v1966 = vld [vmem:[#allocation3 + $0x60] sm:$0xff]
      %v1967 = vld [vmem:[#allocation3 + $0x68] sm:$0xff]
      %v1968 = vld [vmem:[#allocation3 + $0x78] sm:$0xff]
      %v1969 = vld [vmem:[#allocation3 + $0x80] sm:$0xff]
      %v1970 = vld [vmem:[#allocation3 + $0x90] sm:$0xff]
      %v1971 = vld [vmem:[#allocation3 + $0x98] sm:$0xff]
      %v1972 = vld [vmem:[#allocation3 + $0xa8] sm:$0xff]
      %v1973 = vld [vmem:[#allocation3 + $0xb0] sm:$0xff]
      %v1974 = vld [vmem:[#allocation3 + $0xc0] sm:$0xff]
      %v1975 = vld [vmem:[#allocation3 + $0xc8] sm:$0xff]
      %v1976 = vld [vmem:[#allocation3 + $0xd8] sm:$0xff]
      %v1977 = vld [vmem:[#allocation3 + $0xe0] sm:$0xff]
      %v1978 = vld [vmem:[#allocation3 + $0xf0] sm:$0xff]
      %v1979 = vld [vmem:[#allocation3 + $0xf8] sm:$0xff]
      %v1980 = vld [vmem:[#allocation3 + $0x108] sm:$0xff]
      %v1981 = vld [vmem:[#allocation3 + $0x110] sm:$0xff]
      %v1982 = vld [vmem:[#allocation3 + $0x120] sm:$0xff]
      %v1983 = vld [vmem:[#allocation3 + $0x128] sm:$0xff]
      %v1984 = vld [vmem:[#allocation3 + $0x138] sm:$0xff]
      %v1985 = vld [vmem:[#allocation3 + $0x140] sm:$0xff]
      %v1986 = vld [vmem:[#allocation3 + $0x150] sm:$0xff]
      %v1987 = vld [vmem:[#allocation3 + $0x158] sm:$0xff]
      %v1988 = vld [vmem:[#allocation3 + $0x168] sm:$0xff]
      %v1989 = vld [vmem:[#allocation3 + $0x170] sm:$0xff]
      %v1990 = vld [vmem:[#allocation3 + $0x180] sm:$0xff]
      %v1991 = vld [vmem:[#allocation3 + $0x188] sm:$0xff]
      %v1992 = vld [vmem:[#allocation3 + $0x198] sm:$0xff]
      %v1993 = vld [vmem:[#allocation3 + $0x1a0] sm:$0xff]
      %v1994 = vld [vmem:[#allocation3 + $0x1] sm:$0xff]
      %v1995 = vld [vmem:[#allocation3 + $0x9] sm:$0xff]
      %v1996 = vld [vmem:[#allocation3 + $0x19] sm:$0xff]
      %v1997 = vld [vmem:[#allocation3 + $0x21] sm:$0xff]
      %v1998 = vld [vmem:[#allocation3 + $0x31] sm:$0xff]
      %v1999 = vld [vmem:[#allocation3 + $0x39] sm:$0xff]
      %v2000 = vld [vmem:[#allocation3 + $0x49] sm:$0xff]
      %v2001 = vld [vmem:[#allocation3 + $0x51] sm:$0xff]
      %v2002 = vld [vmem:[#allocation3 + $0x61] sm:$0xff]
      %v2003 = vld [vmem:[#allocation3 + $0x69] sm:$0xff]
      %v2004 = vld [vmem:[#allocation3 + $0x79] sm:$0xff]
      %v2005 = vld [vmem:[#allocation3 + $0x81] sm:$0xff]
      %v2006 = vld [vmem:[#allocation3 + $0x91] sm:$0xff]
      %v2007 = vld [vmem:[#allocation3 + $0x99] sm:$0xff]
      %v2008 = vld [vmem:[#allocation3 + $0xa9] sm:$0xff]
      %v2009 = vld [vmem:[#allocation3 + $0xb1] sm:$0xff]
      %v2010 = vld [vmem:[#allocation3 + $0xc1] sm:$0xff]
      %v2011 = vld [vmem:[#allocation3 + $0xc9] sm:$0xff]
      %v2012 = vld [vmem:[#allocation3 + $0xd9] sm:$0xff]
      %v2013 = vld [vmem:[#allocation3 + $0xe1] sm:$0xff]
      %v2014 = vld [vmem:[#allocation3 + $0xf1] sm:$0xff]
      %v2015 = vld [vmem:[#allocation3 + $0xf9] sm:$0xff]
      %v2016 = vld [vmem:[#allocation3 + $0x109] sm:$0xff]
      %v2017 = vld [vmem:[#allocation3 + $0x111] sm:$0xff]
      %v2018 = vld [vmem:[#allocation3 + $0x121] sm:$0xff]
      %v2019 = vld [vmem:[#allocation3 + $0x129] sm:$0xff]
      %v2020 = vld [vmem:[#allocation3 + $0x139] sm:$0xff]
      %v2021 = vld [vmem:[#allocation3 + $0x141] sm:$0xff]
      %v2022 = vld [vmem:[#allocation3 + $0x151] sm:$0xff]
      %v2023 = vld [vmem:[#allocation3 + $0x159] sm:$0xff]
      %v2024 = vld [vmem:[#allocation3 + $0x169] sm:$0xff]
      %v2025 = vld [vmem:[#allocation3 + $0x171] sm:$0xff]
      %v2026 = vld [vmem:[#allocation3 + $0x181] sm:$0xff]
      %v2027 = vld [vmem:[#allocation3 + $0x189] sm:$0xff]
      %v2028 = vld [vmem:[#allocation3 + $0x199] sm:$0xff]
      %v2029 = vld [vmem:[#allocation3 + $0x1a1] sm:$0xff]
      %v2030 = vld [vmem:[#allocation3 + $0x2] sm:$0xff]
      %v2031 = vld [vmem:[#allocation3 + $0xa] sm:$0xff]
      %v2032 = vld [vmem:[#allocation3 + $0x1a] sm:$0xff]
      %v2033 = vld [vmem:[#allocation3 + $0x22] sm:$0xff]
      %v2034 = vld [vmem:[#allocation3 + $0x32] sm:$0xff]
      %v2035 = vld [vmem:[#allocation3 + $0x3a] sm:$0xff]
      %v2036 = vld [vmem:[#allocation3 + $0x4a] sm:$0xff]
      %v2037 = vld [vmem:[#allocation3 + $0x52] sm:$0xff]
      %v2038 = vld [vmem:[#allocation3 + $0x62] sm:$0xff]
      %v2039 = vld [vmem:[#allocation3 + $0x6a] sm:$0xff]
      %v2040 = vld [vmem:[#allocation3 + $0x7a] sm:$0xff]
      %v2041 = vld [vmem:[#allocation3 + $0x82] sm:$0xff]
      %v2042 = vld [vmem:[#allocation3 + $0x92] sm:$0xff]
      %v2043 = vld [vmem:[#allocation3 + $0x9a] sm:$0xff]
      %v2044 = vld [vmem:[#allocation3 + $0xaa] sm:$0xff]
      %v2045 = vld [vmem:[#allocation3 + $0xb2] sm:$0xff]
      %v2046 = vld [vmem:[#allocation3 + $0xc2] sm:$0xff]
      %v2047 = vld [vmem:[#allocation3 + $0xca] sm:$0xff]
      %v2048 = vld [vmem:[#allocation3 + $0xda] sm:$0xff]
      %v2049 = vld [vmem:[#allocation3 + $0xe2] sm:$0xff]
      %v2050 = vld [vmem:[#allocation3 + $0xf2] sm:$0xff]
      %v2051 = vld [vmem:[#allocation3 + $0xfa] sm:$0xff]
      %v2052 = vld [vmem:[#allocation3 + $0x10a] sm:$0xff]
      %v2053 = vld [vmem:[#allocation3 + $0x112] sm:$0xff]
      %v2054 = vld [vmem:[#allocation3 + $0x122] sm:$0xff]
      %v2055 = vld [vmem:[#allocation3 + $0x12a] sm:$0xff]
      %v2056 = vld [vmem:[#allocation3 + $0x13a] sm:$0xff]
      %v2057 = vld [vmem:[#allocation3 + $0x142] sm:$0xff]
      %v2058 = vld [vmem:[#allocation3 + $0x152] sm:$0xff]
      %v2059 = vld [vmem:[#allocation3 + $0x15a] sm:$0xff]
      %v2060 = vld [vmem:[#allocation3 + $0x16a] sm:$0xff]
      %v2061 = vld [vmem:[#allocation3 + $0x172] sm:$0xff]
      %v2062 = vld [vmem:[#allocation3 + $0x182] sm:$0xff]
      %v2063 = vld [vmem:[#allocation3 + $0x18a] sm:$0xff]
      %v2064 = vld [vmem:[#allocation3 + $0x19a] sm:$0xff]
      %v2065 = vld [vmem:[#allocation3 + $0x1a2] sm:$0xff]
      %2098 = vrot.lane.b32.xlu0 %v1994, 8
      %v2099 = vpop.permute.xlu0 %2098
      %2100 = vrot.lane.b32.xlu0 %v1995, 8
      %v2101 = vpop.permute.xlu0 %2100
      %2102 = vrot.lane.b32.xlu0 %v1996, 8
      %v2103 = vpop.permute.xlu0 %2102
      %2104 = vrot.lane.b32.xlu0 %v1997, 8
      %v2105 = vpop.permute.xlu0 %2104
      %2106 = vrot.lane.b32.xlu0 %v1998, 8
      %v2107 = vpop.permute.xlu0 %2106
      %2108 = vrot.lane.b32.xlu0 %v1999, 8
      %v2109 = vpop.permute.xlu0 %2108
      %2110 = vrot.lane.b32.xlu0 %v2000, 8
      %v2111 = vpop.permute.xlu0 %2110
      %2112 = vrot.lane.b32.xlu0 %v2001, 8
      %v2113 = vpop.permute.xlu0 %2112
      %2114 = vrot.lane.b32.xlu0 %v2002, 8
      %v2115 = vpop.permute.xlu0 %2114
      %2116 = vrot.lane.b32.xlu0 %v2003, 8
      %v2117 = vpop.permute.xlu0 %2116
      %2118 = vrot.lane.b32.xlu0 %v2004, 8
      %v2119 = vpop.permute.xlu0 %2118
      %2120 = vrot.lane.b32.xlu0 %v2005, 8
      %v2121 = vpop.permute.xlu0 %2120
      %2122 = vrot.lane.b32.xlu0 %v2006, 8
      %v2123 = vpop.permute.xlu0 %2122
      %2124 = vrot.lane.b32.xlu0 %v2007, 8
      %v2125 = vpop.permute.xlu0 %2124
      %2126 = vrot.lane.b32.xlu0 %v2008, 8
      %v2127 = vpop.permute.xlu0 %2126
      %2128 = vrot.lane.b32.xlu0 %v2009, 8
      %v2129 = vpop.permute.xlu0 %2128
      %2130 = vrot.lane.b32.xlu0 %v2010, 8
      %v2131 = vpop.permute.xlu0 %2130
      %2132 = vrot.lane.b32.xlu0 %v2011, 8
      %v2133 = vpop.permute.xlu0 %2132
      %2134 = vrot.lane.b32.xlu0 %v2012, 8
      %v2135 = vpop.permute.xlu0 %2134
      %2136 = vrot.lane.b32.xlu0 %v2013, 8
      %v2137 = vpop.permute.xlu0 %2136
      %2138 = vrot.lane.b32.xlu0 %v2014, 8
      %v2139 = vpop.permute.xlu0 %2138
      %2140 = vrot.lane.b32.xlu0 %v2015, 8
      %v2141 = vpop.permute.xlu0 %2140
      %2142 = vrot.lane.b32.xlu0 %v2016, 8
      %v2143 = vpop.permute.xlu0 %2142
      %2144 = vrot.lane.b32.xlu0 %v2017, 8
      %v2145 = vpop.permute.xlu0 %2144
      %2146 = vrot.lane.b32.xlu0 %v2018, 8
      %v2147 = vpop.permute.xlu0 %2146
      %2148 = vrot.lane.b32.xlu0 %v2019, 8
      %v2149 = vpop.permute.xlu0 %2148
      %2150 = vrot.lane.b32.xlu0 %v2020, 8
      %v2151 = vpop.permute.xlu0 %2150
      %2152 = vrot.lane.b32.xlu0 %v2021, 8
      %v2153 = vpop.permute.xlu0 %2152
      %2154 = vrot.lane.b32.xlu0 %v2022, 8
      %v2155 = vpop.permute.xlu0 %2154
      %2156 = vrot.lane.b32.xlu0 %v2023, 8
      %v2157 = vpop.permute.xlu0 %2156
      %2158 = vrot.lane.b32.xlu0 %v2024, 8
      %v2159 = vpop.permute.xlu0 %2158
      %2160 = vrot.lane.b32.xlu0 %v2025, 8
      %v2161 = vpop.permute.xlu0 %2160
      %2226 = vrot.lane.b32.xlu0 %v2030, 16
      %v2227 = vpop.permute.xlu0 %2226
      %2228 = vrot.lane.b32.xlu0 %v2031, 16
      %v2229 = vpop.permute.xlu0 %2228
      %2230 = vrot.lane.b32.xlu0 %v2032, 16
      %v2231 = vpop.permute.xlu0 %2230
      %2232 = vrot.lane.b32.xlu0 %v2033, 16
      %v2233 = vpop.permute.xlu0 %2232
      %2234 = vrot.lane.b32.xlu0 %v2034, 16
      %v2235 = vpop.permute.xlu0 %2234
      %2236 = vrot.lane.b32.xlu0 %v2035, 16
      %v2237 = vpop.permute.xlu0 %2236
      %2238 = vrot.lane.b32.xlu0 %v2036, 16
      %v2239 = vpop.permute.xlu0 %2238
      %2240 = vrot.lane.b32.xlu0 %v2037, 16
      %v2241 = vpop.permute.xlu0 %2240
      %2242 = vrot.lane.b32.xlu0 %v2038, 16
      %v2243 = vpop.permute.xlu0 %2242
      %2244 = vrot.lane.b32.xlu0 %v2039, 16
      %v2245 = vpop.permute.xlu0 %2244
      %2246 = vrot.lane.b32.xlu0 %v2040, 16
      %v2247 = vpop.permute.xlu0 %2246
      %2248 = vrot.lane.b32.xlu0 %v2041, 16
      %v2249 = vpop.permute.xlu0 %2248
      %2250 = vrot.lane.b32.xlu0 %v2042, 16
      %v2251 = vpop.permute.xlu0 %2250
      %2252 = vrot.lane.b32.xlu0 %v2043, 16
      %v2253 = vpop.permute.xlu0 %2252
      %2254 = vrot.lane.b32.xlu0 %v2044, 16
      %v2255 = vpop.permute.xlu0 %2254
      %2256 = vrot.lane.b32.xlu0 %v2045, 16
      %v2257 = vpop.permute.xlu0 %2256
      %2258 = vrot.lane.b32.xlu0 %v2046, 16
      %v2259 = vpop.permute.xlu0 %2258
      %2260 = vrot.lane.b32.xlu0 %v2047, 16
      %v2261 = vpop.permute.xlu0 %2260
      %2262 = vrot.lane.b32.xlu0 %v2048, 16
      %v2263 = vpop.permute.xlu0 %2262
      %2264 = vrot.lane.b32.xlu0 %v2049, 16
      %v2265 = vpop.permute.xlu0 %2264
      %2266 = vrot.lane.b32.xlu0 %v2050, 16
      %v2267 = vpop.permute.xlu0 %2266
      %2268 = vrot.lane.b32.xlu0 %v2051, 16
      %v2269 = vpop.permute.xlu0 %2268
      %2270 = vrot.lane.b32.xlu0 %v2052, 16
      %v2271 = vpop.permute.xlu0 %2270
      %2272 = vrot.lane.b32.xlu0 %v2053, 16
      %v2273 = vpop.permute.xlu0 %2272
      %2274 = vrot.lane.b32.xlu0 %v2054, 16
      %v2275 = vpop.permute.xlu0 %2274
      %2276 = vrot.lane.b32.xlu0 %v2055, 16
      %v2277 = vpop.permute.xlu0 %2276
      %2278 = vrot.lane.b32.xlu0 %v2056, 16
      %v2279 = vpop.permute.xlu0 %2278
      %2280 = vrot.lane.b32.xlu0 %v2057, 16
      %v2281 = vpop.permute.xlu0 %2280
      %2282 = vrot.lane.b32.xlu0 %v2058, 16
      %v2283 = vpop.permute.xlu0 %2282
      %2284 = vrot.lane.b32.xlu0 %v2059, 16
      %v2285 = vpop.permute.xlu0 %2284
      %2286 = vrot.lane.b32.xlu0 %v2060, 16
      %v2287 = vpop.permute.xlu0 %2286
      %2288 = vrot.lane.b32.xlu0 %v2061, 16
      %v2289 = vpop.permute.xlu0 %2288
      %2354 = vrot.lane.b32.xlu0 %v1960, 24
      %v2355 = vpop.permute.xlu0 %2354
      %2356 = vrot.lane.b32.xlu0 %v1961, 24
      %v2357 = vpop.permute.xlu0 %2356
      %2358 = vrot.lane.b32.xlu0 %v1962, 24
      %v2359 = vpop.permute.xlu0 %2358
      %2360 = vrot.lane.b32.xlu0 %v1963, 24
      %v2361 = vpop.permute.xlu0 %2360
      %2362 = vrot.lane.b32.xlu0 %v1964, 24
      %v2363 = vpop.permute.xlu0 %2362
      %2364 = vrot.lane.b32.xlu0 %v1965, 24
      %v2365 = vpop.permute.xlu0 %2364
      %2366 = vrot.lane.b32.xlu0 %v1966, 24
      %v2367 = vpop.permute.xlu0 %2366
      %2368 = vrot.lane.b32.xlu0 %v1967, 24
      %v2369 = vpop.permute.xlu0 %2368
      %2370 = vrot.lane.b32.xlu0 %v1968, 24
      %v2371 = vpop.permute.xlu0 %2370
      %2372 = vrot.lane.b32.xlu0 %v1969, 24
      %v2373 = vpop.permute.xlu0 %2372
      %2374 = vrot.lane.b32.xlu0 %v1970, 24
      %v2375 = vpop.permute.xlu0 %2374
      %2376 = vrot.lane.b32.xlu0 %v1971, 24
      %v2377 = vpop.permute.xlu0 %2376
      %2378 = vrot.lane.b32.xlu0 %v1972, 24
      %v2379 = vpop.permute.xlu0 %2378
      %2380 = vrot.lane.b32.xlu0 %v1973, 24
      %v2381 = vpop.permute.xlu0 %2380
      %2382 = vrot.lane.b32.xlu0 %v1974, 24
      %v2383 = vpop.permute.xlu0 %2382
      %2384 = vrot.lane.b32.xlu0 %v1975, 24
      %v2385 = vpop.permute.xlu0 %2384
      %2386 = vrot.lane.b32.xlu0 %v1976, 24
      %v2387 = vpop.permute.xlu0 %2386
      %2388 = vrot.lane.b32.xlu0 %v1977, 24
      %v2389 = vpop.permute.xlu0 %2388
      %2390 = vrot.lane.b32.xlu0 %v1978, 24
      %v2391 = vpop.permute.xlu0 %2390
      %2392 = vrot.lane.b32.xlu0 %v1979, 24
      %v2393 = vpop.permute.xlu0 %2392
      %2394 = vrot.lane.b32.xlu0 %v1980, 24
      %v2395 = vpop.permute.xlu0 %2394
      %2396 = vrot.lane.b32.xlu0 %v1981, 24
      %v2397 = vpop.permute.xlu0 %2396
      %2398 = vrot.lane.b32.xlu0 %v1982, 24
      %v2399 = vpop.permute.xlu0 %2398
      %2400 = vrot.lane.b32.xlu0 %v1983, 24
      %v2401 = vpop.permute.xlu0 %2400
      %2402 = vrot.lane.b32.xlu0 %v1984, 24
      %v2403 = vpop.permute.xlu0 %2402
      %2404 = vrot.lane.b32.xlu0 %v1985, 24
      %v2405 = vpop.permute.xlu0 %2404
      %2406 = vrot.lane.b32.xlu0 %v1986, 24
      %v2407 = vpop.permute.xlu0 %2406
      %2408 = vrot.lane.b32.xlu0 %v1987, 24
      %v2409 = vpop.permute.xlu0 %2408
      %2410 = vrot.lane.b32.xlu0 %v1988, 24
      %v2411 = vpop.permute.xlu0 %2410
      %2412 = vrot.lane.b32.xlu0 %v1989, 24
      %v2413 = vpop.permute.xlu0 %2412
      %2414 = vrot.lane.b32.xlu0 %v1990, 24
      %v2415 = vpop.permute.xlu0 %2414
      %2416 = vrot.lane.b32.xlu0 %v1991, 24
      %v2417 = vpop.permute.xlu0 %2416
      %2452 = vrot.lane.b32.xlu0 %v1996, 32
      %v2453 = vpop.permute.xlu0 %2452
      %2454 = vrot.lane.b32.xlu0 %v1997, 32
      %v2455 = vpop.permute.xlu0 %2454
      %2456 = vrot.lane.b32.xlu0 %v1998, 32
      %v2457 = vpop.permute.xlu0 %2456
      %2458 = vrot.lane.b32.xlu0 %v1999, 32
      %v2459 = vpop.permute.xlu0 %2458
      %2460 = vrot.lane.b32.xlu0 %v2000, 32
      %v2461 = vpop.permute.xlu0 %2460
      %2462 = vrot.lane.b32.xlu0 %v2001, 32
      %v2463 = vpop.permute.xlu0 %2462
      %2464 = vrot.lane.b32.xlu0 %v2002, 32
      %v2465 = vpop.permute.xlu0 %2464
      %2466 = vrot.lane.b32.xlu0 %v2003, 32
      %v2467 = vpop.permute.xlu0 %2466
      %2468 = vrot.lane.b32.xlu0 %v2004, 32
      %v2469 = vpop.permute.xlu0 %2468
      %2470 = vrot.lane.b32.xlu0 %v2005, 32
      %v2471 = vpop.permute.xlu0 %2470
      %2472 = vrot.lane.b32.xlu0 %v2006, 32
      %v2473 = vpop.permute.xlu0 %2472
      %2474 = vrot.lane.b32.xlu0 %v2007, 32
      %v2475 = vpop.permute.xlu0 %2474
      %2476 = vrot.lane.b32.xlu0 %v2008, 32
      %v2477 = vpop.permute.xlu0 %2476
      %2478 = vrot.lane.b32.xlu0 %v2009, 32
      %v2479 = vpop.permute.xlu0 %2478
      %2480 = vrot.lane.b32.xlu0 %v2010, 32
      %v2481 = vpop.permute.xlu0 %2480
      %2482 = vrot.lane.b32.xlu0 %v2011, 32
      %v2483 = vpop.permute.xlu0 %2482
      %2484 = vrot.lane.b32.xlu0 %v2012, 32
      %v2485 = vpop.permute.xlu0 %2484
      %2486 = vrot.lane.b32.xlu0 %v2013, 32
      %v2487 = vpop.permute.xlu0 %2486
      %2488 = vrot.lane.b32.xlu0 %v2014, 32
      %v2489 = vpop.permute.xlu0 %2488
      %2490 = vrot.lane.b32.xlu0 %v2015, 32
      %v2491 = vpop.permute.xlu0 %2490
      %2492 = vrot.lane.b32.xlu0 %v2016, 32
      %v2493 = vpop.permute.xlu0 %2492
      %2494 = vrot.lane.b32.xlu0 %v2017, 32
      %v2495 = vpop.permute.xlu0 %2494
      %2496 = vrot.lane.b32.xlu0 %v2018, 32
      %v2497 = vpop.permute.xlu0 %2496
      %2498 = vrot.lane.b32.xlu0 %v2019, 32
      %v2499 = vpop.permute.xlu0 %2498
      %2500 = vrot.lane.b32.xlu0 %v2020, 32
      %v2501 = vpop.permute.xlu0 %2500
      %2502 = vrot.lane.b32.xlu0 %v2021, 32
      %v2503 = vpop.permute.xlu0 %2502
      %2504 = vrot.lane.b32.xlu0 %v2022, 32
      %v2505 = vpop.permute.xlu0 %2504
      %2506 = vrot.lane.b32.xlu0 %v2023, 32
      %v2507 = vpop.permute.xlu0 %2506
      %2508 = vrot.lane.b32.xlu0 %v2024, 32
      %v2509 = vpop.permute.xlu0 %2508
      %2510 = vrot.lane.b32.xlu0 %v2025, 32
      %v2511 = vpop.permute.xlu0 %2510
      %2512 = vrot.lane.b32.xlu0 %v2026, 32
      %v2513 = vpop.permute.xlu0 %2512
      %2514 = vrot.lane.b32.xlu0 %v2027, 32
      %v2515 = vpop.permute.xlu0 %2514
      %2550 = vrot.lane.b32.xlu0 %v2032, 40
      %v2551 = vpop.permute.xlu0 %2550
      %2552 = vrot.lane.b32.xlu0 %v2033, 40
      %v2553 = vpop.permute.xlu0 %2552
      %2554 = vrot.lane.b32.xlu0 %v2034, 40
      %v2555 = vpop.permute.xlu0 %2554
      %2556 = vrot.lane.b32.xlu0 %v2035, 40
      %v2557 = vpop.permute.xlu0 %2556
      %2558 = vrot.lane.b32.xlu0 %v2036, 40
      %v2559 = vpop.permute.xlu0 %2558
      %2560 = vrot.lane.b32.xlu0 %v2037, 40
      %v2561 = vpop.permute.xlu0 %2560
      %2562 = vrot.lane.b32.xlu0 %v2038, 40
      %v2563 = vpop.permute.xlu0 %2562
      %2564 = vrot.lane.b32.xlu0 %v2039, 40
      %v2565 = vpop.permute.xlu0 %2564
      %2566 = vrot.lane.b32.xlu0 %v2040, 40
      %v2567 = vpop.permute.xlu0 %2566
      %2568 = vrot.lane.b32.xlu0 %v2041, 40
      %v2569 = vpop.permute.xlu0 %2568
      %2570 = vrot.lane.b32.xlu0 %v2042, 40
      %v2571 = vpop.permute.xlu0 %2570
      %2572 = vrot.lane.b32.xlu0 %v2043, 40
      %v2573 = vpop.permute.xlu0 %2572
      %2574 = vrot.lane.b32.xlu0 %v2044, 40
      %v2575 = vpop.permute.xlu0 %2574
      %2576 = vrot.lane.b32.xlu0 %v2045, 40
      %v2577 = vpop.permute.xlu0 %2576
      %2578 = vrot.lane.b32.xlu0 %v2046, 40
      %v2579 = vpop.permute.xlu0 %2578
      %2580 = vrot.lane.b32.xlu0 %v2047, 40
      %v2581 = vpop.permute.xlu0 %2580
      %2582 = vrot.lane.b32.xlu0 %v2048, 40
      %v2583 = vpop.permute.xlu0 %2582
      %2584 = vrot.lane.b32.xlu0 %v2049, 40
      %v2585 = vpop.permute.xlu0 %2584
      %2586 = vrot.lane.b32.xlu0 %v2050, 40
      %v2587 = vpop.permute.xlu0 %2586
      %2588 = vrot.lane.b32.xlu0 %v2051, 40
      %v2589 = vpop.permute.xlu0 %2588
      %2590 = vrot.lane.b32.xlu0 %v2052, 40
      %v2591 = vpop.permute.xlu0 %2590
      %2592 = vrot.lane.b32.xlu0 %v2053, 40
      %v2593 = vpop.permute.xlu0 %2592
      %2594 = vrot.lane.b32.xlu0 %v2054, 40
      %v2595 = vpop.permute.xlu0 %2594
      %2596 = vrot.lane.b32.xlu0 %v2055, 40
      %v2597 = vpop.permute.xlu0 %2596
      %2598 = vrot.lane.b32.xlu0 %v2056, 40
      %v2599 = vpop.permute.xlu0 %2598
      %2600 = vrot.lane.b32.xlu0 %v2057, 40
      %v2601 = vpop.permute.xlu0 %2600
      %2602 = vrot.lane.b32.xlu0 %v2058, 40
      %v2603 = vpop.permute.xlu0 %2602
      %2604 = vrot.lane.b32.xlu0 %v2059, 40
      %v2605 = vpop.permute.xlu0 %2604
      %2606 = vrot.lane.b32.xlu0 %v2060, 40
      %v2607 = vpop.permute.xlu0 %2606
      %2608 = vrot.lane.b32.xlu0 %v2061, 40
      %v2609 = vpop.permute.xlu0 %2608
      %2610 = vrot.lane.b32.xlu0 %v2062, 40
      %v2611 = vpop.permute.xlu0 %2610
      %2612 = vrot.lane.b32.xlu0 %v2063, 40
      %v2613 = vpop.permute.xlu0 %2612
      %2648 = vrot.lane.b32.xlu0 %v1962, 48
      %v2649 = vpop.permute.xlu0 %2648
      %2650 = vrot.lane.b32.xlu0 %v1963, 48
      %v2651 = vpop.permute.xlu0 %2650
      %2652 = vrot.lane.b32.xlu0 %v1964, 48
      %v2653 = vpop.permute.xlu0 %2652
      %2654 = vrot.lane.b32.xlu0 %v1965, 48
      %v2655 = vpop.permute.xlu0 %2654
      %2656 = vrot.lane.b32.xlu0 %v1966, 48
      %v2657 = vpop.permute.xlu0 %2656
      %2658 = vrot.lane.b32.xlu0 %v1967, 48
      %v2659 = vpop.permute.xlu0 %2658
      %2660 = vrot.lane.b32.xlu0 %v1968, 48
      %v2661 = vpop.permute.xlu0 %2660
      %2662 = vrot.lane.b32.xlu0 %v1969, 48
      %v2663 = vpop.permute.xlu0 %2662
      %2664 = vrot.lane.b32.xlu0 %v1970, 48
      %v2665 = vpop.permute.xlu0 %2664
      %2666 = vrot.lane.b32.xlu0 %v1971, 48
      %v2667 = vpop.permute.xlu0 %2666
      %2668 = vrot.lane.b32.xlu0 %v1972, 48
      %v2669 = vpop.permute.xlu0 %2668
      %2670 = vrot.lane.b32.xlu0 %v1973, 48
      %v2671 = vpop.permute.xlu0 %2670
      %2672 = vrot.lane.b32.xlu0 %v1974, 48
      %v2673 = vpop.permute.xlu0 %2672
      %2674 = vrot.lane.b32.xlu0 %v1975, 48
      %v2675 = vpop.permute.xlu0 %2674
      %2676 = vrot.lane.b32.xlu0 %v1976, 48
      %v2677 = vpop.permute.xlu0 %2676
      %2678 = vrot.lane.b32.xlu0 %v1977, 48
      %v2679 = vpop.permute.xlu0 %2678
      %2680 = vrot.lane.b32.xlu0 %v1978, 48
      %v2681 = vpop.permute.xlu0 %2680
      %2682 = vrot.lane.b32.xlu0 %v1979, 48
      %v2683 = vpop.permute.xlu0 %2682
      %2684 = vrot.lane.b32.xlu0 %v1980, 48
      %v2685 = vpop.permute.xlu0 %2684
      %2686 = vrot.lane.b32.xlu0 %v1981, 48
      %v2687 = vpop.permute.xlu0 %2686
      %2688 = vrot.lane.b32.xlu0 %v1982, 48
      %v2689 = vpop.permute.xlu0 %2688
      %2690 = vrot.lane.b32.xlu0 %v1983, 48
      %v2691 = vpop.permute.xlu0 %2690
      %2692 = vrot.lane.b32.xlu0 %v1984, 48
      %v2693 = vpop.permute.xlu0 %2692
      %2694 = vrot.lane.b32.xlu0 %v1985, 48
      %v2695 = vpop.permute.xlu0 %2694
      %2696 = vrot.lane.b32.xlu0 %v1986, 48
      %v2697 = vpop.permute.xlu0 %2696
      %2698 = vrot.lane.b32.xlu0 %v1987, 48
      %v2699 = vpop.permute.xlu0 %2698
      %2700 = vrot.lane.b32.xlu0 %v1988, 48
      %v2701 = vpop.permute.xlu0 %2700
      %2702 = vrot.lane.b32.xlu0 %v1989, 48
      %v2703 = vpop.permute.xlu0 %2702
      %2704 = vrot.lane.b32.xlu0 %v1990, 48
      %v2705 = vpop.permute.xlu0 %2704
      %2706 = vrot.lane.b32.xlu0 %v1991, 48
      %v2707 = vpop.permute.xlu0 %2706
      %2708 = vrot.lane.b32.xlu0 %v1992, 48
      %v2709 = vpop.permute.xlu0 %2708
      %2710 = vrot.lane.b32.xlu0 %v1993, 48
      %v2711 = vpop.permute.xlu0 %2710
      %2746 = vrot.lane.b32.xlu0 %v1998, 56
      %v2747 = vpop.permute.xlu0 %2746
      %2748 = vrot.lane.b32.xlu0 %v1999, 56
      %v2749 = vpop.permute.xlu0 %2748
      %2750 = vrot.lane.b32.xlu0 %v2000, 56
      %v2751 = vpop.permute.xlu0 %2750
      %2752 = vrot.lane.b32.xlu0 %v2001, 56
      %v2753 = vpop.permute.xlu0 %2752
      %2754 = vrot.lane.b32.xlu0 %v2002, 56
      %v2755 = vpop.permute.xlu0 %2754
      %2756 = vrot.lane.b32.xlu0 %v2003, 56
      %v2757 = vpop.permute.xlu0 %2756
      %2758 = vrot.lane.b32.xlu0 %v2004, 56
      %v2759 = vpop.permute.xlu0 %2758
      %2760 = vrot.lane.b32.xlu0 %v2005, 56
      %v2761 = vpop.permute.xlu0 %2760
      %2762 = vrot.lane.b32.xlu0 %v2006, 56
      %v2763 = vpop.permute.xlu0 %2762
      %2764 = vrot.lane.b32.xlu0 %v2007, 56
      %v2765 = vpop.permute.xlu0 %2764
      %2766 = vrot.lane.b32.xlu0 %v2008, 56
      %v2767 = vpop.permute.xlu0 %2766
      %2768 = vrot.lane.b32.xlu0 %v2009, 56
      %v2769 = vpop.permute.xlu0 %2768
      %2770 = vrot.lane.b32.xlu0 %v2010, 56
      %v2771 = vpop.permute.xlu0 %2770
      %2772 = vrot.lane.b32.xlu0 %v2011, 56
      %v2773 = vpop.permute.xlu0 %2772
      %2774 = vrot.lane.b32.xlu0 %v2012, 56
      %v2775 = vpop.permute.xlu0 %2774
      %2776 = vrot.lane.b32.xlu0 %v2013, 56
      %v2777 = vpop.permute.xlu0 %2776
      %2778 = vrot.lane.b32.xlu0 %v2014, 56
      %v2779 = vpop.permute.xlu0 %2778
      %2780 = vrot.lane.b32.xlu0 %v2015, 56
      %v2781 = vpop.permute.xlu0 %2780
      %2782 = vrot.lane.b32.xlu0 %v2016, 56
      %v2783 = vpop.permute.xlu0 %2782
      %2784 = vrot.lane.b32.xlu0 %v2017, 56
      %v2785 = vpop.permute.xlu0 %2784
      %2786 = vrot.lane.b32.xlu0 %v2018, 56
      %v2787 = vpop.permute.xlu0 %2786
      %2788 = vrot.lane.b32.xlu0 %v2019, 56
      %v2789 = vpop.permute.xlu0 %2788
      %2790 = vrot.lane.b32.xlu0 %v2020, 56
      %v2791 = vpop.permute.xlu0 %2790
      %2792 = vrot.lane.b32.xlu0 %v2021, 56
      %v2793 = vpop.permute.xlu0 %2792
      %2794 = vrot.lane.b32.xlu0 %v2022, 56
      %v2795 = vpop.permute.xlu0 %2794
      %2796 = vrot.lane.b32.xlu0 %v2023, 56
      %v2797 = vpop.permute.xlu0 %2796
      %2798 = vrot.lane.b32.xlu0 %v2024, 56
      %v2799 = vpop.permute.xlu0 %2798
      %2800 = vrot.lane.b32.xlu0 %v2025, 56
      %v2801 = vpop.permute.xlu0 %2800
      %2802 = vrot.lane.b32.xlu0 %v2026, 56
      %v2803 = vpop.permute.xlu0 %2802
      %2804 = vrot.lane.b32.xlu0 %v2027, 56
      %v2805 = vpop.permute.xlu0 %2804
      %2806 = vrot.lane.b32.xlu0 %v2028, 56
      %v2807 = vpop.permute.xlu0 %2806
      %2808 = vrot.lane.b32.xlu0 %v2029, 56
      %v2809 = vpop.permute.xlu0 %2808
      %2844 = vrot.lane.b32.xlu0 %v2034, 64
      %v2845 = vpop.permute.xlu0 %2844
      %2846 = vrot.lane.b32.xlu0 %v2035, 64
      %v2847 = vpop.permute.xlu0 %2846
      %2848 = vrot.lane.b32.xlu0 %v2036, 64
      %v2849 = vpop.permute.xlu0 %2848
      %2850 = vrot.lane.b32.xlu0 %v2037, 64
      %v2851 = vpop.permute.xlu0 %2850
      %2852 = vrot.lane.b32.xlu0 %v2038, 64
      %v2853 = vpop.permute.xlu0 %2852
      %2854 = vrot.lane.b32.xlu0 %v2039, 64
      %v2855 = vpop.permute.xlu0 %2854
      %2856 = vrot.lane.b32.xlu0 %v2040, 64
      %v2857 = vpop.permute.xlu0 %2856
      %2858 = vrot.lane.b32.xlu0 %v2041, 64
      %v2859 = vpop.permute.xlu0 %2858
      %2860 = vrot.lane.b32.xlu0 %v2042, 64
      %v2861 = vpop.permute.xlu0 %2860
      %2862 = vrot.lane.b32.xlu0 %v2043, 64
      %v2863 = vpop.permute.xlu0 %2862
      %2864 = vrot.lane.b32.xlu0 %v2044, 64
      %v2865 = vpop.permute.xlu0 %2864
      %2866 = vrot.lane.b32.xlu0 %v2045, 64
      %v2867 = vpop.permute.xlu0 %2866
      %2868 = vrot.lane.b32.xlu0 %v2046, 64
      %v2869 = vpop.permute.xlu0 %2868
      %2870 = vrot.lane.b32.xlu0 %v2047, 64
      %v2871 = vpop.permute.xlu0 %2870
      %2872 = vrot.lane.b32.xlu0 %v2048, 64
      %v2873 = vpop.permute.xlu0 %2872
      %2874 = vrot.lane.b32.xlu0 %v2049, 64
      %v2875 = vpop.permute.xlu0 %2874
      %2876 = vrot.lane.b32.xlu0 %v2050, 64
      %v2877 = vpop.permute.xlu0 %2876
      %2878 = vrot.lane.b32.xlu0 %v2051, 64
      %v2879 = vpop.permute.xlu0 %2878
      %2880 = vrot.lane.b32.xlu0 %v2052, 64
      %v2881 = vpop.permute.xlu0 %2880
      %2882 = vrot.lane.b32.xlu0 %v2053, 64
      %v2883 = vpop.permute.xlu0 %2882
      %2884 = vrot.lane.b32.xlu0 %v2054, 64
      %v2885 = vpop.permute.xlu0 %2884
      %2886 = vrot.lane.b32.xlu0 %v2055, 64
      %v2887 = vpop.permute.xlu0 %2886
      %2888 = vrot.lane.b32.xlu0 %v2056, 64
      %v2889 = vpop.permute.xlu0 %2888
      %2890 = vrot.lane.b32.xlu0 %v2057, 64
      %v2891 = vpop.permute.xlu0 %2890
      %2892 = vrot.lane.b32.xlu0 %v2058, 64
      %v2893 = vpop.permute.xlu0 %2892
      %2894 = vrot.lane.b32.xlu0 %v2059, 64
      %v2895 = vpop.permute.xlu0 %2894
      %2896 = vrot.lane.b32.xlu0 %v2060, 64
      %v2897 = vpop.permute.xlu0 %2896
      %2898 = vrot.lane.b32.xlu0 %v2061, 64
      %v2899 = vpop.permute.xlu0 %2898
      %2900 = vrot.lane.b32.xlu0 %v2062, 64
      %v2901 = vpop.permute.xlu0 %2900
      %2902 = vrot.lane.b32.xlu0 %v2063, 64
      %v2903 = vpop.permute.xlu0 %2902
      %2904 = vrot.lane.b32.xlu0 %v2064, 64
      %v2905 = vpop.permute.xlu0 %2904
      %2906 = vrot.lane.b32.xlu0 %v2065, 64
      %v2907 = vpop.permute.xlu0 %2906
      %v2940 = vsel %vm272, %v1958, %v2099
      %v2941 = vsel %vm272, %v1959, %v2101
      %v2942 = vsel %vm272, %v1960, %v2103
      %v2943 = vsel %vm272, %v1961, %v2105
      %v2944 = vsel %vm272, %v1962, %v2107
      %v2945 = vsel %vm272, %v1963, %v2109
      %v2946 = vsel %vm272, %v1964, %v2111
      %v2947 = vsel %vm272, %v1965, %v2113
      %v2948 = vsel %vm272, %v1966, %v2115
      %v2949 = vsel %vm272, %v1967, %v2117
      %v2950 = vsel %vm272, %v1968, %v2119
      %v2951 = vsel %vm272, %v1969, %v2121
      %v2952 = vsel %vm272, %v1970, %v2123
      %v2953 = vsel %vm272, %v1971, %v2125
      %v2954 = vsel %vm272, %v1972, %v2127
      %v2955 = vsel %vm272, %v1973, %v2129
      %v2956 = vsel %vm272, %v1974, %v2131
      %v2957 = vsel %vm272, %v1975, %v2133
      %v2958 = vsel %vm272, %v1976, %v2135
      %v2959 = vsel %vm272, %v1977, %v2137
      %v2960 = vsel %vm272, %v1978, %v2139
      %v2961 = vsel %vm272, %v1979, %v2141
      %v2962 = vsel %vm272, %v1980, %v2143
      %v2963 = vsel %vm272, %v1981, %v2145
      %v2964 = vsel %vm272, %v1982, %v2147
      %v2965 = vsel %vm272, %v1983, %v2149
      %v2966 = vsel %vm272, %v1984, %v2151
      %v2967 = vsel %vm272, %v1985, %v2153
      %v2968 = vsel %vm272, %v1986, %v2155
      %v2969 = vsel %vm272, %v1987, %v2157
      %v2970 = vsel %vm272, %v1988, %v2159
      %v2971 = vsel %vm272, %v1989, %v2161
      %v2972 = vsel %vm1467, %v2940, %v2227
      %v2973 = vsel %vm1467, %v2941, %v2229
      %v2974 = vsel %vm1467, %v2942, %v2231
      %v2975 = vsel %vm1467, %v2943, %v2233
      %v2976 = vsel %vm1467, %v2944, %v2235
      %v2977 = vsel %vm1467, %v2945, %v2237
      %v2978 = vsel %vm1467, %v2946, %v2239
      %v2979 = vsel %vm1467, %v2947, %v2241
      %v2980 = vsel %vm1467, %v2948, %v2243
      %v2981 = vsel %vm1467, %v2949, %v2245
      %v2982 = vsel %vm1467, %v2950, %v2247
      %v2983 = vsel %vm1467, %v2951, %v2249
      %v2984 = vsel %vm1467, %v2952, %v2251
      %v2985 = vsel %vm1467, %v2953, %v2253
      %v2986 = vsel %vm1467, %v2954, %v2255
      %v2987 = vsel %vm1467, %v2955, %v2257
      %v2988 = vsel %vm1467, %v2956, %v2259
      %v2989 = vsel %vm1467, %v2957, %v2261
      %v2990 = vsel %vm1467, %v2958, %v2263
      %v2991 = vsel %vm1467, %v2959, %v2265
      %v2992 = vsel %vm1467, %v2960, %v2267
      %v2993 = vsel %vm1467, %v2961, %v2269
      %v2994 = vsel %vm1467, %v2962, %v2271
      %v2995 = vsel %vm1467, %v2963, %v2273
      %v2996 = vsel %vm1467, %v2964, %v2275
      %v2997 = vsel %vm1467, %v2965, %v2277
      %v2998 = vsel %vm1467, %v2966, %v2279
      %v2999 = vsel %vm1467, %v2967, %v2281
      %v3000 = vsel %vm1467, %v2968, %v2283
      %v3001 = vsel %vm1467, %v2969, %v2285
      %v3002 = vsel %vm1467, %v2970, %v2287
      %v3003 = vsel %vm1467, %v2971, %v2289
      %v3004 = vsel %vm1533, %v2972, %v2355
      %v3005 = vsel %vm1533, %v2973, %v2357
      %v3006 = vsel %vm1533, %v2974, %v2359
      %v3007 = vsel %vm1533, %v2975, %v2361
      %v3008 = vsel %vm1533, %v2976, %v2363
      %v3009 = vsel %vm1533, %v2977, %v2365
      %v3010 = vsel %vm1533, %v2978, %v2367
      %v3011 = vsel %vm1533, %v2979, %v2369
      %v3012 = vsel %vm1533, %v2980, %v2371
      %v3013 = vsel %vm1533, %v2981, %v2373
      %v3014 = vsel %vm1533, %v2982, %v2375
      %v3015 = vsel %vm1533, %v2983, %v2377
      %v3016 = vsel %vm1533, %v2984, %v2379
      %v3017 = vsel %vm1533, %v2985, %v2381
      %v3018 = vsel %vm1533, %v2986, %v2383
      %v3019 = vsel %vm1533, %v2987, %v2385
      %v3020 = vsel %vm1533, %v2988, %v2387
      %v3021 = vsel %vm1533, %v2989, %v2389
      %v3022 = vsel %vm1533, %v2990, %v2391
      %v3023 = vsel %vm1533, %v2991, %v2393
      %v3024 = vsel %vm1533, %v2992, %v2395
      %v3025 = vsel %vm1533, %v2993, %v2397
      %v3026 = vsel %vm1533, %v2994, %v2399
      %v3027 = vsel %vm1533, %v2995, %v2401
      %v3028 = vsel %vm1533, %v2996, %v2403
      %v3029 = vsel %vm1533, %v2997, %v2405
      %v3030 = vsel %vm1533, %v2998, %v2407
      %v3031 = vsel %vm1533, %v2999, %v2409
      %v3032 = vsel %vm1533, %v3000, %v2411
      %v3033 = vsel %vm1533, %v3001, %v2413
      %v3034 = vsel %vm1533, %v3002, %v2415
      %v3035 = vsel %vm1533, %v3003, %v2417
      %v3036 = vsel %vm1599, %v3004, %v2453
      %v3037 = vsel %vm1599, %v3005, %v2455
      %v3038 = vsel %vm1599, %v3006, %v2457
      %v3039 = vsel %vm1599, %v3007, %v2459
      %v3040 = vsel %vm1599, %v3008, %v2461
      %v3041 = vsel %vm1599, %v3009, %v2463
      %v3042 = vsel %vm1599, %v3010, %v2465
      %v3043 = vsel %vm1599, %v3011, %v2467
      %v3044 = vsel %vm1599, %v3012, %v2469
      %v3045 = vsel %vm1599, %v3013, %v2471
      %v3046 = vsel %vm1599, %v3014, %v2473
      %v3047 = vsel %vm1599, %v3015, %v2475
      %v3048 = vsel %vm1599, %v3016, %v2477
      %v3049 = vsel %vm1599, %v3017, %v2479
      %v3050 = vsel %vm1599, %v3018, %v2481
      %v3051 = vsel %vm1599, %v3019, %v2483
      %v3052 = vsel %vm1599, %v3020, %v2485
      %v3053 = vsel %vm1599, %v3021, %v2487
      %v3054 = vsel %vm1599, %v3022, %v2489
      %v3055 = vsel %vm1599, %v3023, %v2491
      %v3056 = vsel %vm1599, %v3024, %v2493
      %v3057 = vsel %vm1599, %v3025, %v2495
      %v3058 = vsel %vm1599, %v3026, %v2497
      %v3059 = vsel %vm1599, %v3027, %v2499
      %v3060 = vsel %vm1599, %v3028, %v2501
      %v3061 = vsel %vm1599, %v3029, %v2503
      %v3062 = vsel %vm1599, %v3030, %v2505
      %v3063 = vsel %vm1599, %v3031, %v2507
      %v3064 = vsel %vm1599, %v3032, %v2509
      %v3065 = vsel %vm1599, %v3033, %v2511
      %v3066 = vsel %vm1599, %v3034, %v2513
      %v3067 = vsel %vm1599, %v3035, %v2515
      %vm3068 = vcmask 326656
      %v3069 = vsel %vm3068, %v3036, %v2551
      %v3070 = vsel %vm3068, %v3037, %v2553
      %v3071 = vsel %vm3068, %v3038, %v2555
      %v3072 = vsel %vm3068, %v3039, %v2557
      %v3073 = vsel %vm3068, %v3040, %v2559
      %v3074 = vsel %vm3068, %v3041, %v2561
      %v3075 = vsel %vm3068, %v3042, %v2563
      %v3076 = vsel %vm3068, %v3043, %v2565
      %v3077 = vsel %vm3068, %v3044, %v2567
      %v3078 = vsel %vm3068, %v3045, %v2569
      %v3079 = vsel %vm3068, %v3046, %v2571
      %v3080 = vsel %vm3068, %v3047, %v2573
      %v3081 = vsel %vm3068, %v3048, %v2575
      %v3082 = vsel %vm3068, %v3049, %v2577
      %v3083 = vsel %vm3068, %v3050, %v2579
      %v3084 = vsel %vm3068, %v3051, %v2581
      %v3085 = vsel %vm3068, %v3052, %v2583
      %v3086 = vsel %vm3068, %v3053, %v2585
      %v3087 = vsel %vm3068, %v3054, %v2587
      %v3088 = vsel %vm3068, %v3055, %v2589
      %v3089 = vsel %vm3068, %v3056, %v2591
      %v3090 = vsel %vm3068, %v3057, %v2593
      %v3091 = vsel %vm3068, %v3058, %v2595
      %v3092 = vsel %vm3068, %v3059, %v2597
      %v3093 = vsel %vm3068, %v3060, %v2599
      %v3094 = vsel %vm3068, %v3061, %v2601
      %v3095 = vsel %vm3068, %v3062, %v2603
      %v3096 = vsel %vm3068, %v3063, %v2605
      %v3097 = vsel %vm3068, %v3064, %v2607
      %v3098 = vsel %vm3068, %v3065, %v2609
      %v3099 = vsel %vm3068, %v3066, %v2611
      %v3100 = vsel %vm3068, %v3067, %v2613
      %vm3101 = vcmask 392192
      %v3102 = vsel %vm3101, %v3069, %v2649
      %v3103 = vsel %vm3101, %v3070, %v2651
      %v3104 = vsel %vm3101, %v3071, %v2653
      %v3105 = vsel %vm3101, %v3072, %v2655
      %v3106 = vsel %vm3101, %v3073, %v2657
      %v3107 = vsel %vm3101, %v3074, %v2659
      %v3108 = vsel %vm3101, %v3075, %v2661
      %v3109 = vsel %vm3101, %v3076, %v2663
      %v3110 = vsel %vm3101, %v3077, %v2665
      %v3111 = vsel %vm3101, %v3078, %v2667
      %v3112 = vsel %vm3101, %v3079, %v2669
      %v3113 = vsel %vm3101, %v3080, %v2671
      %v3114 = vsel %vm3101, %v3081, %v2673
      %v3115 = vsel %vm3101, %v3082, %v2675
      %v3116 = vsel %vm3101, %v3083, %v2677
      %v3117 = vsel %vm3101, %v3084, %v2679
      %v3118 = vsel %vm3101, %v3085, %v2681
      %v3119 = vsel %vm3101, %v3086, %v2683
      %v3120 = vsel %vm3101, %v3087, %v2685
      %v3121 = vsel %vm3101, %v3088, %v2687
      %v3122 = vsel %vm3101, %v3089, %v2689
      %v3123 = vsel %vm3101, %v3090, %v2691
      %v3124 = vsel %vm3101, %v3091, %v2693
      %v3125 = vsel %vm3101, %v3092, %v2695
      %v3126 = vsel %vm3101, %v3093, %v2697
      %v3127 = vsel %vm3101, %v3094, %v2699
      %v3128 = vsel %vm3101, %v3095, %v2701
      %v3129 = vsel %vm3101, %v3096, %v2703
      %v3130 = vsel %vm3101, %v3097, %v2705
      %v3131 = vsel %vm3101, %v3098, %v2707
      %v3132 = vsel %vm3101, %v3099, %v2709
      %v3133 = vsel %vm3101, %v3100, %v2711
      %vm3134 = vcmask 457728
      %v3135 = vsel %vm3134, %v3102, %v2747
      %v3136 = vsel %vm3134, %v3103, %v2749
      %v3137 = vsel %vm3134, %v3104, %v2751
      %v3138 = vsel %vm3134, %v3105, %v2753
      %v3139 = vsel %vm3134, %v3106, %v2755
      %v3140 = vsel %vm3134, %v3107, %v2757
      %v3141 = vsel %vm3134, %v3108, %v2759
      %v3142 = vsel %vm3134, %v3109, %v2761
      %v3143 = vsel %vm3134, %v3110, %v2763
      %v3144 = vsel %vm3134, %v3111, %v2765
      %v3145 = vsel %vm3134, %v3112, %v2767
      %v3146 = vsel %vm3134, %v3113, %v2769
      %v3147 = vsel %vm3134, %v3114, %v2771
      %v3148 = vsel %vm3134, %v3115, %v2773
      %v3149 = vsel %vm3134, %v3116, %v2775
      %v3150 = vsel %vm3134, %v3117, %v2777
      %v3151 = vsel %vm3134, %v3118, %v2779
      %v3152 = vsel %vm3134, %v3119, %v2781
      %v3153 = vsel %vm3134, %v3120, %v2783
      %v3154 = vsel %vm3134, %v3121, %v2785
      %v3155 = vsel %vm3134, %v3122, %v2787
      %v3156 = vsel %vm3134, %v3123, %v2789
      %v3157 = vsel %vm3134, %v3124, %v2791
      %v3158 = vsel %vm3134, %v3125, %v2793
      %v3159 = vsel %vm3134, %v3126, %v2795
      %v3160 = vsel %vm3134, %v3127, %v2797
      %v3161 = vsel %vm3134, %v3128, %v2799
      %v3162 = vsel %vm3134, %v3129, %v2801
      %v3163 = vsel %vm3134, %v3130, %v2803
      %v3164 = vsel %vm3134, %v3131, %v2805
      %v3165 = vsel %vm3134, %v3132, %v2807
      %v3166 = vsel %vm3134, %v3133, %v2809
      %vm3167 = vcmask 523264
      %v3168 = vsel %vm3167, %v3135, %v2845
      %v3169 = vsel %vm3167, %v3136, %v2847
      %v3170 = vsel %vm3167, %v3137, %v2849
      %v3171 = vsel %vm3167, %v3138, %v2851
      %v3172 = vsel %vm3167, %v3139, %v2853
      %v3173 = vsel %vm3167, %v3140, %v2855
      %v3174 = vsel %vm3167, %v3141, %v2857
      %v3175 = vsel %vm3167, %v3142, %v2859
      %v3176 = vsel %vm3167, %v3143, %v2861
      %v3177 = vsel %vm3167, %v3144, %v2863
      %v3178 = vsel %vm3167, %v3145, %v2865
      %v3179 = vsel %vm3167, %v3146, %v2867
      %v3180 = vsel %vm3167, %v3147, %v2869
      %v3181 = vsel %vm3167, %v3148, %v2871
      %v3182 = vsel %vm3167, %v3149, %v2873
      %v3183 = vsel %vm3167, %v3150, %v2875
      %v3184 = vsel %vm3167, %v3151, %v2877
      %v3185 = vsel %vm3167, %v3152, %v2879
      %v3186 = vsel %vm3167, %v3153, %v2881
      %v3187 = vsel %vm3167, %v3154, %v2883
      %v3188 = vsel %vm3167, %v3155, %v2885
      %v3189 = vsel %vm3167, %v3156, %v2887
      %v3190 = vsel %vm3167, %v3157, %v2889
      %v3191 = vsel %vm3167, %v3158, %v2891
      %v3192 = vsel %vm3167, %v3159, %v2893
      %v3193 = vsel %vm3167, %v3160, %v2895
      %v3194 = vsel %vm3167, %v3161, %v2897
      %v3195 = vsel %vm3167, %v3162, %v2899
      %v3196 = vsel %vm3167, %v3163, %v2901
      %v3197 = vsel %vm3167, %v3164, %v2903
      %v3198 = vsel %vm3167, %v3165, %v2905
      %v3199 = vsel %vm3167, %v3166, %v2907
      %v3200 = vpack.c.bf16 %v3169, %v3168
      %v3201 = vpack.c.bf16 %v3171, %v3170
      %v3202 = vpack.c.bf16 %v3173, %v3172
      %v3203 = vpack.c.bf16 %v3175, %v3174
      %v3204 = vpack.c.bf16 %v3177, %v3176
      %v3205 = vpack.c.bf16 %v3179, %v3178
      %v3206 = vpack.c.bf16 %v3181, %v3180
      %v3207 = vpack.c.bf16 %v3183, %v3182
      %v3208 = vpack.c.bf16 %v3185, %v3184
      %v3209 = vpack.c.bf16 %v3187, %v3186
      %v3210 = vpack.c.bf16 %v3189, %v3188
      %v3211 = vpack.c.bf16 %v3191, %v3190
      %v3212 = vpack.c.bf16 %v3193, %v3192
      %v3213 = vpack.c.bf16 %v3195, %v3194
      %v3214 = vpack.c.bf16 %v3197, %v3196
      %v3215 = vpack.c.bf16 %v3199, %v3198
      %v3216 = vld [vmem:[%s4] sm:$0x1]
      %v3218 = vlaneseq
      %v3219 = vshrl.u32 %v3218, 7
      %v3220 = vsub.s32 0, %v3219
      %v3221 = vrot.slane %v3216, %v3220
      %v3232 = vunpack.c.l.b16 %v1949
      %v3233 = vunpack.c.l.b16 %v1950
      %v3234 = vunpack.c.l.b16 %v1951
      %v3235 = vunpack.c.l.b16 %v1952
      %v3236 = vunpack.c.l.b16 %v1953
      %v3237 = vunpack.c.l.b16 %v1954
      %v3238 = vunpack.c.l.b16 %v1955
      %v3239 = vunpack.c.l.b16 %v1956
      %v3240 = vunpack.c.l.b16 %v1957
      %v3241 = vpack.c.b16 %v3233, %v3232
      %v3242 = vpack.c.b16 %v3235, %v3234
      %v3243 = vpack.c.b16 %v3237, %v3236
      %v3244 = vpack.c.b16 %v3239, %v3238
      %v3245 = vpack.c.b16 %v3240, %v3240
      %vm3250 = vcmask 588800
      %v3252 = vsel %vm3250, %v3200, 0
      %v3255 = vsel %vm3250, %v3201, 0
      %v3258 = vsel %vm3250, %v3202, 0
      %v3261 = vsel %vm3250, %v3203, 0
      %v3264 = vsel %vm3250, %v3204, 0
      %v3267 = vsel %vm3250, %v3205, 0
      %v3270 = vsel %vm3250, %v3206, 0
      %v3273 = vsel %vm3250, %v3207, 0
      %v3276 = vsel %vm3250, %v3208, 0
      %v3279 = vsel %vm3250, %v3209, 0
      %v3282 = vsel %vm3250, %v3210, 0
      %v3285 = vsel %vm3250, %v3211, 0
      %v3288 = vsel %vm3250, %v3212, 0
      %v3291 = vsel %vm3250, %v3213, 0
      %v3294 = vsel %vm3250, %v3214, 0
      %v3297 = vsel %vm3250, %v3215, 0
      %vm3299 = vcmask 1043456
      %v3301 = vsel %vm3299, %v3245, 0
      %3303 = vmatprep.subr.bf16.mxu0 0
      %3304 = vmatpush1.bf16.msra.mxu0 %v3241
      %3305 = vmatprep.subr.bf16.mxu0 0
      %3306 = vmatpush1.bf16.msra.mxu0 %v3242
      %3307 = vmatprep.subr.bf16.mxu0 0
      %3308 = vmatpush1.bf16.msra.mxu0 %v3243
      %3309 = vmatprep.subr.bf16.mxu0 0
      %3310 = vmatpush1.bf16.msra.mxu0 %v3244
      %3311 = vmatprep.subr.bf16.mxu0 0
      %3312 = vmatpush1.bf16.msra.mxu0 %v3301
      %3313 = vmatprep.subr.bf16.mxu0 0
      %3314 = vmatpush1.bf16.msra.mxu0 0
      %3315 = vmatprep.subr.bf16.mxu0 0
      %3316 = vmatpush1.bf16.msra.mxu0 0
      %3317 = vmatprep.subr.bf16.mxu0 0
      %3318 = vmatpush1.bf16.msra.mxu0 0
      %3319 = vmatprep.subr.bf16.mxu0 0
      %3320 = vmatpush1.bf16.msra.mxu0 0
      %3321 = vmatprep.subr.bf16.mxu0 0
      %3322 = vmatpush1.bf16.msra.mxu0 0
      %3323 = vmatprep.subr.bf16.mxu0 0
      %3324 = vmatpush1.bf16.msra.mxu0 0
      %3325 = vmatprep.subr.bf16.mxu0 0
      %3326 = vmatpush1.bf16.msra.mxu0 0
      %3327 = vmatprep.subr.bf16.mxu0 0
      %3328 = vmatpush1.bf16.msra.mxu0 0
      %3329 = vmatprep.subr.bf16.mxu0 0
      %3330 = vmatpush1.bf16.msra.mxu0 0
      %3331 = vmatprep.subr.bf16.mxu0 0
      %3332 = vmatpush1.bf16.msra.mxu0 0
      %3333 = vmatprep.subr.bf16.mxu0 0
      %3334 = vmatpush1.bf16.msra.mxu0 0
      %3335 = vmatprep.mubr.bf16.mxu0 0
      %3336 = vmatmul.mubr.bf16.gmra.mrb[0].mxu0 %v3252
      %v3337 = vpop.f32.mrb[0].mxu0
      %v3338 = vadd.f32 %v3221, %v3337
      %v3339 = vpop.f32.mrb[0].mxu0
      %v3340 = vpop.f32.mrb[0].mxu0
      %v3341 = vadd.f32 %v3221, %v3340
      %v3342 = vpop.f32.mrb[0].mxu0
      %3343 = vmatprep.mubr.bf16.mxu0 0
      %3344 = vmatmul.mubr.bf16.gmra.mrb[0].mxu0 %v3255
      %v3345 = vpop.f32.mrb[0].mxu0
      %v3346 = vadd.f32 %v3221, %v3345
      %v3347 = vpop.f32.mrb[0].mxu0
      %v3348 = vpop.f32.mrb[0].mxu0
      %v3349 = vadd.f32 %v3221, %v3348
      %v3350 = vpop.f32.mrb[0].mxu0
      %3351 = vmatprep.mubr.bf16.mxu0 0
      %3352 = vmatmul.mubr.bf16.gmra.mrb[0].mxu0 %v3258
      %v3353 = vpop.f32.mrb[0].mxu0
      %v3354 = vadd.f32 %v3221, %v3353
      %v3355 = vpop.f32.mrb[0].mxu0
      %v3356 = vpop.f32.mrb[0].mxu0
      %v3357 = vadd.f32 %v3221, %v3356
      %v3358 = vpop.f32.mrb[0].mxu0
      %3359 = vmatprep.mubr.bf16.mxu0 0
      %3360 = vmatmul.mubr.bf16.gmra.mrb[0].mxu0 %v3261
      %v3361 = vpop.f32.mrb[0].mxu0
      %v3362 = vadd.f32 %v3221, %v3361
      %v3363 = vpop.f32.mrb[0].mxu0
      %v3364 = vpop.f32.mrb[0].mxu0
      %v3365 = vadd.f32 %v3221, %v3364
      %v3366 = vpop.f32.mrb[0].mxu0
      %3367 = vmatprep.mubr.bf16.mxu0 0
      %3368 = vmatmul.mubr.bf16.gmra.mrb[0].mxu0 %v3264
      %v3369 = vpop.f32.mrb[0].mxu0
      %v3370 = vadd.f32 %v3221, %v3369
      %v3371 = vpop.f32.mrb[0].mxu0
      %v3372 = vpop.f32.mrb[0].mxu0
      %v3373 = vadd.f32 %v3221, %v3372
      %v3374 = vpop.f32.mrb[0].mxu0
      %3375 = vmatprep.mubr.bf16.mxu0 0
      %3376 = vmatmul.mubr.bf16.gmra.mrb[0].mxu0 %v3267
      %v3377 = vpop.f32.mrb[0].mxu0
      %v3378 = vadd.f32 %v3221, %v3377
      %v3379 = vpop.f32.mrb[0].mxu0
      %v3380 = vpop.f32.mrb[0].mxu0
      %v3381 = vadd.f32 %v3221, %v3380
      %v3382 = vpop.f32.mrb[0].mxu0
      %3383 = vmatprep.mubr.bf16.mxu0 0
      %3384 = vmatmul.mubr.bf16.gmra.mrb[0].mxu0 %v3270
      %v3385 = vpop.f32.mrb[0].mxu0
      %v3386 = vadd.f32 %v3221, %v3385
      %v3387 = vpop.f32.mrb[0].mxu0
      %v3388 = vpop.f32.mrb[0].mxu0
      %v3389 = vadd.f32 %v3221, %v3388
      %v3390 = vpop.f32.mrb[0].mxu0
      %3391 = vmatprep.mubr.bf16.mxu0 0
      %3392 = vmatmul.mubr.bf16.gmra.mrb[0].mxu0 %v3273
      %v3393 = vpop.f32.mrb[0].mxu0
      %v3394 = vadd.f32 %v3221, %v3393
      %v3395 = vpop.f32.mrb[0].mxu0
      %v3396 = vpop.f32.mrb[0].mxu0
      %v3397 = vadd.f32 %v3221, %v3396
      %v3398 = vpop.f32.mrb[0].mxu0
      %3399 = vmatprep.mubr.bf16.mxu0 0
      %3400 = vmatmul.mubr.bf16.gmra.mrb[0].mxu0 %v3276
      %v3401 = vpop.f32.mrb[0].mxu0
      %v3402 = vadd.f32 %v3221, %v3401
      %v3403 = vpop.f32.mrb[0].mxu0
      %v3404 = vpop.f32.mrb[0].mxu0
      %v3405 = vadd.f32 %v3221, %v3404
      %v3406 = vpop.f32.mrb[0].mxu0
      %3407 = vmatprep.mubr.bf16.mxu0 0
      %3408 = vmatmul.mubr.bf16.gmra.mrb[0].mxu0 %v3279
      %v3409 = vpop.f32.mrb[0].mxu0
      %v3410 = vadd.f32 %v3221, %v3409
      %v3411 = vpop.f32.mrb[0].mxu0
      %v3412 = vpop.f32.mrb[0].mxu0
      %v3413 = vadd.f32 %v3221, %v3412
      %v3414 = vpop.f32.mrb[0].mxu0
      %3415 = vmatprep.mubr.bf16.mxu0 0
      %3416 = vmatmul.mubr.bf16.gmra.mrb[0].mxu0 %v3282
      %v3417 = vpop.f32.mrb[0].mxu0
      %v3418 = vadd.f32 %v3221, %v3417
      %v3419 = vpop.f32.mrb[0].mxu0
      %v3420 = vpop.f32.mrb[0].mxu0
      %v3421 = vadd.f32 %v3221, %v3420
      %v3422 = vpop.f32.mrb[0].mxu0
      %3423 = vmatprep.mubr.bf16.mxu0 0
      %3424 = vmatmul.mubr.bf16.gmra.mrb[0].mxu0 %v3285
      %v3425 = vpop.f32.mrb[0].mxu0
      %v3426 = vadd.f32 %v3221, %v3425
      %v3427 = vpop.f32.mrb[0].mxu0
      %v3428 = vpop.f32.mrb[0].mxu0
      %v3429 = vadd.f32 %v3221, %v3428
      %v3430 = vpop.f32.mrb[0].mxu0
      %3431 = vmatprep.mubr.bf16.mxu0 0
      %3432 = vmatmul.mubr.bf16.gmra.mrb[0].mxu0 %v3288
      %v3433 = vpop.f32.mrb[0].mxu0
      %v3434 = vadd.f32 %v3221, %v3433
      %v3435 = vpop.f32.mrb[0].mxu0
      %v3436 = vpop.f32.mrb[0].mxu0
      %v3437 = vadd.f32 %v3221, %v3436
      %v3438 = vpop.f32.mrb[0].mxu0
      %3439 = vmatprep.mubr.bf16.mxu0 0
      %3440 = vmatmul.mubr.bf16.gmra.mrb[0].mxu0 %v3291
      %v3441 = vpop.f32.mrb[0].mxu0
      %v3442 = vadd.f32 %v3221, %v3441
      %v3443 = vpop.f32.mrb[0].mxu0
      %v3444 = vpop.f32.mrb[0].mxu0
      %v3445 = vadd.f32 %v3221, %v3444
      %v3446 = vpop.f32.mrb[0].mxu0
      %3447 = vmatprep.mubr.bf16.mxu0 0
      %3448 = vmatmul.mubr.bf16.gmra.mrb[0].mxu0 %v3294
      %v3449 = vpop.f32.mrb[0].mxu0
      %v3450 = vadd.f32 %v3221, %v3449
      %v3451 = vpop.f32.mrb[0].mxu0
      %v3452 = vpop.f32.mrb[0].mxu0
      %v3453 = vadd.f32 %v3221, %v3452
      %v3454 = vpop.f32.mrb[0].mxu0
      %3455 = vmatprep.mubr.bf16.mxu0 0
      %3456 = vmatmul.mubr.bf16.gmra.mrb[0].mxu0 %v3297
      %v3457 = vpop.f32.mrb[0].mxu0
      %v3458 = vadd.f32 %v3221, %v3457
      %v3459 = vpop.f32.mrb[0].mxu0
      %v3460 = vpop.f32.mrb[0].mxu0
      %v3461 = vadd.f32 %v3221, %v3460
      %v3462 = vpop.f32.mrb[0].mxu0
      %3463 = vdwg.mxu0
      %v3464 = vmax.f32 %v3338, 0.0
      %v3465 = vmax.f32 %v3341, 0.0
      %v3466 = vmax.f32 %v3346, 0.0
      %v3467 = vmax.f32 %v3349, 0.0
      %v3468 = vmax.f32 %v3354, 0.0
      %v3469 = vmax.f32 %v3357, 0.0
      %v3470 = vmax.f32 %v3362, 0.0
      %v3471 = vmax.f32 %v3365, 0.0
      %v3472 = vmax.f32 %v3370, 0.0
      %v3473 = vmax.f32 %v3373, 0.0
      %v3474 = vmax.f32 %v3378, 0.0
      %v3475 = vmax.f32 %v3381, 0.0
      %v3476 = vmax.f32 %v3386, 0.0
      %v3477 = vmax.f32 %v3389, 0.0
      %v3478 = vmax.f32 %v3394, 0.0
      %v3479 = vmax.f32 %v3397, 0.0
      %v3480 = vmax.f32 %v3402, 0.0
      %v3481 = vmax.f32 %v3405, 0.0
      %v3482 = vmax.f32 %v3410, 0.0
      %v3483 = vmax.f32 %v3413, 0.0
      %v3484 = vmax.f32 %v3418, 0.0
      %v3485 = vmax.f32 %v3421, 0.0
      %v3486 = vmax.f32 %v3426, 0.0
      %v3487 = vmax.f32 %v3429, 0.0
      %v3488 = vmax.f32 %v3434, 0.0
      %v3489 = vmax.f32 %v3437, 0.0
      %v3490 = vmax.f32 %v3442, 0.0
      %v3491 = vmax.f32 %v3445, 0.0
      %v3492 = vmax.f32 %v3450, 0.0
      %v3493 = vmax.f32 %v3453, 0.0
      %v3494 = vmax.f32 %v3458, 0.0
      %v3495 = vmax.f32 %v3461, 0.0
      %3496 = vst.msk [vmem:[%s224] sm:$0xff] %vm272, %v3464
      %3497 = vst.msk [vmem:[%s224 + $0x8] sm:$0xff] %vm272, %v3465
      %3498 = vst.msk [vmem:[%s224 + $0x10] sm:$0xff] %vm272, %v3466
      %3499 = vst.msk [vmem:[%s224 + $0x18] sm:$0xff] %vm272, %v3467
      %3500 = vst.msk [vmem:[%s224 + $0x20] sm:$0xff] %vm272, %v3468
      %3501 = vst.msk [vmem:[%s224 + $0x28] sm:$0xff] %vm272, %v3469
      %3502 = vst.msk [vmem:[%s224 + $0x30] sm:$0xff] %vm272, %v3470
      %3503 = vst.msk [vmem:[%s224 + $0x38] sm:$0xff] %vm272, %v3471
      %3504 = vst.msk [vmem:[%s224 + $0x40] sm:$0xff] %vm272, %v3472
      %3505 = vst.msk [vmem:[%s224 + $0x48] sm:$0xff] %vm272, %v3473
      %3506 = vst.msk [vmem:[%s224 + $0x50] sm:$0xff] %vm272, %v3474
      %3507 = vst.msk [vmem:[%s224 + $0x58] sm:$0xff] %vm272, %v3475
      %3508 = vst.msk [vmem:[%s224 + $0x60] sm:$0xff] %vm272, %v3476
      %3509 = vst.msk [vmem:[%s224 + $0x68] sm:$0xff] %vm272, %v3477
      %3510 = vst.msk [vmem:[%s224 + $0x70] sm:$0xff] %vm272, %v3478
      %3511 = vst.msk [vmem:[%s224 + $0x78] sm:$0xff] %vm272, %v3479
      %3512 = vst.msk [vmem:[%s224 + $0x80] sm:$0xff] %vm272, %v3480
      %3513 = vst.msk [vmem:[%s224 + $0x88] sm:$0xff] %vm272, %v3481
      %3514 = vst.msk [vmem:[%s224 + $0x90] sm:$0xff] %vm272, %v3482
      %3515 = vst.msk [vmem:[%s224 + $0x98] sm:$0xff] %vm272, %v3483
      %3516 = vst.msk [vmem:[%s224 + $0xa0] sm:$0xff] %vm272, %v3484
      %3517 = vst.msk [vmem:[%s224 + $0xa8] sm:$0xff] %vm272, %v3485
      %3518 = vst.msk [vmem:[%s224 + $0xb0] sm:$0xff] %vm272, %v3486
      %3519 = vst.msk [vmem:[%s224 + $0xb8] sm:$0xff] %vm272, %v3487
      %3520 = vst.msk [vmem:[%s224 + $0xc0] sm:$0xff] %vm272, %v3488
      %3521 = vst.msk [vmem:[%s224 + $0xc8] sm:$0xff] %vm272, %v3489
      %3522 = vst.msk [vmem:[%s224 + $0xd0] sm:$0xff] %vm272, %v3490
      %3523 = vst.msk [vmem:[%s224 + $0xd8] sm:$0xff] %vm272, %v3491
      %3524 = vst.msk [vmem:[%s224 + $0xe0] sm:$0xff] %vm272, %v3492
      %3525 = vst.msk [vmem:[%s224 + $0xe8] sm:$0xff] %vm272, %v3493
      %3526 = vst.msk [vmem:[%s224 + $0xf0] sm:$0xff] %vm272, %v3494
      %3527 = vst.msk [vmem:[%s224 + $0xf8] sm:$0xff] %vm272, %v3495
      %p3528 = scmp.lt.s32.totalorder %s16, 1
      %s3529 = scalar_select %p3528, %s16, 1
      %s3530 = smul.addr %s3529, 32
      %s3531 = smul.addr %s3530, 8
      %s3532 = scalar_lea.vmem %s5, %s3531
      // Predicated region
      $region41: #{tpu_custom_call.1} parent=39 // pred_check
        %p3533 = pneg %p144
      $region42: #{tpu_custom_call.1} parent=39 // pred_check_branch
        %3535 = sbr.rel (%p3533) target = $region44
      $region43: #{tpu_custom_call.1} parent=39 // pred_region
        _
      $region44: #{tpu_custom_call.1} parent=39 // pred_fallthru
        _
    $region40: #{tpu_custom_call.1} parent=5 // pred_fallthru
      _
    %p3536 = scmp.le.s32.totalorder 2, %s11
    // Predicated region
    $region45: #{tpu_custom_call.1} parent=5 // pred_check
      %p3537 = pneg %p3536
    $region46: #{tpu_custom_call.1} parent=5 // pred_check_branch
      %3539 = sbr.rel (%p3537) target = $region48
    $region47: #{tpu_custom_call.1} parent=5 // pred_region
      %s3540 = ssub.s32 %s11, 2
      // Predicated region
      $region49: #{tpu_custom_call.1} parent=47 // pred_check
        %p3541 = pneg %p150
      $region50: #{tpu_custom_call.1} parent=47 // pred_check_branch
        %3543 = sbr.rel (%p3541) target = $region52
      $region51: #{tpu_custom_call.1} parent=47 // pred_region
        %p3544 = scmp.lt.s32.totalorder %s17, 1
        %s3545 = scalar_select %p3544, %s17, 1
        %s3546 = smul.addr %s3545, 32
        %s3547 = smul.addr %s3546, 8
        %s3548 = scalar_lea.vmem %s5, %s3547
      $region52: #{tpu_custom_call.1} parent=47 // pred_fallthru
        _
    $region48: #{tpu_custom_call.1} parent=5 // pred_fallthru
      _
  $region6: #{tpu_custom_call.1} parent=0 // loop_footer
    %s15 = sadd.s32 1, %s11
  $region7: #{tpu_custom_call.1} parent=0 // loop_footer_branch
    %10 = sbr.rel target = $region3
  $region8: #{tpu_custom_call.1} parent=0 // loop_exit
    _

</llo_original>
